<compile_context>
chip_gen: v7x
topology: tpu7x:2x2x1
jax: 0.10.0
libtpu: 0.0.40
codegen_flags: <defaults>
</compile_context>

<pallas_src>
import functools

import jax
import jax.numpy as jnp
from jax.experimental import pallas as pl
from jax.experimental.pallas import tpu as pltpu


# ----------------------------------------------------------------------------
# In-kernel 2-layer GRU stack (values in vregs; 2 serial MXU pushes per step)
# ----------------------------------------------------------------------------
def _gru_stack(x_ref, t0, n_steps, B, H, w1_ih, w1_hh, b1_row, b1_hn, w2_cat, b2_row):
    """2-layer GRU over timesteps t0 .. t0+n_steps-1 of x_ref (shape (B, T, F)).

    w1_ih : (F, 3H)   fused layer-1 input weights (gates r|z|n on lanes).
    w1_hh : (H, 3H)   fused layer-1 hidden weights.
    b1_row: (1, 3H)   [bih_r+bhh_r, bih_z+bhh_z, bih_n].
    b1_hn : (1, H)    bhh_n (kept separate for r*(gh_n+bhh_n)).
    w2_cat: (2H, 4H)  [[Wih2_rz, Wih2_n, 0], [Whh2_rz, 0, Whh2_n]] stacked.
    b2_row: (1, 4H)   [bih_r+bhh_r, bih_z+bhh_z, bih_n, bhh_n].
    Returns the final layer-2 hidden state, shape (B, H).
    """
    f32 = jnp.float32
    H2, H3 = 2 * H, 3 * H

    # Broadcasts hoisted once (JAX does not CSE broadcast_in_dim inside the loop).
    b1_b = jnp.broadcast_to(b1_row, (B, H3))
    b1_hn_b = jnp.broadcast_to(b1_hn, (B, H))
    b2_b = jnp.broadcast_to(b2_row, (B, 4 * H))

    # Hoisted layer-1 input projection: fused 96-lane dot per timestep, all
    # independent of the recurrent state (off the serial critical path).
    gi = [jnp.dot(x_ref[:, t0 + t, :], w1_ih, preferred_element_type=f32) + b1_b
          for t in range(n_steps)]

    h1 = jnp.zeros((B, H), f32)
    h2 = jnp.zeros((B, H), f32)

    # Static unroll: n_steps is a small compile-time constant -> full scheduler
    # visibility for MXU / EUP / VPU overlap across iterations.
    for t in range(n_steps):
        # ---- layer 1: single fused (H, 3H) hidden matmul on the serial path.
        gh1 = jnp.dot(h1, w1_hh, preferred_element_type=f32)          # (B, 3H)
        rz1 = jax.nn.sigmoid(gi[t][:, :H2] + gh1[:, :H2])             # one EUP push
        r1, z1 = rz1[:, :H], rz1[:, H:]
        n1 = jnp.tanh(gi[t][:, H2:] + r1 * (gh1[:, H2:] + b1_hn_b))
        h1 = (1.0 - z1) * n1 + z1 * h1

        # ---- layer 2: single fused [h1|h2] @ (2H, 4H) matmul.
        h12 = jnp.concatenate([h1, h2], axis=1)                        # (B, 2H)
        g2 = jnp.dot(h12, w2_cat, preferred_element_type=f32) + b2_b   # (B, 4H)
        rz2 = jax.nn.sigmoid(g2[:, :H2])
        r2, z2 = rz2[:, :H], rz2[:, H:]
        n2 = jnp.tanh(g2[:, H2:H3] + r2 * g2[:, H3:])
        h2 = (1.0 - z2) * n2 + z2 * h2

    return h2


# ----------------------------------------------------------------------------
# Fused kernel: long GRU stack + short GRU stack + MLP head
# ----------------------------------------------------------------------------
def fused_gru_kernel(short, B, T, H,
                     x_ref,
                     l_w1ih_ref, l_w1hh_ref, l_b1_ref, l_b1hn_ref, l_w2_ref, l_b2_ref,
                     s_w1ih_ref, s_w1hh_ref, s_b1_ref, s_b1hn_ref, s_w2_ref, s_b2_ref,
                     w1a_ref, w1b_ref, hb1_ref, w2_ref, hb2_ref, w3_ref, hb3_ref,
                     out_ref):
    f32 = jnp.float32

    # Long window: all T timesteps.
    h_long = _gru_stack(x_ref, 0, T, B, H,
                        l_w1ih_ref[...], l_w1hh_ref[...], l_b1_ref[...],
                        l_b1hn_ref[...], l_w2_ref[...], l_b2_ref[...])

    # Short window: last `short` timesteps — handled purely via the time offset.
    h_short = _gru_stack(x_ref, T - short, short, B, H,
                         s_w1ih_ref[...], s_w1hh_ref[...], s_b1_ref[...],
                         s_b1hn_ref[...], s_w2_ref[...], s_b2_ref[...])

    # MLP head: fc1 over concat(h_long, h_short) as two matmuls (no lane concat).
    y = (jnp.dot(h_long, w1a_ref[...], preferred_element_type=f32)
         + jnp.dot(h_short, w1b_ref[...], preferred_element_type=f32) + hb1_ref[...])
    y = jnp.maximum(y, 0.0)                           # dropout(p=0.1) = identity (eval)
    y = jnp.dot(y, w2_ref[...], preferred_element_type=f32) + hb2_ref[...]
    y = jnp.maximum(y, 0.0)                           # dropout(p=0.1) = identity (eval)
    out_ref[...] = jnp.dot(y, w3_ref[...], preferred_element_type=f32) + hb3_ref[...]


# ----------------------------------------------------------------------------
# Wrapper
# ----------------------------------------------------------------------------
_VMEM = pl.BlockSpec(memory_space=pltpu.MemorySpace.VMEM)


@functools.partial(jax.jit, static_argnames=("short",))
def gru_model_forward(x, prep, short):
    """Full module forward. x: (B, T, F) batch_first, like the PyTorch module."""
    B, T, _ = x.shape
    H = prep["gru1"]["w1_hh"].shape[0]

    g1, g2, hd = prep["gru1"], prep["gru2"], prep["head"]
    args = (x,
            g1["w1_ih"], g1["w1_hh"], g1["b1"], g1["b1_hn"], g1["w2"], g1["b2"],
            g2["w1_ih"], g2["w1_hh"], g2["b1"], g2["b1_hn"], g2["w2"], g2["b2"],
            hd["w1a"], hd["w1b"], hd["b1"], hd["w2"], hd["b2"], hd["w3"], hd["b3"])

    kernel = functools.partial(fused_gru_kernel, short, B, T, H)
    return pl.pallas_call(
        kernel,
        out_shape=jax.ShapeDtypeStruct((B, 1), jnp.float32),
        in_specs=[_VMEM] * len(args),
        out_specs=_VMEM,
    )(*args)


# ----------------------------------------------------------------------------
# Parameter init (PyTorch-like fused layout) + one-time kernel-layout prep
# ----------------------------------------------------------------------------
def init_params(key, input_features, hidden_size):
    H = hidden_size

    def uni(k, shape, bound):
        return jax.random.uniform(k, shape, jnp.float32, -bound, bound)

    def gru_params(k, in_feat):
        bound = 1.0 / jnp.sqrt(H)
        ks = jax.random.split(k, 8)
        return dict(
            wih1_T=uni(ks[0], (in_feat, 3 * H), bound),
            whh1_T=uni(ks[1], (H, 3 * H), bound),
            bih1=uni(ks[2], (1, 3 * H), bound),
            bhh1=uni(ks[3], (1, 3 * H), bound),
            wih2_T=uni(ks[4], (H, 3 * H), bound),
            whh2_T=uni(ks[5], (H, 3 * H), bound),
            bih2=uni(ks[6], (1, 3 * H), bound),
            bhh2=uni(ks[7], (1, 3 * H), bound),
        )

    k1, k2, k3 = jax.random.split(key, 3)
    ks = jax.random.split(k3, 6)
    head = dict(
        w1_T=uni(ks[0], (2 * H, H), 1.0 / jnp.sqrt(2 * H)),
        b1=uni(ks[1], (1, H), 1.0 / jnp.sqrt(2 * H)),
        w2_T=uni(ks[2], (H, H // 2), 1.0 / jnp.sqrt(H)),
        b2=uni(ks[3], (1, H // 2), 1.0 / jnp.sqrt(H)),
        w3_T=uni(ks[4], (H // 2, 1), 1.0 / jnp.sqrt(H // 2)),
        b3=uni(ks[5], (1, 1), 1.0 / jnp.sqrt(H // 2)),
    )
    return dict(gru1=gru_params(k1, input_features),
                gru2=gru_params(k2, input_features),
                head=head)


def prepare_params(params):
    """Build kernel-layout params: fused (in, 3H) gate weights kept fused, layer-2
    [Wih|Whh] stacked into a zero-padded (2H, 4H) matrix, biases pre-combined."""
    def prep_gru(p):
        H = p["whh1_T"].shape[0]
        H2 = 2 * H
        bih1 = p["bih1"].reshape(3 * H)
        bhh1 = p["bhh1"].reshape(3 * H)
        bih2 = p["bih2"].reshape(3 * H)
        bhh2 = p["bhh2"].reshape(3 * H)
        zeros = jnp.zeros((H, H), jnp.float32)
        # (2H, 4H): [h1|h2] @ w2 -> [gi_r+gh_r | gi_z+gh_z | gi_n | gh_n]
        w2_cat = jnp.concatenate([
            jnp.concatenate([p["wih2_T"][:, :H2], p["wih2_T"][:, H2:], zeros], axis=1),
            jnp.concatenate([p["whh2_T"][:, :H2], zeros, p["whh2_T"][:, H2:]], axis=1),
        ], axis=0)
        return dict(
            w1_ih=p["wih1_T"],                                       # (F, 3H)
            w1_hh=p["whh1_T"],                                       # (H, 3H)
            b1=jnp.concatenate([bih1[:H2] + bhh1[:H2], bih1[H2:]]).reshape(1, 3 * H),
            b1_hn=bhh1[H2:].reshape(1, H),
            w2=w2_cat,                                               # (2H, 4H)
            b2=jnp.concatenate([bih2[:H2] + bhh2[:H2], bih2[H2:], bhh2[H2:]]).reshape(1, 4 * H),
        )

    hp = params["head"]
    H = hp["w1_T"].shape[1]
    head = dict(w1a=hp["w1_T"][:H], w1b=hp["w1_T"][H:], b1=hp["b1"],
                w2=hp["w2_T"], b2=hp["b2"], w3=hp["w3_T"], b3=hp["b3"])
    return dict(gru1=prep_gru(params["gru1"]),
                gru2=prep_gru(params["gru2"]),
                head=head)


# ----------------------------------------------------------------------------
# Pure-JAX reference (mirrors torch semantics, fused-weight layout)
# ----------------------------------------------------------------------------
def ref_gru_stack(x_btf, p):
    H = p["whh1_T"].shape[0]
    B = x_btf.shape[0]

    def cell(x_t, h_prev, wih_T, whh_T, bih, bhh):
        gi = x_t @ wih_T + bih
        gh = h_prev @ whh_T + bhh
        r = jax.nn.sigmoid(gi[:, :H] + gh[:, :H])
        z = jax.nn.sigmoid(gi[:, H:2 * H] + gh[:, H:2 * H])
        n = jnp.tanh(gi[:, 2 * H:] + r * gh[:, 2 * H:])
        return (1.0 - z) * n + z * h_prev

    h1 = jnp.zeros((B, H), jnp.float32)
    h2 = jnp.zeros((B, H), jnp.float32)
    for t in range(x_btf.shape[1]):
        h1 = cell(x_btf[:, t, :], h1, p["wih1_T"], p["whh1_T"], p["bih1"], p["bhh1"])
        h2 = cell(h1, h2, p["wih2_T"], p["whh2_T"], p["bih2"], p["bhh2"])
    return h2


def ref_forward(x, params, short):
    hl = ref_gru_stack(x, params["gru1"])
    hs = ref_gru_stack(x[:, -short:, :], params["gru2"])
    hp = params["head"]
    y = jnp.maximum(jnp.concatenate([hl, hs], 1) @ hp["w1_T"] + hp["b1"], 0.0)
    y = jnp.maximum(y @ hp["w2_T"] + hp["b2"], 0.0)
    return y @ hp["w3_T"] + hp["b3"]


# ----------------------------------------------------------------------------
if __name__ == "__main__":
    input_features = 4
    hidden_size = 32
    win_len = 8
    short = win_len // 4
    batch = 2

    key = jax.random.PRNGKey(0)
    kx, kp = jax.random.split(key)
    x = jax.random.normal(kx, (batch, win_len, input_features), jnp.float32)
    params = init_params(kp, input_features, hidden_size)
    prep = prepare_params(params)

    out = gru_model_forward(x, prep, short)
    out = jax.block_until_ready(out)

    ref = ref_forward(x, params, short)
    assert out.shape == (batch, 1), out.shape
    # Parity at default MXU matmul precision (same default as the reference path).
    assert jnp.allclose(out, ref, atol=2e-3, rtol=2e-3), (out, ref)

    print("KERNEL_OK")
</pallas_src>

<mosaic_0001>
module attributes {stable_mosaic.version = 11 : i64} {
  func.func @fused_gru_kernel(%arg0: memref<2x8x4xf32, #tpu.memory_space<vmem>>, %arg1: memref<4x96xf32, #tpu.memory_space<vmem>>, %arg2: memref<32x96xf32, #tpu.memory_space<vmem>>, %arg3: memref<1x96xf32, #tpu.memory_space<vmem>>, %arg4: memref<1x32xf32, #tpu.memory_space<vmem>>, %arg5: memref<64x128xf32, #tpu.memory_space<vmem>>, %arg6: memref<1x128xf32, #tpu.memory_space<vmem>>, %arg7: memref<4x96xf32, #tpu.memory_space<vmem>>, %arg8: memref<32x96xf32, #tpu.memory_space<vmem>>, %arg9: memref<1x96xf32, #tpu.memory_space<vmem>>, %arg10: memref<1x32xf32, #tpu.memory_space<vmem>>, %arg11: memref<64x128xf32, #tpu.memory_space<vmem>>, %arg12: memref<1x128xf32, #tpu.memory_space<vmem>>, %arg13: memref<32x32xf32, #tpu.memory_space<vmem>>, %arg14: memref<32x32xf32, #tpu.memory_space<vmem>>, %arg15: memref<1x32xf32, #tpu.memory_space<vmem>>, %arg16: memref<32x16xf32, #tpu.memory_space<vmem>>, %arg17: memref<1x16xf32, #tpu.memory_space<vmem>>, %arg18: memref<16x1xf32, #tpu.memory_space<vmem>>, %arg19: memref<1x1xf32, #tpu.memory_space<vmem>>, %arg20: memref<2x1xf32, #tpu.memory_space<vmem>>) attributes {dimension_semantics = [], scalar_prefetch = 0 : i64, scratch_operands = 0 : i64, tpu.core_type = #tpu.core_type<tc>} {
    %c0 = arith.constant 0 : index
    %c0_0 = arith.constant 0 : index
    %0 = vector.load %arg1[%c0, %c0_0] : memref<4x96xf32, #tpu.memory_space<vmem>>, vector<4x96xf32>
    %c0_1 = arith.constant 0 : index
    %c0_2 = arith.constant 0 : index
    %1 = vector.load %arg2[%c0_1, %c0_2] : memref<32x96xf32, #tpu.memory_space<vmem>>, vector<32x96xf32>
    %c0_3 = arith.constant 0 : index
    %c0_4 = arith.constant 0 : index
    %2 = vector.load %arg3[%c0_3, %c0_4] : memref<1x96xf32, #tpu.memory_space<vmem>>, vector<1x96xf32>
    %c0_5 = arith.constant 0 : index
    %c0_6 = arith.constant 0 : index
    %3 = vector.load %arg4[%c0_5, %c0_6] : memref<1x32xf32, #tpu.memory_space<vmem>>, vector<1x32xf32>
    %c0_7 = arith.constant 0 : index
    %c0_8 = arith.constant 0 : index
    %4 = vector.load %arg5[%c0_7, %c0_8] : memref<64x128xf32, #tpu.memory_space<vmem>>, vector<64x128xf32>
    %c0_9 = arith.constant 0 : index
    %c0_10 = arith.constant 0 : index
    %5 = vector.load %arg6[%c0_9, %c0_10] : memref<1x128xf32, #tpu.memory_space<vmem>>, vector<1x128xf32>
    %6 = vector.shape_cast %2 : vector<1x96xf32> to vector<1x96xf32>
    %7 = vector.broadcast %6 : vector<1x96xf32> to vector<2x96xf32>
    %8 = vector.shape_cast %3 : vector<1x32xf32> to vector<1x32xf32>
    %9 = vector.broadcast %8 : vector<1x32xf32> to vector<2x32xf32>
    %10 = vector.shape_cast %5 : vector<1x128xf32> to vector<1x128xf32>
    %11 = vector.broadcast %10 : vector<1x128xf32> to vector<2x128xf32>
    %c0_11 = arith.constant 0 : index
    %c0_12 = arith.constant 0 : index
    %c0_13 = arith.constant 0 : index
    %12 = vector.load %arg0[%c0_11, %c0_12, %c0_13] : memref<2x8x4xf32, #tpu.memory_space<vmem>>, vector<2x1x4xf32>
    %13 = vector.shape_cast %12 : vector<2x1x4xf32> to vector<2x4xf32>
    %cst = arith.constant dense<0.000000e+00> : vector<2x96xf32>
    %14 = tpu.matmul %13, %0, %cst {dimension_numbers = #tpu.dot_dimension_numbers<[1], [0], [0], [1], [0, 0, 1, 1], [], []>} : vector<2x4xf32>, vector<4x96xf32>, vector<2x96xf32> -> vector<2x96xf32>
    %15 = arith.addf %14, %7 : vector<2x96xf32>
    %c0_14 = arith.constant 0 : index
    %c1 = arith.constant 1 : index
    %c0_15 = arith.constant 0 : index
    %16 = vector.load %arg0[%c0_14, %c1, %c0_15] : memref<2x8x4xf32, #tpu.memory_space<vmem>>, vector<2x1x4xf32>
    %17 = vector.shape_cast %16 : vector<2x1x4xf32> to vector<2x4xf32>
    %cst_16 = arith.constant dense<0.000000e+00> : vector<2x96xf32>
    %18 = tpu.matmul %17, %0, %cst_16 {dimension_numbers = #tpu.dot_dimension_numbers<[1], [0], [0], [1], [0, 0, 1, 1], [], []>} : vector<2x4xf32>, vector<4x96xf32>, vector<2x96xf32> -> vector<2x96xf32>
    %19 = arith.addf %18, %7 : vector<2x96xf32>
    %c0_17 = arith.constant 0 : index
    %c2 = arith.constant 2 : index
    %c0_18 = arith.constant 0 : index
    %20 = vector.load %arg0[%c0_17, %c2, %c0_18] : memref<2x8x4xf32, #tpu.memory_space<vmem>>, vector<2x1x4xf32>
    %21 = vector.shape_cast %20 : vector<2x1x4xf32> to vector<2x4xf32>
    %cst_19 = arith.constant dense<0.000000e+00> : vector<2x96xf32>
    %22 = tpu.matmul %21, %0, %cst_19 {dimension_numbers = #tpu.dot_dimension_numbers<[1], [0], [0], [1], [0, 0, 1, 1], [], []>} : vector<2x4xf32>, vector<4x96xf32>, vector<2x96xf32> -> vector<2x96xf32>
    %23 = arith.addf %22, %7 : vector<2x96xf32>
    %c0_20 = arith.constant 0 : index
    %c3 = arith.constant 3 : index
    %c0_21 = arith.constant 0 : index
    %24 = vector.load %arg0[%c0_20, %c3, %c0_21] : memref<2x8x4xf32, #tpu.memory_space<vmem>>, vector<2x1x4xf32>
    %25 = vector.shape_cast %24 : vector<2x1x4xf32> to vector<2x4xf32>
    %cst_22 = arith.constant dense<0.000000e+00> : vector<2x96xf32>
    %26 = tpu.matmul %25, %0, %cst_22 {dimension_numbers = #tpu.dot_dimension_numbers<[1], [0], [0], [1], [0, 0, 1, 1], [], []>} : vector<2x4xf32>, vector<4x96xf32>, vector<2x96xf32> -> vector<2x96xf32>
    %27 = arith.addf %26, %7 : vector<2x96xf32>
    %c0_23 = arith.constant 0 : index
    %c4 = arith.constant 4 : index
    %c0_24 = arith.constant 0 : index
    %28 = vector.load %arg0[%c0_23, %c4, %c0_24] : memref<2x8x4xf32, #tpu.memory_space<vmem>>, vector<2x1x4xf32>
    %29 = vector.shape_cast %28 : vector<2x1x4xf32> to vector<2x4xf32>
    %cst_25 = arith.constant dense<0.000000e+00> : vector<2x96xf32>
    %30 = tpu.matmul %29, %0, %cst_25 {dimension_numbers = #tpu.dot_dimension_numbers<[1], [0], [0], [1], [0, 0, 1, 1], [], []>} : vector<2x4xf32>, vector<4x96xf32>, vector<2x96xf32> -> vector<2x96xf32>
    %31 = arith.addf %30, %7 : vector<2x96xf32>
    %c0_26 = arith.constant 0 : index
    %c5 = arith.constant 5 : index
    %c0_27 = arith.constant 0 : index
    %32 = vector.load %arg0[%c0_26, %c5, %c0_27] : memref<2x8x4xf32, #tpu.memory_space<vmem>>, vector<2x1x4xf32>
    %33 = vector.shape_cast %32 : vector<2x1x4xf32> to vector<2x4xf32>
    %cst_28 = arith.constant dense<0.000000e+00> : vector<2x96xf32>
    %34 = tpu.matmul %33, %0, %cst_28 {dimension_numbers = #tpu.dot_dimension_numbers<[1], [0], [0], [1], [0, 0, 1, 1], [], []>} : vector<2x4xf32>, vector<4x96xf32>, vector<2x96xf32> -> vector<2x96xf32>
    %35 = arith.addf %34, %7 : vector<2x96xf32>
    %c0_29 = arith.constant 0 : index
    %c6 = arith.constant 6 : index
    %c0_30 = arith.constant 0 : index
    %36 = vector.load %arg0[%c0_29, %c6, %c0_30] : memref<2x8x4xf32, #tpu.memory_space<vmem>>, vector<2x1x4xf32>
    %37 = vector.shape_cast %36 : vector<2x1x4xf32> to vector<2x4xf32>
    %cst_31 = arith.constant dense<0.000000e+00> : vector<2x96xf32>
    %38 = tpu.matmul %37, %0, %cst_31 {dimension_numbers = #tpu.dot_dimension_numbers<[1], [0], [0], [1], [0, 0, 1, 1], [], []>} : vector<2x4xf32>, vector<4x96xf32>, vector<2x96xf32> -> vector<2x96xf32>
    %39 = arith.addf %38, %7 : vector<2x96xf32>
    %c0_32 = arith.constant 0 : index
    %c7 = arith.constant 7 : index
    %c0_33 = arith.constant 0 : index
    %40 = vector.load %arg0[%c0_32, %c7, %c0_33] : memref<2x8x4xf32, #tpu.memory_space<vmem>>, vector<2x1x4xf32>
    %41 = vector.shape_cast %40 : vector<2x1x4xf32> to vector<2x4xf32>
    %cst_34 = arith.constant dense<0.000000e+00> : vector<2x96xf32>
    %42 = tpu.matmul %41, %0, %cst_34 {dimension_numbers = #tpu.dot_dimension_numbers<[1], [0], [0], [1], [0, 0, 1, 1], [], []>} : vector<2x4xf32>, vector<4x96xf32>, vector<2x96xf32> -> vector<2x96xf32>
    %43 = arith.addf %42, %7 : vector<2x96xf32>
    %cst_35 = arith.constant 0.000000e+00 : f32
    %44 = vector.broadcast %cst_35 : f32 to vector<2x32xf32>
    %cst_36 = arith.constant 0.000000e+00 : f32
    %45 = vector.broadcast %cst_36 : f32 to vector<2x32xf32>
    %cst_37 = arith.constant dense<0.000000e+00> : vector<2x96xf32>
    %46 = tpu.matmul %44, %1, %cst_37 {dimension_numbers = #tpu.dot_dimension_numbers<[1], [0], [0], [1], [0, 0, 1, 1], [], []>} : vector<2x32xf32>, vector<32x96xf32>, vector<2x96xf32> -> vector<2x96xf32>
    %47 = vector.extract_strided_slice %15 {offsets = [0, 0], sizes = [2, 64], strides = [1, 1]} : vector<2x96xf32> to vector<2x64xf32>
    %48 = vector.extract_strided_slice %46 {offsets = [0, 0], sizes = [2, 64], strides = [1, 1]} : vector<2x96xf32> to vector<2x64xf32>
    %49 = arith.addf %47, %48 : vector<2x64xf32>
    %50 = arith.negf %49 : vector<2x64xf32>
    %51 = math.exp %50 : vector<2x64xf32>
    %cst_38 = arith.constant 1.000000e+00 : f32
    %52 = vector.broadcast %cst_38 : f32 to vector<2x64xf32>
    %53 = arith.addf %52, %51 : vector<2x64xf32>
    %54 = arith.divf %52, %53 : vector<2x64xf32>
    %55 = vector.extract_strided_slice %54 {offsets = [0, 0], sizes = [2, 32], strides = [1, 1]} : vector<2x64xf32> to vector<2x32xf32>
    %56 = vector.extract_strided_slice %54 {offsets = [0, 32], sizes = [2, 32], strides = [1, 1]} : vector<2x64xf32> to vector<2x32xf32>
    %57 = vector.extract_strided_slice %15 {offsets = [0, 64], sizes = [2, 32], strides = [1, 1]} : vector<2x96xf32> to vector<2x32xf32>
    %58 = vector.extract_strided_slice %46 {offsets = [0, 64], sizes = [2, 32], strides = [1, 1]} : vector<2x96xf32> to vector<2x32xf32>
    %59 = arith.addf %58, %9 : vector<2x32xf32>
    %60 = arith.mulf %55, %59 : vector<2x32xf32>
    %61 = arith.addf %57, %60 : vector<2x32xf32>
    %62 = math.tanh %61 : vector<2x32xf32>
    %cst_39 = arith.constant 1.000000e+00 : f32
    %63 = vector.broadcast %cst_39 : f32 to vector<2x32xf32>
    %64 = arith.subf %63, %56 : vector<2x32xf32>
    %65 = arith.mulf %64, %62 : vector<2x32xf32>
    %66 = arith.mulf %56, %44 : vector<2x32xf32>
    %67 = arith.addf %65, %66 : vector<2x32xf32>
    %68 = tpu.concatenate %67, %45 in 1 : vector<2x32xf32>, vector<2x32xf32> -> vector<2x64xf32>
    %cst_40 = arith.constant dense<0.000000e+00> : vector<2x128xf32>
    %69 = tpu.matmul %68, %4, %cst_40 {dimension_numbers = #tpu.dot_dimension_numbers<[1], [0], [0], [1], [0, 0, 1, 1], [], []>} : vector<2x64xf32>, vector<64x128xf32>, vector<2x128xf32> -> vector<2x128xf32>
    %70 = arith.addf %69, %11 : vector<2x128xf32>
    %71 = vector.extract_strided_slice %70 {offsets = [0, 0], sizes = [2, 64], strides = [1, 1]} : vector<2x128xf32> to vector<2x64xf32>
    %72 = arith.negf %71 : vector<2x64xf32>
    %73 = math.exp %72 : vector<2x64xf32>
    %cst_41 = arith.constant 1.000000e+00 : f32
    %74 = vector.broadcast %cst_41 : f32 to vector<2x64xf32>
    %75 = arith.addf %74, %73 : vector<2x64xf32>
    %76 = arith.divf %74, %75 : vector<2x64xf32>
    %77 = vector.extract_strided_slice %76 {offsets = [0, 0], sizes = [2, 32], strides = [1, 1]} : vector<2x64xf32> to vector<2x32xf32>
    %78 = vector.extract_strided_slice %76 {offsets = [0, 32], sizes = [2, 32], strides = [1, 1]} : vector<2x64xf32> to vector<2x32xf32>
    %79 = vector.extract_strided_slice %70 {offsets = [0, 64], sizes = [2, 32], strides = [1, 1]} : vector<2x128xf32> to vector<2x32xf32>
    %80 = vector.extract_strided_slice %70 {offsets = [0, 96], sizes = [2, 32], strides = [1, 1]} : vector<2x128xf32> to vector<2x32xf32>
    %81 = arith.mulf %77, %80 : vector<2x32xf32>
    %82 = arith.addf %79, %81 : vector<2x32xf32>
    %83 = math.tanh %82 : vector<2x32xf32>
    %cst_42 = arith.constant 1.000000e+00 : f32
    %84 = vector.broadcast %cst_42 : f32 to vector<2x32xf32>
    %85 = arith.subf %84, %78 : vector<2x32xf32>
    %86 = arith.mulf %85, %83 : vector<2x32xf32>
    %87 = arith.mulf %78, %45 : vector<2x32xf32>
    %88 = arith.addf %86, %87 : vector<2x32xf32>
    %cst_43 = arith.constant dense<0.000000e+00> : vector<2x96xf32>
    %89 = tpu.matmul %67, %1, %cst_43 {dimension_numbers = #tpu.dot_dimension_numbers<[1], [0], [0], [1], [0, 0, 1, 1], [], []>} : vector<2x32xf32>, vector<32x96xf32>, vector<2x96xf32> -> vector<2x96xf32>
    %90 = vector.extract_strided_slice %19 {offsets = [0, 0], sizes = [2, 64], strides = [1, 1]} : vector<2x96xf32> to vector<2x64xf32>
    %91 = vector.extract_strided_slice %89 {offsets = [0, 0], sizes = [2, 64], strides = [1, 1]} : vector<2x96xf32> to vector<2x64xf32>
    %92 = arith.addf %90, %91 : vector<2x64xf32>
    %93 = arith.negf %92 : vector<2x64xf32>
    %94 = math.exp %93 : vector<2x64xf32>
    %cst_44 = arith.constant 1.000000e+00 : f32
    %95 = vector.broadcast %cst_44 : f32 to vector<2x64xf32>
    %96 = arith.addf %95, %94 : vector<2x64xf32>
    %97 = arith.divf %95, %96 : vector<2x64xf32>
    %98 = vector.extract_strided_slice %97 {offsets = [0, 0], sizes = [2, 32], strides = [1, 1]} : vector<2x64xf32> to vector<2x32xf32>
    %99 = vector.extract_strided_slice %97 {offsets = [0, 32], sizes = [2, 32], strides = [1, 1]} : vector<2x64xf32> to vector<2x32xf32>
    %100 = vector.extract_strided_slice %19 {offsets = [0, 64], sizes = [2, 32], strides = [1, 1]} : vector<2x96xf32> to vector<2x32xf32>
    %101 = vector.extract_strided_slice %89 {offsets = [0, 64], sizes = [2, 32], strides = [1, 1]} : vector<2x96xf32> to vector<2x32xf32>
    %102 = arith.addf %101, %9 : vector<2x32xf32>
    %103 = arith.mulf %98, %102 : vector<2x32xf32>
    %104 = arith.addf %100, %103 : vector<2x32xf32>
    %105 = math.tanh %104 : vector<2x32xf32>
    %cst_45 = arith.constant 1.000000e+00 : f32
    %106 = vector.broadcast %cst_45 : f32 to vector<2x32xf32>
    %107 = arith.subf %106, %99 : vector<2x32xf32>
    %108 = arith.mulf %107, %105 : vector<2x32xf32>
    %109 = arith.mulf %99, %67 : vector<2x32xf32>
    %110 = arith.addf %108, %109 : vector<2x32xf32>
    %111 = tpu.concatenate %110, %88 in 1 : vector<2x32xf32>, vector<2x32xf32> -> vector<2x64xf32>
    %cst_46 = arith.constant dense<0.000000e+00> : vector<2x128xf32>
    %112 = tpu.matmul %111, %4, %cst_46 {dimension_numbers = #tpu.dot_dimension_numbers<[1], [0], [0], [1], [0, 0, 1, 1], [], []>} : vector<2x64xf32>, vector<64x128xf32>, vector<2x128xf32> -> vector<2x128xf32>
    %113 = arith.addf %112, %11 : vector<2x128xf32>
    %114 = vector.extract_strided_slice %113 {offsets = [0, 0], sizes = [2, 64], strides = [1, 1]} : vector<2x128xf32> to vector<2x64xf32>
    %115 = arith.negf %114 : vector<2x64xf32>
    %116 = math.exp %115 : vector<2x64xf32>
    %cst_47 = arith.constant 1.000000e+00 : f32
    %117 = vector.broadcast %cst_47 : f32 to vector<2x64xf32>
    %118 = arith.addf %117, %116 : vector<2x64xf32>
    %119 = arith.divf %117, %118 : vector<2x64xf32>
    %120 = vector.extract_strided_slice %119 {offsets = [0, 0], sizes = [2, 32], strides = [1, 1]} : vector<2x64xf32> to vector<2x32xf32>
    %121 = vector.extract_strided_slice %119 {offsets = [0, 32], sizes = [2, 32], strides = [1, 1]} : vector<2x64xf32> to vector<2x32xf32>
    %122 = vector.extract_strided_slice %113 {offsets = [0, 64], sizes = [2, 32], strides = [1, 1]} : vector<2x128xf32> to vector<2x32xf32>
    %123 = vector.extract_strided_slice %113 {offsets = [0, 96], sizes = [2, 32], strides = [1, 1]} : vector<2x128xf32> to vector<2x32xf32>
    %124 = arith.mulf %120, %123 : vector<2x32xf32>
    %125 = arith.addf %122, %124 : vector<2x32xf32>
    %126 = math.tanh %125 : vector<2x32xf32>
    %cst_48 = arith.constant 1.000000e+00 : f32
    %127 = vector.broadcast %cst_48 : f32 to vector<2x32xf32>
    %128 = arith.subf %127, %121 : vector<2x32xf32>
    %129 = arith.mulf %128, %126 : vector<2x32xf32>
    %130 = arith.mulf %121, %88 : vector<2x32xf32>
    %131 = arith.addf %129, %130 : vector<2x32xf32>
    %cst_49 = arith.constant dense<0.000000e+00> : vector<2x96xf32>
    %132 = tpu.matmul %110, %1, %cst_49 {dimension_numbers = #tpu.dot_dimension_numbers<[1], [0], [0], [1], [0, 0, 1, 1], [], []>} : vector<2x32xf32>, vector<32x96xf32>, vector<2x96xf32> -> vector<2x96xf32>
    %133 = vector.extract_strided_slice %23 {offsets = [0, 0], sizes = [2, 64], strides = [1, 1]} : vector<2x96xf32> to vector<2x64xf32>
    %134 = vector.extract_strided_slice %132 {offsets = [0, 0], sizes = [2, 64], strides = [1, 1]} : vector<2x96xf32> to vector<2x64xf32>
    %135 = arith.addf %133, %134 : vector<2x64xf32>
    %136 = arith.negf %135 : vector<2x64xf32>
    %137 = math.exp %136 : vector<2x64xf32>
    %cst_50 = arith.constant 1.000000e+00 : f32
    %138 = vector.broadcast %cst_50 : f32 to vector<2x64xf32>
    %139 = arith.addf %138, %137 : vector<2x64xf32>
    %140 = arith.divf %138, %139 : vector<2x64xf32>
    %141 = vector.extract_strided_slice %140 {offsets = [0, 0], sizes = [2, 32], strides = [1, 1]} : vector<2x64xf32> to vector<2x32xf32>
    %142 = vector.extract_strided_slice %140 {offsets = [0, 32], sizes = [2, 32], strides = [1, 1]} : vector<2x64xf32> to vector<2x32xf32>
    %143 = vector.extract_strided_slice %23 {offsets = [0, 64], sizes = [2, 32], strides = [1, 1]} : vector<2x96xf32> to vector<2x32xf32>
    %144 = vector.extract_strided_slice %132 {offsets = [0, 64], sizes = [2, 32], strides = [1, 1]} : vector<2x96xf32> to vector<2x32xf32>
    %145 = arith.addf %144, %9 : vector<2x32xf32>
    %146 = arith.mulf %141, %145 : vector<2x32xf32>
    %147 = arith.addf %143, %146 : vector<2x32xf32>
    %148 = math.tanh %147 : vector<2x32xf32>
    %cst_51 = arith.constant 1.000000e+00 : f32
    %149 = vector.broadcast %cst_51 : f32 to vector<2x32xf32>
    %150 = arith.subf %149, %142 : vector<2x32xf32>
    %151 = arith.mulf %150, %148 : vector<2x32xf32>
    %152 = arith.mulf %142, %110 : vector<2x32xf32>
    %153 = arith.addf %151, %152 : vector<2x32xf32>
    %154 = tpu.concatenate %153, %131 in 1 : vector<2x32xf32>, vector<2x32xf32> -> vector<2x64xf32>
    %cst_52 = arith.constant dense<0.000000e+00> : vector<2x128xf32>
    %155 = tpu.matmul %154, %4, %cst_52 {dimension_numbers = #tpu.dot_dimension_numbers<[1], [0], [0], [1], [0, 0, 1, 1], [], []>} : vector<2x64xf32>, vector<64x128xf32>, vector<2x128xf32> -> vector<2x128xf32>
    %156 = arith.addf %155, %11 : vector<2x128xf32>
    %157 = vector.extract_strided_slice %156 {offsets = [0, 0], sizes = [2, 64], strides = [1, 1]} : vector<2x128xf32> to vector<2x64xf32>
    %158 = arith.negf %157 : vector<2x64xf32>
    %159 = math.exp %158 : vector<2x64xf32>
    %cst_53 = arith.constant 1.000000e+00 : f32
    %160 = vector.broadcast %cst_53 : f32 to vector<2x64xf32>
    %161 = arith.addf %160, %159 : vector<2x64xf32>
    %162 = arith.divf %160, %161 : vector<2x64xf32>
    %163 = vector.extract_strided_slice %162 {offsets = [0, 0], sizes = [2, 32], strides = [1, 1]} : vector<2x64xf32> to vector<2x32xf32>
    %164 = vector.extract_strided_slice %162 {offsets = [0, 32], sizes = [2, 32], strides = [1, 1]} : vector<2x64xf32> to vector<2x32xf32>
    %165 = vector.extract_strided_slice %156 {offsets = [0, 64], sizes = [2, 32], strides = [1, 1]} : vector<2x128xf32> to vector<2x32xf32>
    %166 = vector.extract_strided_slice %156 {offsets = [0, 96], sizes = [2, 32], strides = [1, 1]} : vector<2x128xf32> to vector<2x32xf32>
    %167 = arith.mulf %163, %166 : vector<2x32xf32>
    %168 = arith.addf %165, %167 : vector<2x32xf32>
    %169 = math.tanh %168 : vector<2x32xf32>
    %cst_54 = arith.constant 1.000000e+00 : f32
    %170 = vector.broadcast %cst_54 : f32 to vector<2x32xf32>
    %171 = arith.subf %170, %164 : vector<2x32xf32>
    %172 = arith.mulf %171, %169 : vector<2x32xf32>
    %173 = arith.mulf %164, %131 : vector<2x32xf32>
    %174 = arith.addf %172, %173 : vector<2x32xf32>
    %cst_55 = arith.constant dense<0.000000e+00> : vector<2x96xf32>
    %175 = tpu.matmul %153, %1, %cst_55 {dimension_numbers = #tpu.dot_dimension_numbers<[1], [0], [0], [1], [0, 0, 1, 1], [], []>} : vector<2x32xf32>, vector<32x96xf32>, vector<2x96xf32> -> vector<2x96xf32>
    %176 = vector.extract_strided_slice %27 {offsets = [0, 0], sizes = [2, 64], strides = [1, 1]} : vector<2x96xf32> to vector<2x64xf32>
    %177 = vector.extract_strided_slice %175 {offsets = [0, 0], sizes = [2, 64], strides = [1, 1]} : vector<2x96xf32> to vector<2x64xf32>
    %178 = arith.addf %176, %177 : vector<2x64xf32>
    %179 = arith.negf %178 : vector<2x64xf32>
    %180 = math.exp %179 : vector<2x64xf32>
    %cst_56 = arith.constant 1.000000e+00 : f32
    %181 = vector.broadcast %cst_56 : f32 to vector<2x64xf32>
    %182 = arith.addf %181, %180 : vector<2x64xf32>
    %183 = arith.divf %181, %182 : vector<2x64xf32>
    %184 = vector.extract_strided_slice %183 {offsets = [0, 0], sizes = [2, 32], strides = [1, 1]} : vector<2x64xf32> to vector<2x32xf32>
    %185 = vector.extract_strided_slice %183 {offsets = [0, 32], sizes = [2, 32], strides = [1, 1]} : vector<2x64xf32> to vector<2x32xf32>
    %186 = vector.extract_strided_slice %27 {offsets = [0, 64], sizes = [2, 32], strides = [1, 1]} : vector<2x96xf32> to vector<2x32xf32>
    %187 = vector.extract_strided_slice %175 {offsets = [0, 64], sizes = [2, 32], strides = [1, 1]} : vector<2x96xf32> to vector<2x32xf32>
    %188 = arith.addf %187, %9 : vector<2x32xf32>
    %189 = arith.mulf %184, %188 : vector<2x32xf32>
    %190 = arith.addf %186, %189 : vector<2x32xf32>
    %191 = math.tanh %190 : vector<2x32xf32>
    %cst_57 = arith.constant 1.000000e+00 : f32
    %192 = vector.broadcast %cst_57 : f32 to vector<2x32xf32>
    %193 = arith.subf %192, %185 : vector<2x32xf32>
    %194 = arith.mulf %193, %191 : vector<2x32xf32>
    %195 = arith.mulf %185, %153 : vector<2x32xf32>
    %196 = arith.addf %194, %195 : vector<2x32xf32>
    %197 = tpu.concatenate %196, %174 in 1 : vector<2x32xf32>, vector<2x32xf32> -> vector<2x64xf32>
    %cst_58 = arith.constant dense<0.000000e+00> : vector<2x128xf32>
    %198 = tpu.matmul %197, %4, %cst_58 {dimension_numbers = #tpu.dot_dimension_numbers<[1], [0], [0], [1], [0, 0, 1, 1], [], []>} : vector<2x64xf32>, vector<64x128xf32>, vector<2x128xf32> -> vector<2x128xf32>
    %199 = arith.addf %198, %11 : vector<2x128xf32>
    %200 = vector.extract_strided_slice %199 {offsets = [0, 0], sizes = [2, 64], strides = [1, 1]} : vector<2x128xf32> to vector<2x64xf32>
    %201 = arith.negf %200 : vector<2x64xf32>
    %202 = math.exp %201 : vector<2x64xf32>
    %cst_59 = arith.constant 1.000000e+00 : f32
    %203 = vector.broadcast %cst_59 : f32 to vector<2x64xf32>
    %204 = arith.addf %203, %202 : vector<2x64xf32>
    %205 = arith.divf %203, %204 : vector<2x64xf32>
    %206 = vector.extract_strided_slice %205 {offsets = [0, 0], sizes = [2, 32], strides = [1, 1]} : vector<2x64xf32> to vector<2x32xf32>
    %207 = vector.extract_strided_slice %205 {offsets = [0, 32], sizes = [2, 32], strides = [1, 1]} : vector<2x64xf32> to vector<2x32xf32>
    %208 = vector.extract_strided_slice %199 {offsets = [0, 64], sizes = [2, 32], strides = [1, 1]} : vector<2x128xf32> to vector<2x32xf32>
    %209 = vector.extract_strided_slice %199 {offsets = [0, 96], sizes = [2, 32], strides = [1, 1]} : vector<2x128xf32> to vector<2x32xf32>
    %210 = arith.mulf %206, %209 : vector<2x32xf32>
    %211 = arith.addf %208, %210 : vector<2x32xf32>
    %212 = math.tanh %211 : vector<2x32xf32>
    %cst_60 = arith.constant 1.000000e+00 : f32
    %213 = vector.broadcast %cst_60 : f32 to vector<2x32xf32>
    %214 = arith.subf %213, %207 : vector<2x32xf32>
    %215 = arith.mulf %214, %212 : vector<2x32xf32>
    %216 = arith.mulf %207, %174 : vector<2x32xf32>
    %217 = arith.addf %215, %216 : vector<2x32xf32>
    %cst_61 = arith.constant dense<0.000000e+00> : vector<2x96xf32>
    %218 = tpu.matmul %196, %1, %cst_61 {dimension_numbers = #tpu.dot_dimension_numbers<[1], [0], [0], [1], [0, 0, 1, 1], [], []>} : vector<2x32xf32>, vector<32x96xf32>, vector<2x96xf32> -> vector<2x96xf32>
    %219 = vector.extract_strided_slice %31 {offsets = [0, 0], sizes = [2, 64], strides = [1, 1]} : vector<2x96xf32> to vector<2x64xf32>
    %220 = vector.extract_strided_slice %218 {offsets = [0, 0], sizes = [2, 64], strides = [1, 1]} : vector<2x96xf32> to vector<2x64xf32>
    %221 = arith.addf %219, %220 : vector<2x64xf32>
    %222 = arith.negf %221 : vector<2x64xf32>
    %223 = math.exp %222 : vector<2x64xf32>
    %cst_62 = arith.constant 1.000000e+00 : f32
    %224 = vector.broadcast %cst_62 : f32 to vector<2x64xf32>
    %225 = arith.addf %224, %223 : vector<2x64xf32>
    %226 = arith.divf %224, %225 : vector<2x64xf32>
    %227 = vector.extract_strided_slice %226 {offsets = [0, 0], sizes = [2, 32], strides = [1, 1]} : vector<2x64xf32> to vector<2x32xf32>
    %228 = vector.extract_strided_slice %226 {offsets = [0, 32], sizes = [2, 32], strides = [1, 1]} : vector<2x64xf32> to vector<2x32xf32>
    %229 = vector.extract_strided_slice %31 {offsets = [0, 64], sizes = [2, 32], strides = [1, 1]} : vector<2x96xf32> to vector<2x32xf32>
    %230 = vector.extract_strided_slice %218 {offsets = [0, 64], sizes = [2, 32], strides = [1, 1]} : vector<2x96xf32> to vector<2x32xf32>
    %231 = arith.addf %230, %9 : vector<2x32xf32>
    %232 = arith.mulf %227, %231 : vector<2x32xf32>
    %233 = arith.addf %229, %232 : vector<2x32xf32>
    %234 = math.tanh %233 : vector<2x32xf32>
    %cst_63 = arith.constant 1.000000e+00 : f32
    %235 = vector.broadcast %cst_63 : f32 to vector<2x32xf32>
    %236 = arith.subf %235, %228 : vector<2x32xf32>
    %237 = arith.mulf %236, %234 : vector<2x32xf32>
    %238 = arith.mulf %228, %196 : vector<2x32xf32>
    %239 = arith.addf %237, %238 : vector<2x32xf32>
    %240 = tpu.concatenate %239, %217 in 1 : vector<2x32xf32>, vector<2x32xf32> -> vector<2x64xf32>
    %cst_64 = arith.constant dense<0.000000e+00> : vector<2x128xf32>
    %241 = tpu.matmul %240, %4, %cst_64 {dimension_numbers = #tpu.dot_dimension_numbers<[1], [0], [0], [1], [0, 0, 1, 1], [], []>} : vector<2x64xf32>, vector<64x128xf32>, vector<2x128xf32> -> vector<2x128xf32>
    %242 = arith.addf %241, %11 : vector<2x128xf32>
    %243 = vector.extract_strided_slice %242 {offsets = [0, 0], sizes = [2, 64], strides = [1, 1]} : vector<2x128xf32> to vector<2x64xf32>
    %244 = arith.negf %243 : vector<2x64xf32>
    %245 = math.exp %244 : vector<2x64xf32>
    %cst_65 = arith.constant 1.000000e+00 : f32
    %246 = vector.broadcast %cst_65 : f32 to vector<2x64xf32>
    %247 = arith.addf %246, %245 : vector<2x64xf32>
    %248 = arith.divf %246, %247 : vector<2x64xf32>
    %249 = vector.extract_strided_slice %248 {offsets = [0, 0], sizes = [2, 32], strides = [1, 1]} : vector<2x64xf32> to vector<2x32xf32>
    %250 = vector.extract_strided_slice %248 {offsets = [0, 32], sizes = [2, 32], strides = [1, 1]} : vector<2x64xf32> to vector<2x32xf32>
    %251 = vector.extract_strided_slice %242 {offsets = [0, 64], sizes = [2, 32], strides = [1, 1]} : vector<2x128xf32> to vector<2x32xf32>
    %252 = vector.extract_strided_slice %242 {offsets = [0, 96], sizes = [2, 32], strides = [1, 1]} : vector<2x128xf32> to vector<2x32xf32>
    %253 = arith.mulf %249, %252 : vector<2x32xf32>
    %254 = arith.addf %251, %253 : vector<2x32xf32>
    %255 = math.tanh %254 : vector<2x32xf32>
    %cst_66 = arith.constant 1.000000e+00 : f32
    %256 = vector.broadcast %cst_66 : f32 to vector<2x32xf32>
    %257 = arith.subf %256, %250 : vector<2x32xf32>
    %258 = arith.mulf %257, %255 : vector<2x32xf32>
    %259 = arith.mulf %250, %217 : vector<2x32xf32>
    %260 = arith.addf %258, %259 : vector<2x32xf32>
    %cst_67 = arith.constant dense<0.000000e+00> : vector<2x96xf32>
    %261 = tpu.matmul %239, %1, %cst_67 {dimension_numbers = #tpu.dot_dimension_numbers<[1], [0], [0], [1], [0, 0, 1, 1], [], []>} : vector<2x32xf32>, vector<32x96xf32>, vector<2x96xf32> -> vector<2x96xf32>
    %262 = vector.extract_strided_slice %35 {offsets = [0, 0], sizes = [2, 64], strides = [1, 1]} : vector<2x96xf32> to vector<2x64xf32>
    %263 = vector.extract_strided_slice %261 {offsets = [0, 0], sizes = [2, 64], strides = [1, 1]} : vector<2x96xf32> to vector<2x64xf32>
    %264 = arith.addf %262, %263 : vector<2x64xf32>
    %265 = arith.negf %264 : vector<2x64xf32>
    %266 = math.exp %265 : vector<2x64xf32>
    %cst_68 = arith.constant 1.000000e+00 : f32
    %267 = vector.broadcast %cst_68 : f32 to vector<2x64xf32>
    %268 = arith.addf %267, %266 : vector<2x64xf32>
    %269 = arith.divf %267, %268 : vector<2x64xf32>
    %270 = vector.extract_strided_slice %269 {offsets = [0, 0], sizes = [2, 32], strides = [1, 1]} : vector<2x64xf32> to vector<2x32xf32>
    %271 = vector.extract_strided_slice %269 {offsets = [0, 32], sizes = [2, 32], strides = [1, 1]} : vector<2x64xf32> to vector<2x32xf32>
    %272 = vector.extract_strided_slice %35 {offsets = [0, 64], sizes = [2, 32], strides = [1, 1]} : vector<2x96xf32> to vector<2x32xf32>
    %273 = vector.extract_strided_slice %261 {offsets = [0, 64], sizes = [2, 32], strides = [1, 1]} : vector<2x96xf32> to vector<2x32xf32>
    %274 = arith.addf %273, %9 : vector<2x32xf32>
    %275 = arith.mulf %270, %274 : vector<2x32xf32>
    %276 = arith.addf %272, %275 : vector<2x32xf32>
    %277 = math.tanh %276 : vector<2x32xf32>
    %cst_69 = arith.constant 1.000000e+00 : f32
    %278 = vector.broadcast %cst_69 : f32 to vector<2x32xf32>
    %279 = arith.subf %278, %271 : vector<2x32xf32>
    %280 = arith.mulf %279, %277 : vector<2x32xf32>
    %281 = arith.mulf %271, %239 : vector<2x32xf32>
    %282 = arith.addf %280, %281 : vector<2x32xf32>
    %283 = tpu.concatenate %282, %260 in 1 : vector<2x32xf32>, vector<2x32xf32> -> vector<2x64xf32>
    %cst_70 = arith.constant dense<0.000000e+00> : vector<2x128xf32>
    %284 = tpu.matmul %283, %4, %cst_70 {dimension_numbers = #tpu.dot_dimension_numbers<[1], [0], [0], [1], [0, 0, 1, 1], [], []>} : vector<2x64xf32>, vector<64x128xf32>, vector<2x128xf32> -> vector<2x128xf32>
    %285 = arith.addf %284, %11 : vector<2x128xf32>
    %286 = vector.extract_strided_slice %285 {offsets = [0, 0], sizes = [2, 64], strides = [1, 1]} : vector<2x128xf32> to vector<2x64xf32>
    %287 = arith.negf %286 : vector<2x64xf32>
    %288 = math.exp %287 : vector<2x64xf32>
    %cst_71 = arith.constant 1.000000e+00 : f32
    %289 = vector.broadcast %cst_71 : f32 to vector<2x64xf32>
    %290 = arith.addf %289, %288 : vector<2x64xf32>
    %291 = arith.divf %289, %290 : vector<2x64xf32>
    %292 = vector.extract_strided_slice %291 {offsets = [0, 0], sizes = [2, 32], strides = [1, 1]} : vector<2x64xf32> to vector<2x32xf32>
    %293 = vector.extract_strided_slice %291 {offsets = [0, 32], sizes = [2, 32], strides = [1, 1]} : vector<2x64xf32> to vector<2x32xf32>
    %294 = vector.extract_strided_slice %285 {offsets = [0, 64], sizes = [2, 32], strides = [1, 1]} : vector<2x128xf32> to vector<2x32xf32>
    %295 = vector.extract_strided_slice %285 {offsets = [0, 96], sizes = [2, 32], strides = [1, 1]} : vector<2x128xf32> to vector<2x32xf32>
    %296 = arith.mulf %292, %295 : vector<2x32xf32>
    %297 = arith.addf %294, %296 : vector<2x32xf32>
    %298 = math.tanh %297 : vector<2x32xf32>
    %cst_72 = arith.constant 1.000000e+00 : f32
    %299 = vector.broadcast %cst_72 : f32 to vector<2x32xf32>
    %300 = arith.subf %299, %293 : vector<2x32xf32>
    %301 = arith.mulf %300, %298 : vector<2x32xf32>
    %302 = arith.mulf %293, %260 : vector<2x32xf32>
    %303 = arith.addf %301, %302 : vector<2x32xf32>
    %cst_73 = arith.constant dense<0.000000e+00> : vector<2x96xf32>
    %304 = tpu.matmul %282, %1, %cst_73 {dimension_numbers = #tpu.dot_dimension_numbers<[1], [0], [0], [1], [0, 0, 1, 1], [], []>} : vector<2x32xf32>, vector<32x96xf32>, vector<2x96xf32> -> vector<2x96xf32>
    %305 = vector.extract_strided_slice %39 {offsets = [0, 0], sizes = [2, 64], strides = [1, 1]} : vector<2x96xf32> to vector<2x64xf32>
    %306 = vector.extract_strided_slice %304 {offsets = [0, 0], sizes = [2, 64], strides = [1, 1]} : vector<2x96xf32> to vector<2x64xf32>
    %307 = arith.addf %305, %306 : vector<2x64xf32>
    %308 = arith.negf %307 : vector<2x64xf32>
    %309 = math.exp %308 : vector<2x64xf32>
    %cst_74 = arith.constant 1.000000e+00 : f32
    %310 = vector.broadcast %cst_74 : f32 to vector<2x64xf32>
    %311 = arith.addf %310, %309 : vector<2x64xf32>
    %312 = arith.divf %310, %311 : vector<2x64xf32>
    %313 = vector.extract_strided_slice %312 {offsets = [0, 0], sizes = [2, 32], strides = [1, 1]} : vector<2x64xf32> to vector<2x32xf32>
    %314 = vector.extract_strided_slice %312 {offsets = [0, 32], sizes = [2, 32], strides = [1, 1]} : vector<2x64xf32> to vector<2x32xf32>
    %315 = vector.extract_strided_slice %39 {offsets = [0, 64], sizes = [2, 32], strides = [1, 1]} : vector<2x96xf32> to vector<2x32xf32>
    %316 = vector.extract_strided_slice %304 {offsets = [0, 64], sizes = [2, 32], strides = [1, 1]} : vector<2x96xf32> to vector<2x32xf32>
    %317 = arith.addf %316, %9 : vector<2x32xf32>
    %318 = arith.mulf %313, %317 : vector<2x32xf32>
    %319 = arith.addf %315, %318 : vector<2x32xf32>
    %320 = math.tanh %319 : vector<2x32xf32>
    %cst_75 = arith.constant 1.000000e+00 : f32
    %321 = vector.broadcast %cst_75 : f32 to vector<2x32xf32>
    %322 = arith.subf %321, %314 : vector<2x32xf32>
    %323 = arith.mulf %322, %320 : vector<2x32xf32>
    %324 = arith.mulf %314, %282 : vector<2x32xf32>
    %325 = arith.addf %323, %324 : vector<2x32xf32>
    %326 = tpu.concatenate %325, %303 in 1 : vector<2x32xf32>, vector<2x32xf32> -> vector<2x64xf32>
    %cst_76 = arith.constant dense<0.000000e+00> : vector<2x128xf32>
    %327 = tpu.matmul %326, %4, %cst_76 {dimension_numbers = #tpu.dot_dimension_numbers<[1], [0], [0], [1], [0, 0, 1, 1], [], []>} : vector<2x64xf32>, vector<64x128xf32>, vector<2x128xf32> -> vector<2x128xf32>
    %328 = arith.addf %327, %11 : vector<2x128xf32>
    %329 = vector.extract_strided_slice %328 {offsets = [0, 0], sizes = [2, 64], strides = [1, 1]} : vector<2x128xf32> to vector<2x64xf32>
    %330 = arith.negf %329 : vector<2x64xf32>
    %331 = math.exp %330 : vector<2x64xf32>
    %cst_77 = arith.constant 1.000000e+00 : f32
    %332 = vector.broadcast %cst_77 : f32 to vector<2x64xf32>
    %333 = arith.addf %332, %331 : vector<2x64xf32>
    %334 = arith.divf %332, %333 : vector<2x64xf32>
    %335 = vector.extract_strided_slice %334 {offsets = [0, 0], sizes = [2, 32], strides = [1, 1]} : vector<2x64xf32> to vector<2x32xf32>
    %336 = vector.extract_strided_slice %334 {offsets = [0, 32], sizes = [2, 32], strides = [1, 1]} : vector<2x64xf32> to vector<2x32xf32>
    %337 = vector.extract_strided_slice %328 {offsets = [0, 64], sizes = [2, 32], strides = [1, 1]} : vector<2x128xf32> to vector<2x32xf32>
    %338 = vector.extract_strided_slice %328 {offsets = [0, 96], sizes = [2, 32], strides = [1, 1]} : vector<2x128xf32> to vector<2x32xf32>
    %339 = arith.mulf %335, %338 : vector<2x32xf32>
    %340 = arith.addf %337, %339 : vector<2x32xf32>
    %341 = math.tanh %340 : vector<2x32xf32>
    %cst_78 = arith.constant 1.000000e+00 : f32
    %342 = vector.broadcast %cst_78 : f32 to vector<2x32xf32>
    %343 = arith.subf %342, %336 : vector<2x32xf32>
    %344 = arith.mulf %343, %341 : vector<2x32xf32>
    %345 = arith.mulf %336, %303 : vector<2x32xf32>
    %346 = arith.addf %344, %345 : vector<2x32xf32>
    %cst_79 = arith.constant dense<0.000000e+00> : vector<2x96xf32>
    %347 = tpu.matmul %325, %1, %cst_79 {dimension_numbers = #tpu.dot_dimension_numbers<[1], [0], [0], [1], [0, 0, 1, 1], [], []>} : vector<2x32xf32>, vector<32x96xf32>, vector<2x96xf32> -> vector<2x96xf32>
    %348 = vector.extract_strided_slice %43 {offsets = [0, 0], sizes = [2, 64], strides = [1, 1]} : vector<2x96xf32> to vector<2x64xf32>
    %349 = vector.extract_strided_slice %347 {offsets = [0, 0], sizes = [2, 64], strides = [1, 1]} : vector<2x96xf32> to vector<2x64xf32>
    %350 = arith.addf %348, %349 : vector<2x64xf32>
    %351 = arith.negf %350 : vector<2x64xf32>
    %352 = math.exp %351 : vector<2x64xf32>
    %cst_80 = arith.constant 1.000000e+00 : f32
    %353 = vector.broadcast %cst_80 : f32 to vector<2x64xf32>
    %354 = arith.addf %353, %352 : vector<2x64xf32>
    %355 = arith.divf %353, %354 : vector<2x64xf32>
    %356 = vector.extract_strided_slice %355 {offsets = [0, 0], sizes = [2, 32], strides = [1, 1]} : vector<2x64xf32> to vector<2x32xf32>
    %357 = vector.extract_strided_slice %355 {offsets = [0, 32], sizes = [2, 32], strides = [1, 1]} : vector<2x64xf32> to vector<2x32xf32>
    %358 = vector.extract_strided_slice %43 {offsets = [0, 64], sizes = [2, 32], strides = [1, 1]} : vector<2x96xf32> to vector<2x32xf32>
    %359 = vector.extract_strided_slice %347 {offsets = [0, 64], sizes = [2, 32], strides = [1, 1]} : vector<2x96xf32> to vector<2x32xf32>
    %360 = arith.addf %359, %9 : vector<2x32xf32>
    %361 = arith.mulf %356, %360 : vector<2x32xf32>
    %362 = arith.addf %358, %361 : vector<2x32xf32>
    %363 = math.tanh %362 : vector<2x32xf32>
    %cst_81 = arith.constant 1.000000e+00 : f32
    %364 = vector.broadcast %cst_81 : f32 to vector<2x32xf32>
    %365 = arith.subf %364, %357 : vector<2x32xf32>
    %366 = arith.mulf %365, %363 : vector<2x32xf32>
    %367 = arith.mulf %357, %325 : vector<2x32xf32>
    %368 = arith.addf %366, %367 : vector<2x32xf32>
    %369 = tpu.concatenate %368, %346 in 1 : vector<2x32xf32>, vector<2x32xf32> -> vector<2x64xf32>
    %cst_82 = arith.constant dense<0.000000e+00> : vector<2x128xf32>
    %370 = tpu.matmul %369, %4, %cst_82 {dimension_numbers = #tpu.dot_dimension_numbers<[1], [0], [0], [1], [0, 0, 1, 1], [], []>} : vector<2x64xf32>, vector<64x128xf32>, vector<2x128xf32> -> vector<2x128xf32>
    %371 = arith.addf %370, %11 : vector<2x128xf32>
    %372 = vector.extract_strided_slice %371 {offsets = [0, 0], sizes = [2, 64], strides = [1, 1]} : vector<2x128xf32> to vector<2x64xf32>
    %373 = arith.negf %372 : vector<2x64xf32>
    %374 = math.exp %373 : vector<2x64xf32>
    %cst_83 = arith.constant 1.000000e+00 : f32
    %375 = vector.broadcast %cst_83 : f32 to vector<2x64xf32>
    %376 = arith.addf %375, %374 : vector<2x64xf32>
    %377 = arith.divf %375, %376 : vector<2x64xf32>
    %378 = vector.extract_strided_slice %377 {offsets = [0, 0], sizes = [2, 32], strides = [1, 1]} : vector<2x64xf32> to vector<2x32xf32>
    %379 = vector.extract_strided_slice %377 {offsets = [0, 32], sizes = [2, 32], strides = [1, 1]} : vector<2x64xf32> to vector<2x32xf32>
    %380 = vector.extract_strided_slice %371 {offsets = [0, 64], sizes = [2, 32], strides = [1, 1]} : vector<2x128xf32> to vector<2x32xf32>
    %381 = vector.extract_strided_slice %371 {offsets = [0, 96], sizes = [2, 32], strides = [1, 1]} : vector<2x128xf32> to vector<2x32xf32>
    %382 = arith.mulf %378, %381 : vector<2x32xf32>
    %383 = arith.addf %380, %382 : vector<2x32xf32>
    %384 = math.tanh %383 : vector<2x32xf32>
    %cst_84 = arith.constant 1.000000e+00 : f32
    %385 = vector.broadcast %cst_84 : f32 to vector<2x32xf32>
    %386 = arith.subf %385, %379 : vector<2x32xf32>
    %387 = arith.mulf %386, %384 : vector<2x32xf32>
    %388 = arith.mulf %379, %346 : vector<2x32xf32>
    %389 = arith.addf %387, %388 : vector<2x32xf32>
    %c0_85 = arith.constant 0 : index
    %c0_86 = arith.constant 0 : index
    %390 = vector.load %arg7[%c0_85, %c0_86] : memref<4x96xf32, #tpu.memory_space<vmem>>, vector<4x96xf32>
    %c0_87 = arith.constant 0 : index
    %c0_88 = arith.constant 0 : index
    %391 = vector.load %arg8[%c0_87, %c0_88] : memref<32x96xf32, #tpu.memory_space<vmem>>, vector<32x96xf32>
    %c0_89 = arith.constant 0 : index
    %c0_90 = arith.constant 0 : index
    %392 = vector.load %arg9[%c0_89, %c0_90] : memref<1x96xf32, #tpu.memory_space<vmem>>, vector<1x96xf32>
    %c0_91 = arith.constant 0 : index
    %c0_92 = arith.constant 0 : index
    %393 = vector.load %arg10[%c0_91, %c0_92] : memref<1x32xf32, #tpu.memory_space<vmem>>, vector<1x32xf32>
    %c0_93 = arith.constant 0 : index
    %c0_94 = arith.constant 0 : index
    %394 = vector.load %arg11[%c0_93, %c0_94] : memref<64x128xf32, #tpu.memory_space<vmem>>, vector<64x128xf32>
    %c0_95 = arith.constant 0 : index
    %c0_96 = arith.constant 0 : index
    %395 = vector.load %arg12[%c0_95, %c0_96] : memref<1x128xf32, #tpu.memory_space<vmem>>, vector<1x128xf32>
    %396 = vector.shape_cast %392 : vector<1x96xf32> to vector<1x96xf32>
    %397 = vector.broadcast %396 : vector<1x96xf32> to vector<2x96xf32>
    %398 = vector.shape_cast %393 : vector<1x32xf32> to vector<1x32xf32>
    %399 = vector.broadcast %398 : vector<1x32xf32> to vector<2x32xf32>
    %400 = vector.shape_cast %395 : vector<1x128xf32> to vector<1x128xf32>
    %401 = vector.broadcast %400 : vector<1x128xf32> to vector<2x128xf32>
    %c0_97 = arith.constant 0 : index
    %c6_98 = arith.constant 6 : index
    %c0_99 = arith.constant 0 : index
    %402 = vector.load %arg0[%c0_97, %c6_98, %c0_99] : memref<2x8x4xf32, #tpu.memory_space<vmem>>, vector<2x1x4xf32>
    %403 = vector.shape_cast %402 : vector<2x1x4xf32> to vector<2x4xf32>
    %cst_100 = arith.constant dense<0.000000e+00> : vector<2x96xf32>
    %404 = tpu.matmul %403, %390, %cst_100 {dimension_numbers = #tpu.dot_dimension_numbers<[1], [0], [0], [1], [0, 0, 1, 1], [], []>} : vector<2x4xf32>, vector<4x96xf32>, vector<2x96xf32> -> vector<2x96xf32>
    %405 = arith.addf %404, %397 : vector<2x96xf32>
    %c0_101 = arith.constant 0 : index
    %c7_102 = arith.constant 7 : index
    %c0_103 = arith.constant 0 : index
    %406 = vector.load %arg0[%c0_101, %c7_102, %c0_103] : memref<2x8x4xf32, #tpu.memory_space<vmem>>, vector<2x1x4xf32>
    %407 = vector.shape_cast %406 : vector<2x1x4xf32> to vector<2x4xf32>
    %cst_104 = arith.constant dense<0.000000e+00> : vector<2x96xf32>
    %408 = tpu.matmul %407, %390, %cst_104 {dimension_numbers = #tpu.dot_dimension_numbers<[1], [0], [0], [1], [0, 0, 1, 1], [], []>} : vector<2x4xf32>, vector<4x96xf32>, vector<2x96xf32> -> vector<2x96xf32>
    %409 = arith.addf %408, %397 : vector<2x96xf32>
    %cst_105 = arith.constant 0.000000e+00 : f32
    %410 = vector.broadcast %cst_105 : f32 to vector<2x32xf32>
    %cst_106 = arith.constant 0.000000e+00 : f32
    %411 = vector.broadcast %cst_106 : f32 to vector<2x32xf32>
    %cst_107 = arith.constant dense<0.000000e+00> : vector<2x96xf32>
    %412 = tpu.matmul %410, %391, %cst_107 {dimension_numbers = #tpu.dot_dimension_numbers<[1], [0], [0], [1], [0, 0, 1, 1], [], []>} : vector<2x32xf32>, vector<32x96xf32>, vector<2x96xf32> -> vector<2x96xf32>
    %413 = vector.extract_strided_slice %405 {offsets = [0, 0], sizes = [2, 64], strides = [1, 1]} : vector<2x96xf32> to vector<2x64xf32>
    %414 = vector.extract_strided_slice %412 {offsets = [0, 0], sizes = [2, 64], strides = [1, 1]} : vector<2x96xf32> to vector<2x64xf32>
    %415 = arith.addf %413, %414 : vector<2x64xf32>
    %416 = arith.negf %415 : vector<2x64xf32>
    %417 = math.exp %416 : vector<2x64xf32>
    %cst_108 = arith.constant 1.000000e+00 : f32
    %418 = vector.broadcast %cst_108 : f32 to vector<2x64xf32>
    %419 = arith.addf %418, %417 : vector<2x64xf32>
    %420 = arith.divf %418, %419 : vector<2x64xf32>
    %421 = vector.extract_strided_slice %420 {offsets = [0, 0], sizes = [2, 32], strides = [1, 1]} : vector<2x64xf32> to vector<2x32xf32>
    %422 = vector.extract_strided_slice %420 {offsets = [0, 32], sizes = [2, 32], strides = [1, 1]} : vector<2x64xf32> to vector<2x32xf32>
    %423 = vector.extract_strided_slice %405 {offsets = [0, 64], sizes = [2, 32], strides = [1, 1]} : vector<2x96xf32> to vector<2x32xf32>
    %424 = vector.extract_strided_slice %412 {offsets = [0, 64], sizes = [2, 32], strides = [1, 1]} : vector<2x96xf32> to vector<2x32xf32>
    %425 = arith.addf %424, %399 : vector<2x32xf32>
    %426 = arith.mulf %421, %425 : vector<2x32xf32>
    %427 = arith.addf %423, %426 : vector<2x32xf32>
    %428 = math.tanh %427 : vector<2x32xf32>
    %cst_109 = arith.constant 1.000000e+00 : f32
    %429 = vector.broadcast %cst_109 : f32 to vector<2x32xf32>
    %430 = arith.subf %429, %422 : vector<2x32xf32>
    %431 = arith.mulf %430, %428 : vector<2x32xf32>
    %432 = arith.mulf %422, %410 : vector<2x32xf32>
    %433 = arith.addf %431, %432 : vector<2x32xf32>
    %434 = tpu.concatenate %433, %411 in 1 : vector<2x32xf32>, vector<2x32xf32> -> vector<2x64xf32>
    %cst_110 = arith.constant dense<0.000000e+00> : vector<2x128xf32>
    %435 = tpu.matmul %434, %394, %cst_110 {dimension_numbers = #tpu.dot_dimension_numbers<[1], [0], [0], [1], [0, 0, 1, 1], [], []>} : vector<2x64xf32>, vector<64x128xf32>, vector<2x128xf32> -> vector<2x128xf32>
    %436 = arith.addf %435, %401 : vector<2x128xf32>
    %437 = vector.extract_strided_slice %436 {offsets = [0, 0], sizes = [2, 64], strides = [1, 1]} : vector<2x128xf32> to vector<2x64xf32>
    %438 = arith.negf %437 : vector<2x64xf32>
    %439 = math.exp %438 : vector<2x64xf32>
    %cst_111 = arith.constant 1.000000e+00 : f32
    %440 = vector.broadcast %cst_111 : f32 to vector<2x64xf32>
    %441 = arith.addf %440, %439 : vector<2x64xf32>
    %442 = arith.divf %440, %441 : vector<2x64xf32>
    %443 = vector.extract_strided_slice %442 {offsets = [0, 0], sizes = [2, 32], strides = [1, 1]} : vector<2x64xf32> to vector<2x32xf32>
    %444 = vector.extract_strided_slice %442 {offsets = [0, 32], sizes = [2, 32], strides = [1, 1]} : vector<2x64xf32> to vector<2x32xf32>
    %445 = vector.extract_strided_slice %436 {offsets = [0, 64], sizes = [2, 32], strides = [1, 1]} : vector<2x128xf32> to vector<2x32xf32>
    %446 = vector.extract_strided_slice %436 {offsets = [0, 96], sizes = [2, 32], strides = [1, 1]} : vector<2x128xf32> to vector<2x32xf32>
    %447 = arith.mulf %443, %446 : vector<2x32xf32>
    %448 = arith.addf %445, %447 : vector<2x32xf32>
    %449 = math.tanh %448 : vector<2x32xf32>
    %cst_112 = arith.constant 1.000000e+00 : f32
    %450 = vector.broadcast %cst_112 : f32 to vector<2x32xf32>
    %451 = arith.subf %450, %444 : vector<2x32xf32>
    %452 = arith.mulf %451, %449 : vector<2x32xf32>
    %453 = arith.mulf %444, %411 : vector<2x32xf32>
    %454 = arith.addf %452, %453 : vector<2x32xf32>
    %cst_113 = arith.constant dense<0.000000e+00> : vector<2x96xf32>
    %455 = tpu.matmul %433, %391, %cst_113 {dimension_numbers = #tpu.dot_dimension_numbers<[1], [0], [0], [1], [0, 0, 1, 1], [], []>} : vector<2x32xf32>, vector<32x96xf32>, vector<2x96xf32> -> vector<2x96xf32>
    %456 = vector.extract_strided_slice %409 {offsets = [0, 0], sizes = [2, 64], strides = [1, 1]} : vector<2x96xf32> to vector<2x64xf32>
    %457 = vector.extract_strided_slice %455 {offsets = [0, 0], sizes = [2, 64], strides = [1, 1]} : vector<2x96xf32> to vector<2x64xf32>
    %458 = arith.addf %456, %457 : vector<2x64xf32>
    %459 = arith.negf %458 : vector<2x64xf32>
    %460 = math.exp %459 : vector<2x64xf32>
    %cst_114 = arith.constant 1.000000e+00 : f32
    %461 = vector.broadcast %cst_114 : f32 to vector<2x64xf32>
    %462 = arith.addf %461, %460 : vector<2x64xf32>
    %463 = arith.divf %461, %462 : vector<2x64xf32>
    %464 = vector.extract_strided_slice %463 {offsets = [0, 0], sizes = [2, 32], strides = [1, 1]} : vector<2x64xf32> to vector<2x32xf32>
    %465 = vector.extract_strided_slice %463 {offsets = [0, 32], sizes = [2, 32], strides = [1, 1]} : vector<2x64xf32> to vector<2x32xf32>
    %466 = vector.extract_strided_slice %409 {offsets = [0, 64], sizes = [2, 32], strides = [1, 1]} : vector<2x96xf32> to vector<2x32xf32>
    %467 = vector.extract_strided_slice %455 {offsets = [0, 64], sizes = [2, 32], strides = [1, 1]} : vector<2x96xf32> to vector<2x32xf32>
    %468 = arith.addf %467, %399 : vector<2x32xf32>
    %469 = arith.mulf %464, %468 : vector<2x32xf32>
    %470 = arith.addf %466, %469 : vector<2x32xf32>
    %471 = math.tanh %470 : vector<2x32xf32>
    %cst_115 = arith.constant 1.000000e+00 : f32
    %472 = vector.broadcast %cst_115 : f32 to vector<2x32xf32>
    %473 = arith.subf %472, %465 : vector<2x32xf32>
    %474 = arith.mulf %473, %471 : vector<2x32xf32>
    %475 = arith.mulf %465, %433 : vector<2x32xf32>
    %476 = arith.addf %474, %475 : vector<2x32xf32>
    %477 = tpu.concatenate %476, %454 in 1 : vector<2x32xf32>, vector<2x32xf32> -> vector<2x64xf32>
    %cst_116 = arith.constant dense<0.000000e+00> : vector<2x128xf32>
    %478 = tpu.matmul %477, %394, %cst_116 {dimension_numbers = #tpu.dot_dimension_numbers<[1], [0], [0], [1], [0, 0, 1, 1], [], []>} : vector<2x64xf32>, vector<64x128xf32>, vector<2x128xf32> -> vector<2x128xf32>
    %479 = arith.addf %478, %401 : vector<2x128xf32>
    %480 = vector.extract_strided_slice %479 {offsets = [0, 0], sizes = [2, 64], strides = [1, 1]} : vector<2x128xf32> to vector<2x64xf32>
    %481 = arith.negf %480 : vector<2x64xf32>
    %482 = math.exp %481 : vector<2x64xf32>
    %cst_117 = arith.constant 1.000000e+00 : f32
    %483 = vector.broadcast %cst_117 : f32 to vector<2x64xf32>
    %484 = arith.addf %483, %482 : vector<2x64xf32>
    %485 = arith.divf %483, %484 : vector<2x64xf32>
    %486 = vector.extract_strided_slice %485 {offsets = [0, 0], sizes = [2, 32], strides = [1, 1]} : vector<2x64xf32> to vector<2x32xf32>
    %487 = vector.extract_strided_slice %485 {offsets = [0, 32], sizes = [2, 32], strides = [1, 1]} : vector<2x64xf32> to vector<2x32xf32>
    %488 = vector.extract_strided_slice %479 {offsets = [0, 64], sizes = [2, 32], strides = [1, 1]} : vector<2x128xf32> to vector<2x32xf32>
    %489 = vector.extract_strided_slice %479 {offsets = [0, 96], sizes = [2, 32], strides = [1, 1]} : vector<2x128xf32> to vector<2x32xf32>
    %490 = arith.mulf %486, %489 : vector<2x32xf32>
    %491 = arith.addf %488, %490 : vector<2x32xf32>
    %492 = math.tanh %491 : vector<2x32xf32>
    %cst_118 = arith.constant 1.000000e+00 : f32
    %493 = vector.broadcast %cst_118 : f32 to vector<2x32xf32>
    %494 = arith.subf %493, %487 : vector<2x32xf32>
    %495 = arith.mulf %494, %492 : vector<2x32xf32>
    %496 = arith.mulf %487, %454 : vector<2x32xf32>
    %497 = arith.addf %495, %496 : vector<2x32xf32>
    %c0_119 = arith.constant 0 : index
    %c0_120 = arith.constant 0 : index
    %498 = vector.load %arg13[%c0_119, %c0_120] : memref<32x32xf32, #tpu.memory_space<vmem>>, vector<32x32xf32>
    %cst_121 = arith.constant dense<0.000000e+00> : vector<2x32xf32>
    %499 = tpu.matmul %389, %498, %cst_121 {dimension_numbers = #tpu.dot_dimension_numbers<[1], [0], [0], [1], [0, 0, 1, 1], [], []>} : vector<2x32xf32>, vector<32x32xf32>, vector<2x32xf32> -> vector<2x32xf32>
    %c0_122 = arith.constant 0 : index
    %c0_123 = arith.constant 0 : index
    %500 = vector.load %arg14[%c0_122, %c0_123] : memref<32x32xf32, #tpu.memory_space<vmem>>, vector<32x32xf32>
    %cst_124 = arith.constant dense<0.000000e+00> : vector<2x32xf32>
    %501 = tpu.matmul %497, %500, %cst_124 {dimension_numbers = #tpu.dot_dimension_numbers<[1], [0], [0], [1], [0, 0, 1, 1], [], []>} : vector<2x32xf32>, vector<32x32xf32>, vector<2x32xf32> -> vector<2x32xf32>
    %502 = arith.addf %499, %501 : vector<2x32xf32>
    %c0_125 = arith.constant 0 : index
    %c0_126 = arith.constant 0 : index
    %503 = vector.load %arg15[%c0_125, %c0_126] : memref<1x32xf32, #tpu.memory_space<vmem>>, vector<1x32xf32>
    %504 = vector.broadcast %503 : vector<1x32xf32> to vector<2x32xf32>
    %505 = arith.addf %502, %504 : vector<2x32xf32>
    %cst_127 = arith.constant 0.000000e+00 : f32
    %506 = vector.broadcast %cst_127 : f32 to vector<2x32xf32>
    %507 = arith.maximumf %505, %506 : vector<2x32xf32>
    %c0_128 = arith.constant 0 : index
    %c0_129 = arith.constant 0 : index
    %508 = vector.load %arg16[%c0_128, %c0_129] : memref<32x16xf32, #tpu.memory_space<vmem>>, vector<32x16xf32>
    %cst_130 = arith.constant dense<0.000000e+00> : vector<2x16xf32>
    %509 = tpu.matmul %507, %508, %cst_130 {dimension_numbers = #tpu.dot_dimension_numbers<[1], [0], [0], [1], [0, 0, 1, 1], [], []>} : vector<2x32xf32>, vector<32x16xf32>, vector<2x16xf32> -> vector<2x16xf32>
    %c0_131 = arith.constant 0 : index
    %c0_132 = arith.constant 0 : index
    %510 = vector.load %arg17[%c0_131, %c0_132] : memref<1x16xf32, #tpu.memory_space<vmem>>, vector<1x16xf32>
    %511 = vector.broadcast %510 : vector<1x16xf32> to vector<2x16xf32>
    %512 = arith.addf %509, %511 : vector<2x16xf32>
    %cst_133 = arith.constant 0.000000e+00 : f32
    %513 = vector.broadcast %cst_133 : f32 to vector<2x16xf32>
    %514 = arith.maximumf %512, %513 : vector<2x16xf32>
    %c0_134 = arith.constant 0 : index
    %c0_135 = arith.constant 0 : index
    %515 = vector.load %arg18[%c0_134, %c0_135] : memref<16x1xf32, #tpu.memory_space<vmem>>, vector<16x1xf32>
    %cst_136 = arith.constant dense<0.000000e+00> : vector<2x1xf32>
    %516 = tpu.matmul %514, %515, %cst_136 {dimension_numbers = #tpu.dot_dimension_numbers<[1], [0], [0], [1], [0, 0, 1, 1], [], []>} : vector<2x16xf32>, vector<16x1xf32>, vector<2x1xf32> -> vector<2x1xf32>
    %c0_137 = arith.constant 0 : index
    %c0_138 = arith.constant 0 : index
    %517 = vector.load %arg19[%c0_137, %c0_138] : memref<1x1xf32, #tpu.memory_space<vmem>>, vector<1x1xf32>
    %518 = vector.broadcast %517 : vector<1x1xf32> to vector<2x1xf32>
    %519 = arith.addf %516, %518 : vector<2x1xf32>
    %c0_139 = arith.constant 0 : index
    %c0_140 = arith.constant 0 : index
    %520 = vector.load %arg20[%c0_139, %c0_140] : memref<2x1xf32, #tpu.memory_space<vmem>>, vector<2x1xf32>
    tpu.vector_store %arg20[%c0_139, %c0_140], %519 {strides = array<i32>} : memref<2x1xf32, #tpu.memory_space<vmem>>, vector<2x1xf32>,
    return
  }
}

</mosaic_0001>

<llo_original>
// kernel: gru_model_forward.1
$region0: #{gru_model_forward.1}
  #allocation0 [shape = 'u32[]', space=smem, size = 0x4, offset = 0x4, fixed_abs, tag = 'smem constant byte address 0x4 - core index']
  #allocation1 [shape = 'u32[144,128]{1,0:T(1,128)}', space=vmem, size = 0x12000, scoped, tag = 'internal scratch']
  #allocation2 [shape = 'f32[1,1]{1,0:T(1,128)S(1)}', space=vmem, size = 0x200, scoped, tag = 'scoped memory for gru_model_forward.1']
  %s0 = inlined_call_operand.vmem [shape: f32[2,8,4], index: 0, kind: input, shape index: {}]
  %s1 = inlined_call_operand.hbm [shape: f32[4,96], index: 1, kind: input, shape index: {}]
  %s2 = inlined_call_operand.hbm [shape: f32[32,96], index: 2, kind: input, shape index: {}]
  %s3 = inlined_call_operand.vmem [shape: f32[1,96], index: 3, kind: input, shape index: {}]
  %s4 = inlined_call_operand.hbm [shape: f32[1,32], index: 4, kind: input, shape index: {}]
  %s5 = inlined_call_operand.vmem [shape: f32[64,128], index: 5, kind: input, shape index: {}]
  %s6 = inlined_call_operand.hbm [shape: f32[1,128], index: 6, kind: input, shape index: {}]
  %s7 = inlined_call_operand.hbm [shape: f32[4,96], index: 7, kind: input, shape index: {}]
  %s8 = inlined_call_operand.hbm [shape: f32[32,96], index: 8, kind: input, shape index: {}]
  %s9 = inlined_call_operand.hbm [shape: f32[1,96], index: 9, kind: input, shape index: {}]
  %s10 = inlined_call_operand.hbm [shape: f32[1,32], index: 10, kind: input, shape index: {}]
  %s11 = inlined_call_operand.vmem [shape: f32[64,128], index: 11, kind: input, shape index: {}]
  %s12 = inlined_call_operand.hbm [shape: f32[1,128], index: 12, kind: input, shape index: {}]
  %s13 = inlined_call_operand.hbm [shape: f32[32,32], index: 13, kind: input, shape index: {}]
  %s14 = inlined_call_operand.hbm [shape: f32[32,32], index: 14, kind: input, shape index: {}]
  %s15 = inlined_call_operand.hbm [shape: f32[1,32], index: 15, kind: input, shape index: {}]
  %s16 = inlined_call_operand.vmem [shape: f32[32,16], index: 16, kind: input, shape index: {}]
  %s17 = inlined_call_operand.hbm [shape: f32[1,16], index: 17, kind: input, shape index: {}]
  %s18 = inlined_call_operand.vmem [shape: f32[16,1], index: 18, kind: input, shape index: {}]
  %s19 = inlined_call_operand.<no memory space> [shape: f32[1,1], index: 19, kind: input, shape index: {}]
  %s20 = inlined_call_operand.vmem [shape: f32[2,1], index: 20, kind: output, shape index: {}]
  %s21 = sld [smem:[#allocation0]]
  $region142: #{gru_model_forward.1} parent=0
    _
  %s23 = ssub.s32 1, %s21
  %s24 = scalar_select 0, %s23, %s21
  %v25 = vstv %s19
  %26 = vst [vmem:[#allocation2] sm:$0x1] %v25
  $region1: #{gru_model_forward.1} parent=0
    #allocation3 [shape = 'u8[2048]{0}', space=vmem, size = 0x800, scoped, tag = 'input window, operand 1, single buffered']
    #allocation4 [shape = 's32[1]{0}', space=sflag, size = 0x4, scoped, tag = 'scoped memory for gru_model_forward.1']
    #allocation5 [shape = 'u8[16384]{0}', space=vmem, size = 0x4000, scoped, tag = 'input window, operand 2, single buffered']
    #allocation6 [shape = 's32[1]{0}', space=sflag, size = 0x4, scoped, tag = 'scoped memory for gru_model_forward.1']
    #allocation7 [shape = 'u8[512]{0}', space=vmem, size = 0x400, scoped, tag = 'input window, operand 4, single buffered']
    #allocation8 [shape = 'u8[512]{0}', space=vmem, size = 0x400, scoped, tag = 'input window, operand 6, single buffered']
    #allocation9 [shape = 's32[1]{0}', space=sflag, size = 0x4, scoped, tag = 'scoped memory for gru_model_forward.1']
    #allocation10 [shape = 'u8[2048]{0}', space=vmem, size = 0x800, scoped, tag = 'input window, operand 7, single buffered']
    #allocation11 [shape = 'u8[16384]{0}', space=vmem, size = 0x4000, scoped, tag = 'input window, operand 8, single buffered']
    #allocation12 [shape = 's32[1]{0}', space=sflag, size = 0x4, scoped, tag = 'scoped memory for gru_model_forward.1']
    #allocation13 [shape = 'u8[512]{0}', space=vmem, size = 0x400, scoped, tag = 'input window, operand 9, single buffered']
    #allocation14 [shape = 'u8[512]{0}', space=vmem, size = 0x400, scoped, tag = 'input window, operand 10, single buffered']
    #allocation15 [shape = 's32[1]{0}', space=sflag, size = 0x4, scoped, tag = 'scoped memory for gru_model_forward.1']
    #allocation16 [shape = 'u8[512]{0}', space=vmem, size = 0x400, scoped, tag = 'input window, operand 12, single buffered']
    #allocation17 [shape = 'u8[16384]{0}', space=vmem, size = 0x4000, scoped, tag = 'input window, operand 13, single buffered']
    #allocation18 [shape = 's32[1]{0}', space=sflag, size = 0x4, scoped, tag = 'scoped memory for gru_model_forward.1']
    #allocation19 [shape = 'u8[16384]{0}', space=vmem, size = 0x4000, scoped, tag = 'input window, operand 14, single buffered']
    #allocation20 [shape = 'u8[512]{0}', space=vmem, size = 0x400, scoped, tag = 'input window, operand 15, single buffered']
    #allocation21 [shape = 's32[1]{0}', space=sflag, size = 0x4, scoped, tag = 'scoped memory for gru_model_forward.1']
    #allocation22 [shape = 'u8[512]{0}', space=vmem, size = 0x400, scoped, tag = 'input window, operand 17, single buffered']
    %27 = vsyncpa [#allocation4], 0
    %28 = vsyncpa [#allocation6], 0
    %29 = vsyncpa [#allocation9], 0
    %30 = vsyncpa [#allocation12], 0
    %31 = vsyncpa [#allocation15], 0
    %32 = vsyncpa [#allocation18], 0
    %33 = vsyncpa [#allocation21], 0
    // Predicated region
    $region2: #{gru_model_forward.1} parent=1 // pred_check
      _
    $region3: #{gru_model_forward.1} parent=1 // pred_check_branch
      %35 = sbr.rel (0) target = $region5
    $region4: #{gru_model_forward.1} parent=1 // pred_region
      _
    $region5: #{gru_model_forward.1} parent=1 // pred_fallthru
      _
    // Predicated region
    $region6: #{gru_model_forward.1} parent=1 // pred_check
      _
    $region7: #{gru_model_forward.1} parent=1 // pred_check_branch
      %37 = sbr.rel (0) target = $region9
    $region8: #{gru_model_forward.1} parent=1 // pred_region
      %s39 = ssub.s32 64, 64
      %40 = vsyncadd [#allocation4], %s39
      %s42 = sshll.u32 [#allocation3], 4
      %s43 = int_to_ptr.vmem [resolvable:$true] %s42
      %45 = dma.hbm_to_vmem [thread:$0]  %s1, 64, %s43, [#allocation4]
    $region9: #{gru_model_forward.1} parent=1 // pred_fallthru
      _
    // Predicated region
    $region10: #{gru_model_forward.1} parent=1 // pred_check
      _
    $region11: #{gru_model_forward.1} parent=1 // pred_check_branch
      %47 = sbr.rel (0) target = $region13
    $region12: #{gru_model_forward.1} parent=1 // pred_region
      %s49 = ssub.s32 512, 512
      %50 = vsyncadd [#allocation6], %s49
      %s51 = sshll.u32 [#allocation5], 4
      %s52 = int_to_ptr.vmem [resolvable:$true] %s51
      %57 = dma.hbm_to_vmem [thread:$0]  %s2, 512, %s52, [#allocation6], 128, 128, 8
    $region13: #{gru_model_forward.1} parent=1 // pred_fallthru
      _
    // Predicated region
    $region14: #{gru_model_forward.1} parent=1 // pred_check
      _
    $region15: #{gru_model_forward.1} parent=1 // pred_check_branch
      %59 = sbr.rel (0) target = $region17
    $region16: #{gru_model_forward.1} parent=1 // pred_region
      _
    $region17: #{gru_model_forward.1} parent=1 // pred_fallthru
      _
    // Predicated region
    $region18: #{gru_model_forward.1} parent=1 // pred_check
      _
    $region19: #{gru_model_forward.1} parent=1 // pred_check_branch
      %61 = sbr.rel (0) target = $region21
    $region20: #{gru_model_forward.1} parent=1 // pred_region
      %s63 = ssub.s32 16, 16
      %64 = vsyncadd [#allocation6], %s63
      %s66 = sshll.u32 [#allocation7], 4
      %s67 = int_to_ptr.vmem [resolvable:$true] %s66
      %69 = dma.hbm_to_vmem [thread:$0]  %s4, 16, %s67, [#allocation6]
    $region21: #{gru_model_forward.1} parent=1 // pred_fallthru
      _
    // Predicated region
    $region22: #{gru_model_forward.1} parent=1 // pred_check
      _
    $region23: #{gru_model_forward.1} parent=1 // pred_check_branch
      %71 = sbr.rel (0) target = $region25
    $region24: #{gru_model_forward.1} parent=1 // pred_region
      _
    $region25: #{gru_model_forward.1} parent=1 // pred_fallthru
      _
    // Predicated region
    $region26: #{gru_model_forward.1} parent=1 // pred_check
      _
    $region27: #{gru_model_forward.1} parent=1 // pred_check_branch
      %73 = sbr.rel (0) target = $region29
    $region28: #{gru_model_forward.1} parent=1 // pred_region
      %s75 = ssub.s32 16, 16
      %76 = vsyncadd [#allocation9], %s75
      %s78 = sshll.u32 [#allocation8], 4
      %s79 = int_to_ptr.vmem [resolvable:$true] %s78
      %81 = dma.hbm_to_vmem [thread:$0]  %s6, 16, %s79, [#allocation9]
    $region29: #{gru_model_forward.1} parent=1 // pred_fallthru
      _
    // Predicated region
    $region30: #{gru_model_forward.1} parent=1 // pred_check
      _
    $region31: #{gru_model_forward.1} parent=1 // pred_check_branch
      %83 = sbr.rel (0) target = $region33
    $region32: #{gru_model_forward.1} parent=1 // pred_region
      %s85 = ssub.s32 64, 64
      %86 = vsyncadd [#allocation9], %s85
      %s88 = sshll.u32 [#allocation10], 4
      %s89 = int_to_ptr.vmem [resolvable:$true] %s88
      %91 = dma.hbm_to_vmem [thread:$0]  %s7, 64, %s89, [#allocation9]
    $region33: #{gru_model_forward.1} parent=1 // pred_fallthru
      _
    // Predicated region
    $region34: #{gru_model_forward.1} parent=1 // pred_check
      _
    $region35: #{gru_model_forward.1} parent=1 // pred_check_branch
      %93 = sbr.rel (0) target = $region37
    $region36: #{gru_model_forward.1} parent=1 // pred_region
      %s95 = ssub.s32 512, 512
      %96 = vsyncadd [#allocation12], %s95
      %s97 = sshll.u32 [#allocation11], 4
      %s98 = int_to_ptr.vmem [resolvable:$true] %s97
      %103 = dma.hbm_to_vmem [thread:$0]  %s8, 512, %s98, [#allocation12], 128, 128, 8
    $region37: #{gru_model_forward.1} parent=1 // pred_fallthru
      _
    // Predicated region
    $region38: #{gru_model_forward.1} parent=1 // pred_check
      _
    $region39: #{gru_model_forward.1} parent=1 // pred_check_branch
      %105 = sbr.rel (0) target = $region41
    $region40: #{gru_model_forward.1} parent=1 // pred_region
      %s107 = ssub.s32 16, 16
      %108 = vsyncadd [#allocation12], %s107
      %s110 = sshll.u32 [#allocation13], 4
      %s111 = int_to_ptr.vmem [resolvable:$true] %s110
      %113 = dma.hbm_to_vmem [thread:$0]  %s9, 16, %s111, [#allocation12]
    $region41: #{gru_model_forward.1} parent=1 // pred_fallthru
      _
    // Predicated region
    $region42: #{gru_model_forward.1} parent=1 // pred_check
      _
    $region43: #{gru_model_forward.1} parent=1 // pred_check_branch
      %115 = sbr.rel (0) target = $region45
    $region44: #{gru_model_forward.1} parent=1 // pred_region
      %s117 = ssub.s32 16, 16
      %118 = vsyncadd [#allocation15], %s117
      %s120 = sshll.u32 [#allocation14], 4
      %s121 = int_to_ptr.vmem [resolvable:$true] %s120
      %123 = dma.hbm_to_vmem [thread:$0]  %s10, 16, %s121, [#allocation15]
    $region45: #{gru_model_forward.1} parent=1 // pred_fallthru
      _
    // Predicated region
    $region46: #{gru_model_forward.1} parent=1 // pred_check
      _
    $region47: #{gru_model_forward.1} parent=1 // pred_check_branch
      %125 = sbr.rel (0) target = $region49
    $region48: #{gru_model_forward.1} parent=1 // pred_region
      _
    $region49: #{gru_model_forward.1} parent=1 // pred_fallthru
      _
    // Predicated region
    $region50: #{gru_model_forward.1} parent=1 // pred_check
      _
    $region51: #{gru_model_forward.1} parent=1 // pred_check_branch
      %127 = sbr.rel (0) target = $region53
    $region52: #{gru_model_forward.1} parent=1 // pred_region
      %s129 = ssub.s32 16, 16
      %130 = vsyncadd [#allocation15], %s129
      %s132 = sshll.u32 [#allocation16], 4
      %s133 = int_to_ptr.vmem [resolvable:$true] %s132
      %135 = dma.hbm_to_vmem [thread:$0]  %s12, 16, %s133, [#allocation15]
    $region53: #{gru_model_forward.1} parent=1 // pred_fallthru
      _
    // Predicated region
    $region54: #{gru_model_forward.1} parent=1 // pred_check
      _
    $region55: #{gru_model_forward.1} parent=1 // pred_check_branch
      %137 = sbr.rel (0) target = $region57
    $region56: #{gru_model_forward.1} parent=1 // pred_region
      %s139 = ssub.s32 512, 512
      %140 = vsyncadd [#allocation18], %s139
      %s141 = sshll.u32 [#allocation17], 4
      %s142 = int_to_ptr.vmem [resolvable:$true] %s141
      %147 = dma.hbm_to_vmem [thread:$0]  %s13, 512, %s142, [#allocation18], 128, 128, 8
    $region57: #{gru_model_forward.1} parent=1 // pred_fallthru
      _
    // Predicated region
    $region58: #{gru_model_forward.1} parent=1 // pred_check
      _
    $region59: #{gru_model_forward.1} parent=1 // pred_check_branch
      %149 = sbr.rel (0) target = $region61
    $region60: #{gru_model_forward.1} parent=1 // pred_region
      %s151 = ssub.s32 512, 512
      %152 = vsyncadd [#allocation18], %s151
      %s153 = sshll.u32 [#allocation19], 4
      %s154 = int_to_ptr.vmem [resolvable:$true] %s153
      %159 = dma.hbm_to_vmem [thread:$0]  %s14, 512, %s154, [#allocation18], 128, 128, 8
    $region61: #{gru_model_forward.1} parent=1 // pred_fallthru
      _
    // Predicated region
    $region62: #{gru_model_forward.1} parent=1 // pred_check
      _
    $region63: #{gru_model_forward.1} parent=1 // pred_check_branch
      %161 = sbr.rel (0) target = $region65
    $region64: #{gru_model_forward.1} parent=1 // pred_region
      %s163 = ssub.s32 16, 16
      %164 = vsyncadd [#allocation21], %s163
      %s166 = sshll.u32 [#allocation20], 4
      %s167 = int_to_ptr.vmem [resolvable:$true] %s166
      %169 = dma.hbm_to_vmem [thread:$0]  %s15, 16, %s167, [#allocation21]
    $region65: #{gru_model_forward.1} parent=1 // pred_fallthru
      _
    // Predicated region
    $region66: #{gru_model_forward.1} parent=1 // pred_check
      _
    $region67: #{gru_model_forward.1} parent=1 // pred_check_branch
      %171 = sbr.rel (0) target = $region69
    $region68: #{gru_model_forward.1} parent=1 // pred_region
      _
    $region69: #{gru_model_forward.1} parent=1 // pred_fallthru
      _
    // Predicated region
    $region70: #{gru_model_forward.1} parent=1 // pred_check
      _
    $region71: #{gru_model_forward.1} parent=1 // pred_check_branch
      %173 = sbr.rel (0) target = $region73
    $region72: #{gru_model_forward.1} parent=1 // pred_region
      %s175 = ssub.s32 16, 16
      %176 = vsyncadd [#allocation21], %s175
      %s178 = sshll.u32 [#allocation22], 4
      %s179 = int_to_ptr.vmem [resolvable:$true] %s178
      %181 = dma.hbm_to_vmem [thread:$0]  %s17, 16, %s179, [#allocation21]
    $region73: #{gru_model_forward.1} parent=1 // pred_fallthru
      _
    // Predicated region
    $region74: #{gru_model_forward.1} parent=1 // pred_check
      _
    $region75: #{gru_model_forward.1} parent=1 // pred_check_branch
      %183 = sbr.rel (0) target = $region77
    $region76: #{gru_model_forward.1} parent=1 // pred_region
      _
    $region77: #{gru_model_forward.1} parent=1 // pred_fallthru
      _
    // Predicated region
    $region78: #{gru_model_forward.1} parent=1 // pred_check
      _
    $region79: #{gru_model_forward.1} parent=1 // pred_check_branch
      %185 = sbr.rel (0) target = $region81
    $region80: #{gru_model_forward.1} parent=1 // pred_region
      _
    $region81: #{gru_model_forward.1} parent=1 // pred_fallthru
      _
    // Predicated region
    $region82: #{gru_model_forward.1} parent=1 // pred_check
      _
    $region83: #{gru_model_forward.1} parent=1 // pred_check_branch
      %187 = sbr.rel (0) target = $region85
    $region84: #{gru_model_forward.1} parent=1 // pred_region
      %188 = dma.done [#allocation4], 64
    $region85: #{gru_model_forward.1} parent=1 // pred_fallthru
      _
    // Predicated region
    $region86: #{gru_model_forward.1} parent=1 // pred_check
      _
    $region87: #{gru_model_forward.1} parent=1 // pred_check_branch
      %190 = sbr.rel (0) target = $region89
    $region88: #{gru_model_forward.1} parent=1 // pred_region
      %191 = dma.done [#allocation6], 512
    $region89: #{gru_model_forward.1} parent=1 // pred_fallthru
      _
    // Predicated region
    $region90: #{gru_model_forward.1} parent=1 // pred_check
      _
    $region91: #{gru_model_forward.1} parent=1 // pred_check_branch
      %193 = sbr.rel (0) target = $region93
    $region92: #{gru_model_forward.1} parent=1 // pred_region
      %194 = dma.done [#allocation6], 16
    $region93: #{gru_model_forward.1} parent=1 // pred_fallthru
      _
    // Predicated region
    $region94: #{gru_model_forward.1} parent=1 // pred_check
      _
    $region95: #{gru_model_forward.1} parent=1 // pred_check_branch
      %196 = sbr.rel (0) target = $region97
    $region96: #{gru_model_forward.1} parent=1 // pred_region
      %197 = dma.done [#allocation9], 16
    $region97: #{gru_model_forward.1} parent=1 // pred_fallthru
      _
    // Predicated region
    $region98: #{gru_model_forward.1} parent=1 // pred_check
      _
    $region99: #{gru_model_forward.1} parent=1 // pred_check_branch
      %199 = sbr.rel (0) target = $region101
    $region100: #{gru_model_forward.1} parent=1 // pred_region
      %200 = dma.done [#allocation9], 64
    $region101: #{gru_model_forward.1} parent=1 // pred_fallthru
      _
    // Predicated region
    $region102: #{gru_model_forward.1} parent=1 // pred_check
      _
    $region103: #{gru_model_forward.1} parent=1 // pred_check_branch
      %202 = sbr.rel (0) target = $region105
    $region104: #{gru_model_forward.1} parent=1 // pred_region
      %203 = dma.done [#allocation12], 512
    $region105: #{gru_model_forward.1} parent=1 // pred_fallthru
      _
    // Predicated region
    $region106: #{gru_model_forward.1} parent=1 // pred_check
      _
    $region107: #{gru_model_forward.1} parent=1 // pred_check_branch
      %205 = sbr.rel (0) target = $region109
    $region108: #{gru_model_forward.1} parent=1 // pred_region
      %206 = dma.done [#allocation12], 16
    $region109: #{gru_model_forward.1} parent=1 // pred_fallthru
      _
    // Predicated region
    $region110: #{gru_model_forward.1} parent=1 // pred_check
      _
    $region111: #{gru_model_forward.1} parent=1 // pred_check_branch
      %208 = sbr.rel (0) target = $region113
    $region112: #{gru_model_forward.1} parent=1 // pred_region
      %209 = dma.done [#allocation15], 16
    $region113: #{gru_model_forward.1} parent=1 // pred_fallthru
      _
    // Predicated region
    $region114: #{gru_model_forward.1} parent=1 // pred_check
      _
    $region115: #{gru_model_forward.1} parent=1 // pred_check_branch
      %211 = sbr.rel (0) target = $region117
    $region116: #{gru_model_forward.1} parent=1 // pred_region
      %212 = dma.done [#allocation15], 16
    $region117: #{gru_model_forward.1} parent=1 // pred_fallthru
      _
    // Predicated region
    $region118: #{gru_model_forward.1} parent=1 // pred_check
      _
    $region119: #{gru_model_forward.1} parent=1 // pred_check_branch
      %214 = sbr.rel (0) target = $region121
    $region120: #{gru_model_forward.1} parent=1 // pred_region
      %215 = dma.done [#allocation18], 512
    $region121: #{gru_model_forward.1} parent=1 // pred_fallthru
      _
    // Predicated region
    $region122: #{gru_model_forward.1} parent=1 // pred_check
      _
    $region123: #{gru_model_forward.1} parent=1 // pred_check_branch
      %217 = sbr.rel (0) target = $region125
    $region124: #{gru_model_forward.1} parent=1 // pred_region
      %218 = dma.done [#allocation18], 512
    $region125: #{gru_model_forward.1} parent=1 // pred_fallthru
      _
    // Predicated region
    $region126: #{gru_model_forward.1} parent=1 // pred_check
      _
    $region127: #{gru_model_forward.1} parent=1 // pred_check_branch
      %220 = sbr.rel (0) target = $region129
    $region128: #{gru_model_forward.1} parent=1 // pred_region
      %221 = dma.done [#allocation21], 16
    $region129: #{gru_model_forward.1} parent=1 // pred_fallthru
      _
    // Predicated region
    $region130: #{gru_model_forward.1} parent=1 // pred_check
      _
    $region131: #{gru_model_forward.1} parent=1 // pred_check_branch
      %223 = sbr.rel (0) target = $region133
    $region132: #{gru_model_forward.1} parent=1 // pred_region
      %224 = dma.done [#allocation21], 16
    $region133: #{gru_model_forward.1} parent=1 // pred_fallthru
      _
    %v225 = vld [vmem:[#allocation3] sm:$0xf]
    %v226 = vld [vmem:[#allocation5] sm:$0xff]
    %v227 = vld [vmem:[#allocation5 + $0x8] sm:$0xff]
    %v228 = vld [vmem:[#allocation5 + $0x10] sm:$0xff]
    %v229 = vld [vmem:[#allocation5 + $0x18] sm:$0xff]
    %v230 = vld [vmem:[%s3] sm:$0x1]
    %v231 = vld [vmem:[#allocation7] sm:$0x1]
    %v232 = vld [vmem:[%s5] sm:$0xff]
    %v233 = vld [vmem:[%s5 + $0x8] sm:$0xff]
    %v234 = vld [vmem:[%s5 + $0x10] sm:$0xff]
    %v235 = vld [vmem:[%s5 + $0x18] sm:$0xff]
    %v236 = vld [vmem:[%s5 + $0x20] sm:$0xff]
    %v237 = vld [vmem:[%s5 + $0x28] sm:$0xff]
    %v238 = vld [vmem:[%s5 + $0x30] sm:$0xff]
    %v239 = vld [vmem:[%s5 + $0x38] sm:$0xff]
    %v240 = vld [vmem:[#allocation8] sm:$0x1]
    %v242 = vlaneseq
    %v243 = vshrl.u32 %v242, 7
    %v244 = vsub.s32 0, %v243
    %v245 = vrot.slane %v230, %v244
    %v248 = vlaneseq
    %v249 = vshrl.u32 %v248, 7
    %v250 = vsub.s32 0, %v249
    %v251 = vrot.slane %v231, %v250
    %v253 = vlaneseq
    %v254 = vshrl.u32 %v253, 7
    %v255 = vsub.s32 0, %v254
    %v256 = vrot.slane %v240, %v255
    %v258 = vld [vmem:[%s0] sm:$0x1]
    %v259 = vld [vmem:[%s0 + $0x8] sm:$0x1]
    %v262 = vrot.slane %v259, 7
    %vm263 = vcmask 1041409
    %v264 = vsel %vm263, %v262, %v258
    %vm265 = vcmask 31744
    %v266 = vsel %vm265, %v264, 0
    %vm268 = vcmask 1043456
    %v270 = vsel %vm268, %v225, 0
    %272 = vmatprep.subr.mxu0 0.0
    %273 = vmatpush1.msra.mxu0 %v270
    %274 = vmatprep.subr.mxu0 0.0
    %275 = vmatpush1.msra.mxu0 0.0
    %276 = vmatprep.subr.mxu0 0.0
    %277 = vmatpush1.msra.mxu0 0.0
    %278 = vmatprep.subr.mxu0 0.0
    %279 = vmatpush1.msra.mxu0 0.0
    %280 = vmatprep.subr.mxu0 0.0
    %281 = vmatpush1.msra.mxu0 0.0
    %282 = vmatprep.subr.mxu0 0.0
    %283 = vmatpush1.msra.mxu0 0.0
    %284 = vmatprep.subr.mxu0 0.0
    %285 = vmatpush1.msra.mxu0 0.0
    %286 = vmatprep.subr.mxu0 0.0
    %287 = vmatpush1.msra.mxu0 0.0
    %288 = vmatprep.subr.mxu0 0.0
    %289 = vmatpush1.msra.mxu0 0.0
    %290 = vmatprep.subr.mxu0 0.0
    %291 = vmatpush1.msra.mxu0 0.0
    %292 = vmatprep.subr.mxu0 0.0
    %293 = vmatpush1.msra.mxu0 0.0
    %294 = vmatprep.subr.mxu0 0.0
    %295 = vmatpush1.msra.mxu0 0.0
    %296 = vmatprep.subr.mxu0 0.0
    %297 = vmatpush1.msra.mxu0 0.0
    %298 = vmatprep.subr.mxu0 0.0
    %299 = vmatpush1.msra.mxu0 0.0
    %300 = vmatprep.subr.mxu0 0.0
    %301 = vmatpush1.msra.mxu0 0.0
    %302 = vmatprep.subr.mxu0 0.0
    %303 = vmatpush1.msra.mxu0 0.0
    %304 = vmatprep.subr.mxu0 0.0
    %305 = vmatpush1.msra.mxu0 0.0
    %306 = vmatprep.subr.mxu0 0.0
    %307 = vmatpush1.msra.mxu0 0.0
    %308 = vmatprep.subr.mxu0 0.0
    %309 = vmatpush1.msra.mxu0 0.0
    %310 = vmatprep.subr.mxu0 0.0
    %311 = vmatpush1.msra.mxu0 0.0
    %312 = vmatprep.subr.mxu0 0.0
    %313 = vmatpush1.msra.mxu0 0.0
    %314 = vmatprep.subr.mxu0 0.0
    %315 = vmatpush1.msra.mxu0 0.0
    %316 = vmatprep.subr.mxu0 0.0
    %317 = vmatpush1.msra.mxu0 0.0
    %318 = vmatprep.subr.mxu0 0.0
    %319 = vmatpush1.msra.mxu0 0.0
    %320 = vmatprep.subr.mxu0 0.0
    %321 = vmatpush1.msra.mxu0 0.0
    %322 = vmatprep.subr.mxu0 0.0
    %323 = vmatpush1.msra.mxu0 0.0
    %324 = vmatprep.subr.mxu0 0.0
    %325 = vmatpush1.msra.mxu0 0.0
    %326 = vmatprep.subr.mxu0 0.0
    %327 = vmatpush1.msra.mxu0 0.0
    %328 = vmatprep.subr.mxu0 0.0
    %329 = vmatpush1.msra.mxu0 0.0
    %330 = vmatprep.subr.mxu0 0.0
    %331 = vmatpush1.msra.mxu0 0.0
    %332 = vmatprep.subr.mxu0 0.0
    %333 = vmatpush1.msra.mxu0 0.0
    %334 = vmatprep.subr.mxu0 0.0
    %335 = vmatpush1.msra.mxu0 0.0
    %336 = vmatprep.mubr.f32.mxu0 0.0
    %337 = vmatmul.mubr.f32.gmra.mrb[0].mxu0 %v266
    %v338 = vpop.f32.mrb[0].mxu0
    %v339 = vadd.f32 %v245, %v338
    %v340 = vpop.f32.mrb[0].mxu0
    %341 = vdwg.mxu0
    %v342 = vld [vmem:[%s0 + $0x1] sm:$0x1]
    %v343 = vld [vmem:[%s0 + $0x9] sm:$0x1]
    %v346 = vrot.slane %v343, 7
    %v347 = vsel %vm263, %v346, %v342
    %v348 = vsel %vm265, %v347, 0
    %350 = vmatprep.subr.mxu0 0.0
    %351 = vmatpush1.msra.mxu0 %v270
    %352 = vmatprep.subr.mxu0 0.0
    %353 = vmatpush1.msra.mxu0 0.0
    %354 = vmatprep.subr.mxu0 0.0
    %355 = vmatpush1.msra.mxu0 0.0
    %356 = vmatprep.subr.mxu0 0.0
    %357 = vmatpush1.msra.mxu0 0.0
    %358 = vmatprep.subr.mxu0 0.0
    %359 = vmatpush1.msra.mxu0 0.0
    %360 = vmatprep.subr.mxu0 0.0
    %361 = vmatpush1.msra.mxu0 0.0
    %362 = vmatprep.subr.mxu0 0.0
    %363 = vmatpush1.msra.mxu0 0.0
    %364 = vmatprep.subr.mxu0 0.0
    %365 = vmatpush1.msra.mxu0 0.0
    %366 = vmatprep.subr.mxu0 0.0
    %367 = vmatpush1.msra.mxu0 0.0
    %368 = vmatprep.subr.mxu0 0.0
    %369 = vmatpush1.msra.mxu0 0.0
    %370 = vmatprep.subr.mxu0 0.0
    %371 = vmatpush1.msra.mxu0 0.0
    %372 = vmatprep.subr.mxu0 0.0
    %373 = vmatpush1.msra.mxu0 0.0
    %374 = vmatprep.subr.mxu0 0.0
    %375 = vmatpush1.msra.mxu0 0.0
    %376 = vmatprep.subr.mxu0 0.0
    %377 = vmatpush1.msra.mxu0 0.0
    %378 = vmatprep.subr.mxu0 0.0
    %379 = vmatpush1.msra.mxu0 0.0
    %380 = vmatprep.subr.mxu0 0.0
    %381 = vmatpush1.msra.mxu0 0.0
    %382 = vmatprep.subr.mxu0 0.0
    %383 = vmatpush1.msra.mxu0 0.0
    %384 = vmatprep.subr.mxu0 0.0
    %385 = vmatpush1.msra.mxu0 0.0
    %386 = vmatprep.subr.mxu0 0.0
    %387 = vmatpush1.msra.mxu0 0.0
    %388 = vmatprep.subr.mxu0 0.0
    %389 = vmatpush1.msra.mxu0 0.0
    %390 = vmatprep.subr.mxu0 0.0
    %391 = vmatpush1.msra.mxu0 0.0
    %392 = vmatprep.subr.mxu0 0.0
    %393 = vmatpush1.msra.mxu0 0.0
    %394 = vmatprep.subr.mxu0 0.0
    %395 = vmatpush1.msra.mxu0 0.0
    %396 = vmatprep.subr.mxu0 0.0
    %397 = vmatpush1.msra.mxu0 0.0
    %398 = vmatprep.subr.mxu0 0.0
    %399 = vmatpush1.msra.mxu0 0.0
    %400 = vmatprep.subr.mxu0 0.0
    %401 = vmatpush1.msra.mxu0 0.0
    %402 = vmatprep.subr.mxu0 0.0
    %403 = vmatpush1.msra.mxu0 0.0
    %404 = vmatprep.subr.mxu0 0.0
    %405 = vmatpush1.msra.mxu0 0.0
    %406 = vmatprep.subr.mxu0 0.0
    %407 = vmatpush1.msra.mxu0 0.0
    %408 = vmatprep.subr.mxu0 0.0
    %409 = vmatpush1.msra.mxu0 0.0
    %410 = vmatprep.subr.mxu0 0.0
    %411 = vmatpush1.msra.mxu0 0.0
    %412 = vmatprep.subr.mxu0 0.0
    %413 = vmatpush1.msra.mxu0 0.0
    %414 = vmatprep.mubr.f32.mxu0 0.0
    %415 = vmatmul.mubr.f32.gmra.mrb[0].mxu0 %v348
    %v416 = vpop.f32.mrb[0].mxu0
    %v417 = vadd.f32 %v245, %v416
    %v418 = vpop.f32.mrb[0].mxu0
    %419 = vdwg.mxu0
    %v420 = vld [vmem:[%s0 + $0x2] sm:$0x1]
    %v421 = vld [vmem:[%s0 + $0xa] sm:$0x1]
    %v424 = vrot.slane %v421, 7
    %v425 = vsel %vm263, %v424, %v420
    %v426 = vsel %vm265, %v425, 0
    %428 = vmatprep.subr.mxu0 0.0
    %429 = vmatpush1.msra.mxu0 %v270
    %430 = vmatprep.subr.mxu0 0.0
    %431 = vmatpush1.msra.mxu0 0.0
    %432 = vmatprep.subr.mxu0 0.0
    %433 = vmatpush1.msra.mxu0 0.0
    %434 = vmatprep.subr.mxu0 0.0
    %435 = vmatpush1.msra.mxu0 0.0
    %436 = vmatprep.subr.mxu0 0.0
    %437 = vmatpush1.msra.mxu0 0.0
    %438 = vmatprep.subr.mxu0 0.0
    %439 = vmatpush1.msra.mxu0 0.0
    %440 = vmatprep.subr.mxu0 0.0
    %441 = vmatpush1.msra.mxu0 0.0
    %442 = vmatprep.subr.mxu0 0.0
    %443 = vmatpush1.msra.mxu0 0.0
    %444 = vmatprep.subr.mxu0 0.0
    %445 = vmatpush1.msra.mxu0 0.0
    %446 = vmatprep.subr.mxu0 0.0
    %447 = vmatpush1.msra.mxu0 0.0
    %448 = vmatprep.subr.mxu0 0.0
    %449 = vmatpush1.msra.mxu0 0.0
    %450 = vmatprep.subr.mxu0 0.0
    %451 = vmatpush1.msra.mxu0 0.0
    %452 = vmatprep.subr.mxu0 0.0
    %453 = vmatpush1.msra.mxu0 0.0
    %454 = vmatprep.subr.mxu0 0.0
    %455 = vmatpush1.msra.mxu0 0.0
    %456 = vmatprep.subr.mxu0 0.0
    %457 = vmatpush1.msra.mxu0 0.0
    %458 = vmatprep.subr.mxu0 0.0
    %459 = vmatpush1.msra.mxu0 0.0
    %460 = vmatprep.subr.mxu0 0.0
    %461 = vmatpush1.msra.mxu0 0.0
    %462 = vmatprep.subr.mxu0 0.0
    %463 = vmatpush1.msra.mxu0 0.0
    %464 = vmatprep.subr.mxu0 0.0
    %465 = vmatpush1.msra.mxu0 0.0
    %466 = vmatprep.subr.mxu0 0.0
    %467 = vmatpush1.msra.mxu0 0.0
    %468 = vmatprep.subr.mxu0 0.0
    %469 = vmatpush1.msra.mxu0 0.0
    %470 = vmatprep.subr.mxu0 0.0
    %471 = vmatpush1.msra.mxu0 0.0
    %472 = vmatprep.subr.mxu0 0.0
    %473 = vmatpush1.msra.mxu0 0.0
    %474 = vmatprep.subr.mxu0 0.0
    %475 = vmatpush1.msra.mxu0 0.0
    %476 = vmatprep.subr.mxu0 0.0
    %477 = vmatpush1.msra.mxu0 0.0
    %478 = vmatprep.subr.mxu0 0.0
    %479 = vmatpush1.msra.mxu0 0.0
    %480 = vmatprep.subr.mxu0 0.0
    %481 = vmatpush1.msra.mxu0 0.0
    %482 = vmatprep.subr.mxu0 0.0
    %483 = vmatpush1.msra.mxu0 0.0
    %484 = vmatprep.subr.mxu0 0.0
    %485 = vmatpush1.msra.mxu0 0.0
    %486 = vmatprep.subr.mxu0 0.0
    %487 = vmatpush1.msra.mxu0 0.0
    %488 = vmatprep.subr.mxu0 0.0
    %489 = vmatpush1.msra.mxu0 0.0
    %490 = vmatprep.subr.mxu0 0.0
    %491 = vmatpush1.msra.mxu0 0.0
    %492 = vmatprep.mubr.f32.mxu0 0.0
    %493 = vmatmul.mubr.f32.gmra.mrb[0].mxu0 %v426
    %v494 = vpop.f32.mrb[0].mxu0
    %v495 = vadd.f32 %v245, %v494
    %v496 = vpop.f32.mrb[0].mxu0
    %497 = vdwg.mxu0
    %v498 = vld [vmem:[%s0 + $0x3] sm:$0x1]
    %v499 = vld [vmem:[%s0 + $0xb] sm:$0x1]
    %v502 = vrot.slane %v499, 7
    %v503 = vsel %vm263, %v502, %v498
    %v504 = vsel %vm265, %v503, 0
    %506 = vmatprep.subr.mxu0 0.0
    %507 = vmatpush1.msra.mxu0 %v270
    %508 = vmatprep.subr.mxu0 0.0
    %509 = vmatpush1.msra.mxu0 0.0
    %510 = vmatprep.subr.mxu0 0.0
    %511 = vmatpush1.msra.mxu0 0.0
    %512 = vmatprep.subr.mxu0 0.0
    %513 = vmatpush1.msra.mxu0 0.0
    %514 = vmatprep.subr.mxu0 0.0
    %515 = vmatpush1.msra.mxu0 0.0
    %516 = vmatprep.subr.mxu0 0.0
    %517 = vmatpush1.msra.mxu0 0.0
    %518 = vmatprep.subr.mxu0 0.0
    %519 = vmatpush1.msra.mxu0 0.0
    %520 = vmatprep.subr.mxu0 0.0
    %521 = vmatpush1.msra.mxu0 0.0
    %522 = vmatprep.subr.mxu0 0.0
    %523 = vmatpush1.msra.mxu0 0.0
    %524 = vmatprep.subr.mxu0 0.0
    %525 = vmatpush1.msra.mxu0 0.0
    %526 = vmatprep.subr.mxu0 0.0
    %527 = vmatpush1.msra.mxu0 0.0
    %528 = vmatprep.subr.mxu0 0.0
    %529 = vmatpush1.msra.mxu0 0.0
    %530 = vmatprep.subr.mxu0 0.0
    %531 = vmatpush1.msra.mxu0 0.0
    %532 = vmatprep.subr.mxu0 0.0
    %533 = vmatpush1.msra.mxu0 0.0
    %534 = vmatprep.subr.mxu0 0.0
    %535 = vmatpush1.msra.mxu0 0.0
    %536 = vmatprep.subr.mxu0 0.0
    %537 = vmatpush1.msra.mxu0 0.0
    %538 = vmatprep.subr.mxu0 0.0
    %539 = vmatpush1.msra.mxu0 0.0
    %540 = vmatprep.subr.mxu0 0.0
    %541 = vmatpush1.msra.mxu0 0.0
    %542 = vmatprep.subr.mxu0 0.0
    %543 = vmatpush1.msra.mxu0 0.0
    %544 = vmatprep.subr.mxu0 0.0
    %545 = vmatpush1.msra.mxu0 0.0
    %546 = vmatprep.subr.mxu0 0.0
    %547 = vmatpush1.msra.mxu0 0.0
    %548 = vmatprep.subr.mxu0 0.0
    %549 = vmatpush1.msra.mxu0 0.0
    %550 = vmatprep.subr.mxu0 0.0
    %551 = vmatpush1.msra.mxu0 0.0
    %552 = vmatprep.subr.mxu0 0.0
    %553 = vmatpush1.msra.mxu0 0.0
    %554 = vmatprep.subr.mxu0 0.0
    %555 = vmatpush1.msra.mxu0 0.0
    %556 = vmatprep.subr.mxu0 0.0
    %557 = vmatpush1.msra.mxu0 0.0
    %558 = vmatprep.subr.mxu0 0.0
    %559 = vmatpush1.msra.mxu0 0.0
    %560 = vmatprep.subr.mxu0 0.0
    %561 = vmatpush1.msra.mxu0 0.0
    %562 = vmatprep.subr.mxu0 0.0
    %563 = vmatpush1.msra.mxu0 0.0
    %564 = vmatprep.subr.mxu0 0.0
    %565 = vmatpush1.msra.mxu0 0.0
    %566 = vmatprep.subr.mxu0 0.0
    %567 = vmatpush1.msra.mxu0 0.0
    %568 = vmatprep.subr.mxu0 0.0
    %569 = vmatpush1.msra.mxu0 0.0
    %570 = vmatprep.mubr.f32.mxu0 0.0
    %571 = vmatmul.mubr.f32.gmra.mrb[0].mxu0 %v504
    %v572 = vpop.f32.mrb[0].mxu0
    %v573 = vadd.f32 %v245, %v572
    %v574 = vpop.f32.mrb[0].mxu0
    %575 = vdwg.mxu0
    %v576 = vld [vmem:[%s0 + $0x4] sm:$0x1]
    %v577 = vld [vmem:[%s0 + $0xc] sm:$0x1]
    %v580 = vrot.slane %v577, 7
    %v581 = vsel %vm263, %v580, %v576
    %v582 = vsel %vm265, %v581, 0
    %584 = vmatprep.subr.mxu0 0.0
    %585 = vmatpush1.msra.mxu0 %v270
    %586 = vmatprep.subr.mxu0 0.0
    %587 = vmatpush1.msra.mxu0 0.0
    %588 = vmatprep.subr.mxu0 0.0
    %589 = vmatpush1.msra.mxu0 0.0
    %590 = vmatprep.subr.mxu0 0.0
    %591 = vmatpush1.msra.mxu0 0.0
    %592 = vmatprep.subr.mxu0 0.0
    %593 = vmatpush1.msra.mxu0 0.0
    %594 = vmatprep.subr.mxu0 0.0
    %595 = vmatpush1.msra.mxu0 0.0
    %596 = vmatprep.subr.mxu0 0.0
    %597 = vmatpush1.msra.mxu0 0.0
    %598 = vmatprep.subr.mxu0 0.0
    %599 = vmatpush1.msra.mxu0 0.0
    %600 = vmatprep.subr.mxu0 0.0
    %601 = vmatpush1.msra.mxu0 0.0
    %602 = vmatprep.subr.mxu0 0.0
    %603 = vmatpush1.msra.mxu0 0.0
    %604 = vmatprep.subr.mxu0 0.0
    %605 = vmatpush1.msra.mxu0 0.0
    %606 = vmatprep.subr.mxu0 0.0
    %607 = vmatpush1.msra.mxu0 0.0
    %608 = vmatprep.subr.mxu0 0.0
    %609 = vmatpush1.msra.mxu0 0.0
    %610 = vmatprep.subr.mxu0 0.0
    %611 = vmatpush1.msra.mxu0 0.0
    %612 = vmatprep.subr.mxu0 0.0
    %613 = vmatpush1.msra.mxu0 0.0
    %614 = vmatprep.subr.mxu0 0.0
    %615 = vmatpush1.msra.mxu0 0.0
    %616 = vmatprep.subr.mxu0 0.0
    %617 = vmatpush1.msra.mxu0 0.0
    %618 = vmatprep.subr.mxu0 0.0
    %619 = vmatpush1.msra.mxu0 0.0
    %620 = vmatprep.subr.mxu0 0.0
    %621 = vmatpush1.msra.mxu0 0.0
    %622 = vmatprep.subr.mxu0 0.0
    %623 = vmatpush1.msra.mxu0 0.0
    %624 = vmatprep.subr.mxu0 0.0
    %625 = vmatpush1.msra.mxu0 0.0
    %626 = vmatprep.subr.mxu0 0.0
    %627 = vmatpush1.msra.mxu0 0.0
    %628 = vmatprep.subr.mxu0 0.0
    %629 = vmatpush1.msra.mxu0 0.0
    %630 = vmatprep.subr.mxu0 0.0
    %631 = vmatpush1.msra.mxu0 0.0
    %632 = vmatprep.subr.mxu0 0.0
    %633 = vmatpush1.msra.mxu0 0.0
    %634 = vmatprep.subr.mxu0 0.0
    %635 = vmatpush1.msra.mxu0 0.0
    %636 = vmatprep.subr.mxu0 0.0
    %637 = vmatpush1.msra.mxu0 0.0
    %638 = vmatprep.subr.mxu0 0.0
    %639 = vmatpush1.msra.mxu0 0.0
    %640 = vmatprep.subr.mxu0 0.0
    %641 = vmatpush1.msra.mxu0 0.0
    %642 = vmatprep.subr.mxu0 0.0
    %643 = vmatpush1.msra.mxu0 0.0
    %644 = vmatprep.subr.mxu0 0.0
    %645 = vmatpush1.msra.mxu0 0.0
    %646 = vmatprep.subr.mxu0 0.0
    %647 = vmatpush1.msra.mxu0 0.0
    %648 = vmatprep.mubr.f32.mxu0 0.0
    %649 = vmatmul.mubr.f32.gmra.mrb[0].mxu0 %v582
    %v650 = vpop.f32.mrb[0].mxu0
    %v651 = vadd.f32 %v245, %v650
    %v652 = vpop.f32.mrb[0].mxu0
    %653 = vdwg.mxu0
    %v654 = vld [vmem:[%s0 + $0x5] sm:$0x1]
    %v655 = vld [vmem:[%s0 + $0xd] sm:$0x1]
    %v658 = vrot.slane %v655, 7
    %v659 = vsel %vm263, %v658, %v654
    %v660 = vsel %vm265, %v659, 0
    %662 = vmatprep.subr.mxu0 0.0
    %663 = vmatpush1.msra.mxu0 %v270
    %664 = vmatprep.subr.mxu0 0.0
    %665 = vmatpush1.msra.mxu0 0.0
    %666 = vmatprep.subr.mxu0 0.0
    %667 = vmatpush1.msra.mxu0 0.0
    %668 = vmatprep.subr.mxu0 0.0
    %669 = vmatpush1.msra.mxu0 0.0
    %670 = vmatprep.subr.mxu0 0.0
    %671 = vmatpush1.msra.mxu0 0.0
    %672 = vmatprep.subr.mxu0 0.0
    %673 = vmatpush1.msra.mxu0 0.0
    %674 = vmatprep.subr.mxu0 0.0
    %675 = vmatpush1.msra.mxu0 0.0
    %676 = vmatprep.subr.mxu0 0.0
    %677 = vmatpush1.msra.mxu0 0.0
    %678 = vmatprep.subr.mxu0 0.0
    %679 = vmatpush1.msra.mxu0 0.0
    %680 = vmatprep.subr.mxu0 0.0
    %681 = vmatpush1.msra.mxu0 0.0
    %682 = vmatprep.subr.mxu0 0.0
    %683 = vmatpush1.msra.mxu0 0.0
    %684 = vmatprep.subr.mxu0 0.0
    %685 = vmatpush1.msra.mxu0 0.0
    %686 = vmatprep.subr.mxu0 0.0
    %687 = vmatpush1.msra.mxu0 0.0
    %688 = vmatprep.subr.mxu0 0.0
    %689 = vmatpush1.msra.mxu0 0.0
    %690 = vmatprep.subr.mxu0 0.0
    %691 = vmatpush1.msra.mxu0 0.0
    %692 = vmatprep.subr.mxu0 0.0
    %693 = vmatpush1.msra.mxu0 0.0
    %694 = vmatprep.subr.mxu0 0.0
    %695 = vmatpush1.msra.mxu0 0.0
    %696 = vmatprep.subr.mxu0 0.0
    %697 = vmatpush1.msra.mxu0 0.0
    %698 = vmatprep.subr.mxu0 0.0
    %699 = vmatpush1.msra.mxu0 0.0
    %700 = vmatprep.subr.mxu0 0.0
    %701 = vmatpush1.msra.mxu0 0.0
    %702 = vmatprep.subr.mxu0 0.0
    %703 = vmatpush1.msra.mxu0 0.0
    %704 = vmatprep.subr.mxu0 0.0
    %705 = vmatpush1.msra.mxu0 0.0
    %706 = vmatprep.subr.mxu0 0.0
    %707 = vmatpush1.msra.mxu0 0.0
    %708 = vmatprep.subr.mxu0 0.0
    %709 = vmatpush1.msra.mxu0 0.0
    %710 = vmatprep.subr.mxu0 0.0
    %711 = vmatpush1.msra.mxu0 0.0
    %712 = vmatprep.subr.mxu0 0.0
    %713 = vmatpush1.msra.mxu0 0.0
    %714 = vmatprep.subr.mxu0 0.0
    %715 = vmatpush1.msra.mxu0 0.0
    %716 = vmatprep.subr.mxu0 0.0
    %717 = vmatpush1.msra.mxu0 0.0
    %718 = vmatprep.subr.mxu0 0.0
    %719 = vmatpush1.msra.mxu0 0.0
    %720 = vmatprep.subr.mxu0 0.0
    %721 = vmatpush1.msra.mxu0 0.0
    %722 = vmatprep.subr.mxu0 0.0
    %723 = vmatpush1.msra.mxu0 0.0
    %724 = vmatprep.subr.mxu0 0.0
    %725 = vmatpush1.msra.mxu0 0.0
    %726 = vmatprep.mubr.f32.mxu0 0.0
    %727 = vmatmul.mubr.f32.gmra.mrb[0].mxu0 %v660
    %v728 = vpop.f32.mrb[0].mxu0
    %v729 = vadd.f32 %v245, %v728
    %v730 = vpop.f32.mrb[0].mxu0
    %731 = vdwg.mxu0
    %v732 = vld [vmem:[%s0 + $0x6] sm:$0x1]
    %v733 = vld [vmem:[%s0 + $0xe] sm:$0x1]
    %v736 = vrot.slane %v733, 7
    %v737 = vsel %vm263, %v736, %v732
    %v738 = vsel %vm265, %v737, 0
    %740 = vmatprep.subr.mxu0 0.0
    %741 = vmatpush1.msra.mxu0 %v270
    %742 = vmatprep.subr.mxu0 0.0
    %743 = vmatpush1.msra.mxu0 0.0
    %744 = vmatprep.subr.mxu0 0.0
    %745 = vmatpush1.msra.mxu0 0.0
    %746 = vmatprep.subr.mxu0 0.0
    %747 = vmatpush1.msra.mxu0 0.0
    %748 = vmatprep.subr.mxu0 0.0
    %749 = vmatpush1.msra.mxu0 0.0
    %750 = vmatprep.subr.mxu0 0.0
    %751 = vmatpush1.msra.mxu0 0.0
    %752 = vmatprep.subr.mxu0 0.0
    %753 = vmatpush1.msra.mxu0 0.0
    %754 = vmatprep.subr.mxu0 0.0
    %755 = vmatpush1.msra.mxu0 0.0
    %756 = vmatprep.subr.mxu0 0.0
    %757 = vmatpush1.msra.mxu0 0.0
    %758 = vmatprep.subr.mxu0 0.0
    %759 = vmatpush1.msra.mxu0 0.0
    %760 = vmatprep.subr.mxu0 0.0
    %761 = vmatpush1.msra.mxu0 0.0
    %762 = vmatprep.subr.mxu0 0.0
    %763 = vmatpush1.msra.mxu0 0.0
    %764 = vmatprep.subr.mxu0 0.0
    %765 = vmatpush1.msra.mxu0 0.0
    %766 = vmatprep.subr.mxu0 0.0
    %767 = vmatpush1.msra.mxu0 0.0
    %768 = vmatprep.subr.mxu0 0.0
    %769 = vmatpush1.msra.mxu0 0.0
    %770 = vmatprep.subr.mxu0 0.0
    %771 = vmatpush1.msra.mxu0 0.0
    %772 = vmatprep.subr.mxu0 0.0
    %773 = vmatpush1.msra.mxu0 0.0
    %774 = vmatprep.subr.mxu0 0.0
    %775 = vmatpush1.msra.mxu0 0.0
    %776 = vmatprep.subr.mxu0 0.0
    %777 = vmatpush1.msra.mxu0 0.0
    %778 = vmatprep.subr.mxu0 0.0
    %779 = vmatpush1.msra.mxu0 0.0
    %780 = vmatprep.subr.mxu0 0.0
    %781 = vmatpush1.msra.mxu0 0.0
    %782 = vmatprep.subr.mxu0 0.0
    %783 = vmatpush1.msra.mxu0 0.0
    %784 = vmatprep.subr.mxu0 0.0
    %785 = vmatpush1.msra.mxu0 0.0
    %786 = vmatprep.subr.mxu0 0.0
    %787 = vmatpush1.msra.mxu0 0.0
    %788 = vmatprep.subr.mxu0 0.0
    %789 = vmatpush1.msra.mxu0 0.0
    %790 = vmatprep.subr.mxu0 0.0
    %791 = vmatpush1.msra.mxu0 0.0
    %792 = vmatprep.subr.mxu0 0.0
    %793 = vmatpush1.msra.mxu0 0.0
    %794 = vmatprep.subr.mxu0 0.0
    %795 = vmatpush1.msra.mxu0 0.0
    %796 = vmatprep.subr.mxu0 0.0
    %797 = vmatpush1.msra.mxu0 0.0
    %798 = vmatprep.subr.mxu0 0.0
    %799 = vmatpush1.msra.mxu0 0.0
    %800 = vmatprep.subr.mxu0 0.0
    %801 = vmatpush1.msra.mxu0 0.0
    %802 = vmatprep.subr.mxu0 0.0
    %803 = vmatpush1.msra.mxu0 0.0
    %804 = vmatprep.mubr.f32.mxu0 0.0
    %805 = vmatmul.mubr.f32.gmra.mrb[0].mxu0 %v738
    %v806 = vpop.f32.mrb[0].mxu0
    %v807 = vadd.f32 %v245, %v806
    %v808 = vpop.f32.mrb[0].mxu0
    %809 = vdwg.mxu0
    %v810 = vld [vmem:[%s0 + $0x7] sm:$0x1]
    %v811 = vld [vmem:[%s0 + $0xf] sm:$0x1]
    %v814 = vrot.slane %v811, 7
    %v815 = vsel %vm263, %v814, %v810
    %v816 = vsel %vm265, %v815, 0
    %818 = vmatprep.subr.mxu0 0.0
    %819 = vmatpush1.msra.mxu0 %v270
    %820 = vmatprep.subr.mxu0 0.0
    %821 = vmatpush1.msra.mxu0 0.0
    %822 = vmatprep.subr.mxu0 0.0
    %823 = vmatpush1.msra.mxu0 0.0
    %824 = vmatprep.subr.mxu0 0.0
    %825 = vmatpush1.msra.mxu0 0.0
    %826 = vmatprep.subr.mxu0 0.0
    %827 = vmatpush1.msra.mxu0 0.0
    %828 = vmatprep.subr.mxu0 0.0
    %829 = vmatpush1.msra.mxu0 0.0
    %830 = vmatprep.subr.mxu0 0.0
    %831 = vmatpush1.msra.mxu0 0.0
    %832 = vmatprep.subr.mxu0 0.0
    %833 = vmatpush1.msra.mxu0 0.0
    %834 = vmatprep.subr.mxu0 0.0
    %835 = vmatpush1.msra.mxu0 0.0
    %836 = vmatprep.subr.mxu0 0.0
    %837 = vmatpush1.msra.mxu0 0.0
    %838 = vmatprep.subr.mxu0 0.0
    %839 = vmatpush1.msra.mxu0 0.0
    %840 = vmatprep.subr.mxu0 0.0
    %841 = vmatpush1.msra.mxu0 0.0
    %842 = vmatprep.subr.mxu0 0.0
    %843 = vmatpush1.msra.mxu0 0.0
    %844 = vmatprep.subr.mxu0 0.0
    %845 = vmatpush1.msra.mxu0 0.0
    %846 = vmatprep.subr.mxu0 0.0
    %847 = vmatpush1.msra.mxu0 0.0
    %848 = vmatprep.subr.mxu0 0.0
    %849 = vmatpush1.msra.mxu0 0.0
    %850 = vmatprep.subr.mxu0 0.0
    %851 = vmatpush1.msra.mxu0 0.0
    %852 = vmatprep.subr.mxu0 0.0
    %853 = vmatpush1.msra.mxu0 0.0
    %854 = vmatprep.subr.mxu0 0.0
    %855 = vmatpush1.msra.mxu0 0.0
    %856 = vmatprep.subr.mxu0 0.0
    %857 = vmatpush1.msra.mxu0 0.0
    %858 = vmatprep.subr.mxu0 0.0
    %859 = vmatpush1.msra.mxu0 0.0
    %860 = vmatprep.subr.mxu0 0.0
    %861 = vmatpush1.msra.mxu0 0.0
    %862 = vmatprep.subr.mxu0 0.0
    %863 = vmatpush1.msra.mxu0 0.0
    %864 = vmatprep.subr.mxu0 0.0
    %865 = vmatpush1.msra.mxu0 0.0
    %866 = vmatprep.subr.mxu0 0.0
    %867 = vmatpush1.msra.mxu0 0.0
    %868 = vmatprep.subr.mxu0 0.0
    %869 = vmatpush1.msra.mxu0 0.0
    %870 = vmatprep.subr.mxu0 0.0
    %871 = vmatpush1.msra.mxu0 0.0
    %872 = vmatprep.subr.mxu0 0.0
    %873 = vmatpush1.msra.mxu0 0.0
    %874 = vmatprep.subr.mxu0 0.0
    %875 = vmatpush1.msra.mxu0 0.0
    %876 = vmatprep.subr.mxu0 0.0
    %877 = vmatpush1.msra.mxu0 0.0
    %878 = vmatprep.subr.mxu0 0.0
    %879 = vmatpush1.msra.mxu0 0.0
    %880 = vmatprep.subr.mxu0 0.0
    %881 = vmatpush1.msra.mxu0 0.0
    %882 = vmatprep.mubr.f32.mxu0 0.0
    %883 = vmatmul.mubr.f32.gmra.mrb[0].mxu0 %v816
    %v884 = vpop.f32.mrb[0].mxu0
    %v885 = vadd.f32 %v245, %v884
    %v886 = vpop.f32.mrb[0].mxu0
    %887 = vdwg.mxu0
    %vm888 = vcmask 261120
    %v890 = vsel %vm888, 0.0, 0
    %892 = vmatprep.subr.mxu0 0.0
    %893 = vmatpush1.msra.mxu0 %v226
    %894 = vmatprep.subr.mxu0 0.0
    %895 = vmatpush1.msra.mxu0 %v227
    %896 = vmatprep.subr.mxu0 0.0
    %897 = vmatpush1.msra.mxu0 %v228
    %898 = vmatprep.subr.mxu0 0.0
    %899 = vmatpush1.msra.mxu0 %v229
    %900 = vmatprep.subr.mxu0 0.0
    %901 = vmatpush1.msra.mxu0 0.0
    %902 = vmatprep.subr.mxu0 0.0
    %903 = vmatpush1.msra.mxu0 0.0
    %904 = vmatprep.subr.mxu0 0.0
    %905 = vmatpush1.msra.mxu0 0.0
    %906 = vmatprep.subr.mxu0 0.0
    %907 = vmatpush1.msra.mxu0 0.0
    %908 = vmatprep.subr.mxu0 0.0
    %909 = vmatpush1.msra.mxu0 0.0
    %910 = vmatprep.subr.mxu0 0.0
    %911 = vmatpush1.msra.mxu0 0.0
    %912 = vmatprep.subr.mxu0 0.0
    %913 = vmatpush1.msra.mxu0 0.0
    %914 = vmatprep.subr.mxu0 0.0
    %915 = vmatpush1.msra.mxu0 0.0
    %916 = vmatprep.subr.mxu0 0.0
    %917 = vmatpush1.msra.mxu0 0.0
    %918 = vmatprep.subr.mxu0 0.0
    %919 = vmatpush1.msra.mxu0 0.0
    %920 = vmatprep.subr.mxu0 0.0
    %921 = vmatpush1.msra.mxu0 0.0
    %922 = vmatprep.subr.mxu0 0.0
    %923 = vmatpush1.msra.mxu0 0.0
    %924 = vmatprep.subr.mxu0 0.0
    %925 = vmatpush1.msra.mxu0 0.0
    %926 = vmatprep.subr.mxu0 0.0
    %927 = vmatpush1.msra.mxu0 0.0
    %928 = vmatprep.subr.mxu0 0.0
    %929 = vmatpush1.msra.mxu0 0.0
    %930 = vmatprep.subr.mxu0 0.0
    %931 = vmatpush1.msra.mxu0 0.0
    %932 = vmatprep.subr.mxu0 0.0
    %933 = vmatpush1.msra.mxu0 0.0
    %934 = vmatprep.subr.mxu0 0.0
    %935 = vmatpush1.msra.mxu0 0.0
    %936 = vmatprep.subr.mxu0 0.0
    %937 = vmatpush1.msra.mxu0 0.0
    %938 = vmatprep.subr.mxu0 0.0
    %939 = vmatpush1.msra.mxu0 0.0
    %940 = vmatprep.subr.mxu0 0.0
    %941 = vmatpush1.msra.mxu0 0.0
    %942 = vmatprep.subr.mxu0 0.0
    %943 = vmatpush1.msra.mxu0 0.0
    %944 = vmatprep.subr.mxu0 0.0
    %945 = vmatpush1.msra.mxu0 0.0
    %946 = vmatprep.subr.mxu0 0.0
    %947 = vmatpush1.msra.mxu0 0.0
    %948 = vmatprep.subr.mxu0 0.0
    %949 = vmatpush1.msra.mxu0 0.0
    %950 = vmatprep.subr.mxu0 0.0
    %951 = vmatpush1.msra.mxu0 0.0
    %952 = vmatprep.subr.mxu0 0.0
    %953 = vmatpush1.msra.mxu0 0.0
    %954 = vmatprep.subr.mxu0 0.0
    %955 = vmatpush1.msra.mxu0 0.0
    %956 = vmatprep.mubr.f32.mxu0 0.0
    %957 = vmatmul.mubr.f32.gmra.mrb[0].mxu0 %v890
    %v958 = vpop.f32.mrb[0].mxu0
    %v959 = vadd.f32 0.0, %v958
    %v960 = vpop.f32.mrb[0].mxu0
    %961 = vdwg.mxu0
    %v962 = vadd.f32 %v339, %v959
    %v963 = vxor.u32 %v962, 2147483648
    %v964 = vmul.f32 %v963, 1.442695
    %v965 = vpow.pop %v964
    %v966 = vadd.f32 %v965, 1.0
    %v967 = vrcp.pop %v966
    %v968 = vmul.f32 1.0, %v967
    %969 = vrot.lane.b32.xlu0 %v251, 64
    %v970 = vpop.permute.xlu0 %969
    %v972 = vadd.f32 %v959, %v970
    %974 = vrot.lane.b32.xlu0 %v972, 64
    %v975 = vpop.permute.xlu0 %974
    %v977 = vmul.f32 %v968, %v975
    %979 = vrot.lane.b32.xlu0 %v977, 64
    %v980 = vpop.permute.xlu0 %979
    %v982 = vadd.f32 %v339, %v980
    %v983 = vtanh.pop %v982
    %v984 = vsub.f32 1.0, %v968
    %986 = vrot.lane.b32.xlu0 %v983, 96
    %v987 = vpop.permute.xlu0 %986
    %v989 = vmul.f32 %v984, %v987
    %v990 = vmul.f32 %v968, 0.0
    %v991 = vadd.f32 %v989, %v990
    %993 = vrot.lane.b32.xlu0 %v991, 96
    %v994 = vpop.permute.xlu0 %993
    %v996 = vsel %vm888, %v994, 0.0
    %vm997 = vcmask 523264
    %v999 = vsel %vm997, %v996, 0
    %1001 = vmatprep.subr.mxu0 0.0
    %1002 = vmatpush1.msra.mxu0 %v232
    %1003 = vmatprep.subr.mxu0 0.0
    %1004 = vmatpush1.msra.mxu0 %v233
    %1005 = vmatprep.subr.mxu0 0.0
    %1006 = vmatpush1.msra.mxu0 %v234
    %1007 = vmatprep.subr.mxu0 0.0
    %1008 = vmatpush1.msra.mxu0 %v235
    %1009 = vmatprep.subr.mxu0 0.0
    %1010 = vmatpush1.msra.mxu0 %v236
    %1011 = vmatprep.subr.mxu0 0.0
    %1012 = vmatpush1.msra.mxu0 %v237
    %1013 = vmatprep.subr.mxu0 0.0
    %1014 = vmatpush1.msra.mxu0 %v238
    %1015 = vmatprep.subr.mxu0 0.0
    %1016 = vmatpush1.msra.mxu0 %v239
    %1017 = vmatprep.subr.mxu0 0.0
    %1018 = vmatpush1.msra.mxu0 0.0
    %1019 = vmatprep.subr.mxu0 0.0
    %1020 = vmatpush1.msra.mxu0 0.0
    %1021 = vmatprep.subr.mxu0 0.0
    %1022 = vmatpush1.msra.mxu0 0.0
    %1023 = vmatprep.subr.mxu0 0.0
    %1024 = vmatpush1.msra.mxu0 0.0
    %1025 = vmatprep.subr.mxu0 0.0
    %1026 = vmatpush1.msra.mxu0 0.0
    %1027 = vmatprep.subr.mxu0 0.0
    %1028 = vmatpush1.msra.mxu0 0.0
    %1029 = vmatprep.subr.mxu0 0.0
    %1030 = vmatpush1.msra.mxu0 0.0
    %1031 = vmatprep.subr.mxu0 0.0
    %1032 = vmatpush1.msra.mxu0 0.0
    %1033 = vmatprep.subr.mxu0 0.0
    %1034 = vmatpush1.msra.mxu0 0.0
    %1035 = vmatprep.subr.mxu0 0.0
    %1036 = vmatpush1.msra.mxu0 0.0
    %1037 = vmatprep.subr.mxu0 0.0
    %1038 = vmatpush1.msra.mxu0 0.0
    %1039 = vmatprep.subr.mxu0 0.0
    %1040 = vmatpush1.msra.mxu0 0.0
    %1041 = vmatprep.subr.mxu0 0.0
    %1042 = vmatpush1.msra.mxu0 0.0
    %1043 = vmatprep.subr.mxu0 0.0
    %1044 = vmatpush1.msra.mxu0 0.0
    %1045 = vmatprep.subr.mxu0 0.0
    %1046 = vmatpush1.msra.mxu0 0.0
    %1047 = vmatprep.subr.mxu0 0.0
    %1048 = vmatpush1.msra.mxu0 0.0
    %1049 = vmatprep.subr.mxu0 0.0
    %1050 = vmatpush1.msra.mxu0 0.0
    %1051 = vmatprep.subr.mxu0 0.0
    %1052 = vmatpush1.msra.mxu0 0.0
    %1053 = vmatprep.subr.mxu0 0.0
    %1054 = vmatpush1.msra.mxu0 0.0
    %1055 = vmatprep.subr.mxu0 0.0
    %1056 = vmatpush1.msra.mxu0 0.0
    %1057 = vmatprep.subr.mxu0 0.0
    %1058 = vmatpush1.msra.mxu0 0.0
    %1059 = vmatprep.subr.mxu0 0.0
    %1060 = vmatpush1.msra.mxu0 0.0
    %1061 = vmatprep.subr.mxu0 0.0
    %1062 = vmatpush1.msra.mxu0 0.0
    %1063 = vmatprep.subr.mxu0 0.0
    %1064 = vmatpush1.msra.mxu0 0.0
    %1065 = vmatprep.mubr.f32.mxu0 0.0
    %1066 = vmatmul.mubr.f32.gmra.mrb[0].mxu0 %v999
    %v1067 = vpop.f32.mrb[0].mxu0
    %v1068 = vadd.f32 %v256, %v1067
    %v1069 = vpop.f32.mrb[0].mxu0
    %1070 = vdwg.mxu0
    %v1071 = vxor.u32 %v1068, 2147483648
    %v1072 = vmul.f32 %v1071, 1.442695
    %v1073 = vpow.pop %v1072
    %v1074 = vadd.f32 %v1073, 1.0
    %v1075 = vrcp.pop %v1074
    %v1076 = vmul.f32 1.0, %v1075
    %1078 = vrot.lane.b32.xlu0 %v1068, 32
    %v1079 = vpop.permute.xlu0 %1078
    %v1081 = vmul.f32 %v1076, %v1079
    %1083 = vrot.lane.b32.xlu0 %v1081, 64
    %v1084 = vpop.permute.xlu0 %1083
    %v1086 = vadd.f32 %v1068, %v1084
    %v1087 = vtanh.pop %v1086
    %v1088 = vsub.f32 1.0, %v1076
    %1090 = vrot.lane.b32.xlu0 %v1087, 96
    %v1091 = vpop.permute.xlu0 %1090
    %v1093 = vmul.f32 %v1088, %v1091
    %v1094 = vmul.f32 %v1076, 0.0
    %v1095 = vadd.f32 %v1093, %v1094
    %v1096 = vsel %vm888, %v994, 0
    %1098 = vmatprep.subr.mxu0 0.0
    %1099 = vmatpush1.msra.mxu0 %v226
    %1100 = vmatprep.subr.mxu0 0.0
    %1101 = vmatpush1.msra.mxu0 %v227
    %1102 = vmatprep.subr.mxu0 0.0
    %1103 = vmatpush1.msra.mxu0 %v228
    %1104 = vmatprep.subr.mxu0 0.0
    %1105 = vmatpush1.msra.mxu0 %v229
    %1106 = vmatprep.subr.mxu0 0.0
    %1107 = vmatpush1.msra.mxu0 0.0
    %1108 = vmatprep.subr.mxu0 0.0
    %1109 = vmatpush1.msra.mxu0 0.0
    %1110 = vmatprep.subr.mxu0 0.0
    %1111 = vmatpush1.msra.mxu0 0.0
    %1112 = vmatprep.subr.mxu0 0.0
    %1113 = vmatpush1.msra.mxu0 0.0
    %1114 = vmatprep.subr.mxu0 0.0
    %1115 = vmatpush1.msra.mxu0 0.0
    %1116 = vmatprep.subr.mxu0 0.0
    %1117 = vmatpush1.msra.mxu0 0.0
    %1118 = vmatprep.subr.mxu0 0.0
    %1119 = vmatpush1.msra.mxu0 0.0
    %1120 = vmatprep.subr.mxu0 0.0
    %1121 = vmatpush1.msra.mxu0 0.0
    %1122 = vmatprep.subr.mxu0 0.0
    %1123 = vmatpush1.msra.mxu0 0.0
    %1124 = vmatprep.subr.mxu0 0.0
    %1125 = vmatpush1.msra.mxu0 0.0
    %1126 = vmatprep.subr.mxu0 0.0
    %1127 = vmatpush1.msra.mxu0 0.0
    %1128 = vmatprep.subr.mxu0 0.0
    %1129 = vmatpush1.msra.mxu0 0.0
    %1130 = vmatprep.subr.mxu0 0.0
    %1131 = vmatpush1.msra.mxu0 0.0
    %1132 = vmatprep.subr.mxu0 0.0
    %1133 = vmatpush1.msra.mxu0 0.0
    %1134 = vmatprep.subr.mxu0 0.0
    %1135 = vmatpush1.msra.mxu0 0.0
    %1136 = vmatprep.subr.mxu0 0.0
    %1137 = vmatpush1.msra.mxu0 0.0
    %1138 = vmatprep.subr.mxu0 0.0
    %1139 = vmatpush1.msra.mxu0 0.0
    %1140 = vmatprep.subr.mxu0 0.0
    %1141 = vmatpush1.msra.mxu0 0.0
    %1142 = vmatprep.subr.mxu0 0.0
    %1143 = vmatpush1.msra.mxu0 0.0
    %1144 = vmatprep.subr.mxu0 0.0
    %1145 = vmatpush1.msra.mxu0 0.0
    %1146 = vmatprep.subr.mxu0 0.0
    %1147 = vmatpush1.msra.mxu0 0.0
    %1148 = vmatprep.subr.mxu0 0.0
    %1149 = vmatpush1.msra.mxu0 0.0
    %1150 = vmatprep.subr.mxu0 0.0
    %1151 = vmatpush1.msra.mxu0 0.0
    %1152 = vmatprep.subr.mxu0 0.0
    %1153 = vmatpush1.msra.mxu0 0.0
    %1154 = vmatprep.subr.mxu0 0.0
    %1155 = vmatpush1.msra.mxu0 0.0
    %1156 = vmatprep.subr.mxu0 0.0
    %1157 = vmatpush1.msra.mxu0 0.0
    %1158 = vmatprep.subr.mxu0 0.0
    %1159 = vmatpush1.msra.mxu0 0.0
    %1160 = vmatprep.subr.mxu0 0.0
    %1161 = vmatpush1.msra.mxu0 0.0
    %1162 = vmatprep.mubr.f32.mxu0 0.0
    %1163 = vmatmul.mubr.f32.gmra.mrb[0].mxu0 %v1096
    %v1164 = vpop.f32.mrb[0].mxu0
    %v1165 = vadd.f32 0.0, %v1164
    %v1166 = vpop.f32.mrb[0].mxu0
    %1167 = vdwg.mxu0
    %v1168 = vadd.f32 %v417, %v1165
    %v1169 = vxor.u32 %v1168, 2147483648
    %v1170 = vmul.f32 %v1169, 1.442695
    %v1171 = vpow.pop %v1170
    %v1172 = vadd.f32 %v1171, 1.0
    %v1173 = vrcp.pop %v1172
    %v1174 = vmul.f32 1.0, %v1173
    %v1175 = vadd.f32 %v1165, %v970
    %1177 = vrot.lane.b32.xlu0 %v1175, 64
    %v1178 = vpop.permute.xlu0 %1177
    %v1180 = vmul.f32 %v1174, %v1178
    %1182 = vrot.lane.b32.xlu0 %v1180, 64
    %v1183 = vpop.permute.xlu0 %1182
    %v1185 = vadd.f32 %v417, %v1183
    %v1186 = vtanh.pop %v1185
    %v1187 = vsub.f32 1.0, %v1174
    %1189 = vrot.lane.b32.xlu0 %v1186, 96
    %v1190 = vpop.permute.xlu0 %1189
    %v1192 = vmul.f32 %v1187, %v1190
    %v1193 = vmul.f32 %v1174, %v991
    %v1194 = vadd.f32 %v1192, %v1193
    %1196 = vrot.lane.b32.xlu0 %v1194, 96
    %v1197 = vpop.permute.xlu0 %1196
    %v1199 = vsel %vm888, %v1197, %v1095
    %v1201 = vsel %vm997, %v1199, 0
    %1203 = vmatprep.subr.mxu0 0.0
    %1204 = vmatpush1.msra.mxu0 %v232
    %1205 = vmatprep.subr.mxu0 0.0
    %1206 = vmatpush1.msra.mxu0 %v233
    %1207 = vmatprep.subr.mxu0 0.0
    %1208 = vmatpush1.msra.mxu0 %v234
    %1209 = vmatprep.subr.mxu0 0.0
    %1210 = vmatpush1.msra.mxu0 %v235
    %1211 = vmatprep.subr.mxu0 0.0
    %1212 = vmatpush1.msra.mxu0 %v236
    %1213 = vmatprep.subr.mxu0 0.0
    %1214 = vmatpush1.msra.mxu0 %v237
    %1215 = vmatprep.subr.mxu0 0.0
    %1216 = vmatpush1.msra.mxu0 %v238
    %1217 = vmatprep.subr.mxu0 0.0
    %1218 = vmatpush1.msra.mxu0 %v239
    %1219 = vmatprep.subr.mxu0 0.0
    %1220 = vmatpush1.msra.mxu0 0.0
    %1221 = vmatprep.subr.mxu0 0.0
    %1222 = vmatpush1.msra.mxu0 0.0
    %1223 = vmatprep.subr.mxu0 0.0
    %1224 = vmatpush1.msra.mxu0 0.0
    %1225 = vmatprep.subr.mxu0 0.0
    %1226 = vmatpush1.msra.mxu0 0.0
    %1227 = vmatprep.subr.mxu0 0.0
    %1228 = vmatpush1.msra.mxu0 0.0
    %1229 = vmatprep.subr.mxu0 0.0
    %1230 = vmatpush1.msra.mxu0 0.0
    %1231 = vmatprep.subr.mxu0 0.0
    %1232 = vmatpush1.msra.mxu0 0.0
    %1233 = vmatprep.subr.mxu0 0.0
    %1234 = vmatpush1.msra.mxu0 0.0
    %1235 = vmatprep.subr.mxu0 0.0
    %1236 = vmatpush1.msra.mxu0 0.0
    %1237 = vmatprep.subr.mxu0 0.0
    %1238 = vmatpush1.msra.mxu0 0.0
    %1239 = vmatprep.subr.mxu0 0.0
    %1240 = vmatpush1.msra.mxu0 0.0
    %1241 = vmatprep.subr.mxu0 0.0
    %1242 = vmatpush1.msra.mxu0 0.0
    %1243 = vmatprep.subr.mxu0 0.0
    %1244 = vmatpush1.msra.mxu0 0.0
    %1245 = vmatprep.subr.mxu0 0.0
    %1246 = vmatpush1.msra.mxu0 0.0
    %1247 = vmatprep.subr.mxu0 0.0
    %1248 = vmatpush1.msra.mxu0 0.0
    %1249 = vmatprep.subr.mxu0 0.0
    %1250 = vmatpush1.msra.mxu0 0.0
    %1251 = vmatprep.subr.mxu0 0.0
    %1252 = vmatpush1.msra.mxu0 0.0
    %1253 = vmatprep.subr.mxu0 0.0
    %1254 = vmatpush1.msra.mxu0 0.0
    %1255 = vmatprep.subr.mxu0 0.0
    %1256 = vmatpush1.msra.mxu0 0.0
    %1257 = vmatprep.subr.mxu0 0.0
    %1258 = vmatpush1.msra.mxu0 0.0
    %1259 = vmatprep.subr.mxu0 0.0
    %1260 = vmatpush1.msra.mxu0 0.0
    %1261 = vmatprep.subr.mxu0 0.0
    %1262 = vmatpush1.msra.mxu0 0.0
    %1263 = vmatprep.subr.mxu0 0.0
    %1264 = vmatpush1.msra.mxu0 0.0
    %1265 = vmatprep.subr.mxu0 0.0
    %1266 = vmatpush1.msra.mxu0 0.0
    %1267 = vmatprep.mubr.f32.mxu0 0.0
    %1268 = vmatmul.mubr.f32.gmra.mrb[0].mxu0 %v1201
    %v1269 = vpop.f32.mrb[0].mxu0
    %v1270 = vadd.f32 %v256, %v1269
    %v1271 = vpop.f32.mrb[0].mxu0
    %1272 = vdwg.mxu0
    %v1273 = vxor.u32 %v1270, 2147483648
    %v1274 = vmul.f32 %v1273, 1.442695
    %v1275 = vpow.pop %v1274
    %v1276 = vadd.f32 %v1275, 1.0
    %v1277 = vrcp.pop %v1276
    %v1278 = vmul.f32 1.0, %v1277
    %1280 = vrot.lane.b32.xlu0 %v1270, 32
    %v1281 = vpop.permute.xlu0 %1280
    %v1283 = vmul.f32 %v1278, %v1281
    %1285 = vrot.lane.b32.xlu0 %v1283, 64
    %v1286 = vpop.permute.xlu0 %1285
    %v1288 = vadd.f32 %v1270, %v1286
    %v1289 = vtanh.pop %v1288
    %v1290 = vsub.f32 1.0, %v1278
    %1292 = vrot.lane.b32.xlu0 %v1289, 96
    %v1293 = vpop.permute.xlu0 %1292
    %v1295 = vmul.f32 %v1290, %v1293
    %v1296 = vmul.f32 %v1278, %v1095
    %v1297 = vadd.f32 %v1295, %v1296
    %v1298 = vsel %vm888, %v1197, 0
    %1300 = vmatprep.subr.mxu0 0.0
    %1301 = vmatpush1.msra.mxu0 %v226
    %1302 = vmatprep.subr.mxu0 0.0
    %1303 = vmatpush1.msra.mxu0 %v227
    %1304 = vmatprep.subr.mxu0 0.0
    %1305 = vmatpush1.msra.mxu0 %v228
    %1306 = vmatprep.subr.mxu0 0.0
    %1307 = vmatpush1.msra.mxu0 %v229
    %1308 = vmatprep.subr.mxu0 0.0
    %1309 = vmatpush1.msra.mxu0 0.0
    %1310 = vmatprep.subr.mxu0 0.0
    %1311 = vmatpush1.msra.mxu0 0.0
    %1312 = vmatprep.subr.mxu0 0.0
    %1313 = vmatpush1.msra.mxu0 0.0
    %1314 = vmatprep.subr.mxu0 0.0
    %1315 = vmatpush1.msra.mxu0 0.0
    %1316 = vmatprep.subr.mxu0 0.0
    %1317 = vmatpush1.msra.mxu0 0.0
    %1318 = vmatprep.subr.mxu0 0.0
    %1319 = vmatpush1.msra.mxu0 0.0
    %1320 = vmatprep.subr.mxu0 0.0
    %1321 = vmatpush1.msra.mxu0 0.0
    %1322 = vmatprep.subr.mxu0 0.0
    %1323 = vmatpush1.msra.mxu0 0.0
    %1324 = vmatprep.subr.mxu0 0.0
    %1325 = vmatpush1.msra.mxu0 0.0
    %1326 = vmatprep.subr.mxu0 0.0
    %1327 = vmatpush1.msra.mxu0 0.0
    %1328 = vmatprep.subr.mxu0 0.0
    %1329 = vmatpush1.msra.mxu0 0.0
    %1330 = vmatprep.subr.mxu0 0.0
    %1331 = vmatpush1.msra.mxu0 0.0
    %1332 = vmatprep.subr.mxu0 0.0
    %1333 = vmatpush1.msra.mxu0 0.0
    %1334 = vmatprep.subr.mxu0 0.0
    %1335 = vmatpush1.msra.mxu0 0.0
    %1336 = vmatprep.subr.mxu0 0.0
    %1337 = vmatpush1.msra.mxu0 0.0
    %1338 = vmatprep.subr.mxu0 0.0
    %1339 = vmatpush1.msra.mxu0 0.0
    %1340 = vmatprep.subr.mxu0 0.0
    %1341 = vmatpush1.msra.mxu0 0.0
    %1342 = vmatprep.subr.mxu0 0.0
    %1343 = vmatpush1.msra.mxu0 0.0
    %1344 = vmatprep.subr.mxu0 0.0
    %1345 = vmatpush1.msra.mxu0 0.0
    %1346 = vmatprep.subr.mxu0 0.0
    %1347 = vmatpush1.msra.mxu0 0.0
    %1348 = vmatprep.subr.mxu0 0.0
    %1349 = vmatpush1.msra.mxu0 0.0
    %1350 = vmatprep.subr.mxu0 0.0
    %1351 = vmatpush1.msra.mxu0 0.0
    %1352 = vmatprep.subr.mxu0 0.0
    %1353 = vmatpush1.msra.mxu0 0.0
    %1354 = vmatprep.subr.mxu0 0.0
    %1355 = vmatpush1.msra.mxu0 0.0
    %1356 = vmatprep.subr.mxu0 0.0
    %1357 = vmatpush1.msra.mxu0 0.0
    %1358 = vmatprep.subr.mxu0 0.0
    %1359 = vmatpush1.msra.mxu0 0.0
    %1360 = vmatprep.subr.mxu0 0.0
    %1361 = vmatpush1.msra.mxu0 0.0
    %1362 = vmatprep.subr.mxu0 0.0
    %1363 = vmatpush1.msra.mxu0 0.0
    %1364 = vmatprep.mubr.f32.mxu0 0.0
    %1365 = vmatmul.mubr.f32.gmra.mrb[0].mxu0 %v1298
    %v1366 = vpop.f32.mrb[0].mxu0
    %v1367 = vadd.f32 0.0, %v1366
    %v1368 = vpop.f32.mrb[0].mxu0
    %1369 = vdwg.mxu0
    %v1370 = vadd.f32 %v495, %v1367
    %v1371 = vxor.u32 %v1370, 2147483648
    %v1372 = vmul.f32 %v1371, 1.442695
    %v1373 = vpow.pop %v1372
    %v1374 = vadd.f32 %v1373, 1.0
    %v1375 = vrcp.pop %v1374
    %v1376 = vmul.f32 1.0, %v1375
    %v1377 = vadd.f32 %v1367, %v970
    %1379 = vrot.lane.b32.xlu0 %v1377, 64
    %v1380 = vpop.permute.xlu0 %1379
    %v1382 = vmul.f32 %v1376, %v1380
    %1384 = vrot.lane.b32.xlu0 %v1382, 64
    %v1385 = vpop.permute.xlu0 %1384
    %v1387 = vadd.f32 %v495, %v1385
    %v1388 = vtanh.pop %v1387
    %v1389 = vsub.f32 1.0, %v1376
    %1391 = vrot.lane.b32.xlu0 %v1388, 96
    %v1392 = vpop.permute.xlu0 %1391
    %v1394 = vmul.f32 %v1389, %v1392
    %v1395 = vmul.f32 %v1376, %v1194
    %v1396 = vadd.f32 %v1394, %v1395
    %1398 = vrot.lane.b32.xlu0 %v1396, 96
    %v1399 = vpop.permute.xlu0 %1398
    %v1401 = vsel %vm888, %v1399, %v1297
    %v1403 = vsel %vm997, %v1401, 0
    %1405 = vmatprep.subr.mxu0 0.0
    %1406 = vmatpush1.msra.mxu0 %v232
    %1407 = vmatprep.subr.mxu0 0.0
    %1408 = vmatpush1.msra.mxu0 %v233
    %1409 = vmatprep.subr.mxu0 0.0
    %1410 = vmatpush1.msra.mxu0 %v234
    %1411 = vmatprep.subr.mxu0 0.0
    %1412 = vmatpush1.msra.mxu0 %v235
    %1413 = vmatprep.subr.mxu0 0.0
    %1414 = vmatpush1.msra.mxu0 %v236
    %1415 = vmatprep.subr.mxu0 0.0
    %1416 = vmatpush1.msra.mxu0 %v237
    %1417 = vmatprep.subr.mxu0 0.0
    %1418 = vmatpush1.msra.mxu0 %v238
    %1419 = vmatprep.subr.mxu0 0.0
    %1420 = vmatpush1.msra.mxu0 %v239
    %1421 = vmatprep.subr.mxu0 0.0
    %1422 = vmatpush1.msra.mxu0 0.0
    %1423 = vmatprep.subr.mxu0 0.0
    %1424 = vmatpush1.msra.mxu0 0.0
    %1425 = vmatprep.subr.mxu0 0.0
    %1426 = vmatpush1.msra.mxu0 0.0
    %1427 = vmatprep.subr.mxu0 0.0
    %1428 = vmatpush1.msra.mxu0 0.0
    %1429 = vmatprep.subr.mxu0 0.0
    %1430 = vmatpush1.msra.mxu0 0.0
    %1431 = vmatprep.subr.mxu0 0.0
    %1432 = vmatpush1.msra.mxu0 0.0
    %1433 = vmatprep.subr.mxu0 0.0
    %1434 = vmatpush1.msra.mxu0 0.0
    %1435 = vmatprep.subr.mxu0 0.0
    %1436 = vmatpush1.msra.mxu0 0.0
    %1437 = vmatprep.subr.mxu0 0.0
    %1438 = vmatpush1.msra.mxu0 0.0
    %1439 = vmatprep.subr.mxu0 0.0
    %1440 = vmatpush1.msra.mxu0 0.0
    %1441 = vmatprep.subr.mxu0 0.0
    %1442 = vmatpush1.msra.mxu0 0.0
    %1443 = vmatprep.subr.mxu0 0.0
    %1444 = vmatpush1.msra.mxu0 0.0
    %1445 = vmatprep.subr.mxu0 0.0
    %1446 = vmatpush1.msra.mxu0 0.0
    %1447 = vmatprep.subr.mxu0 0.0
    %1448 = vmatpush1.msra.mxu0 0.0
    %1449 = vmatprep.subr.mxu0 0.0
    %1450 = vmatpush1.msra.mxu0 0.0
    %1451 = vmatprep.subr.mxu0 0.0
    %1452 = vmatpush1.msra.mxu0 0.0
    %1453 = vmatprep.subr.mxu0 0.0
    %1454 = vmatpush1.msra.mxu0 0.0
    %1455 = vmatprep.subr.mxu0 0.0
    %1456 = vmatpush1.msra.mxu0 0.0
    %1457 = vmatprep.subr.mxu0 0.0
    %1458 = vmatpush1.msra.mxu0 0.0
    %1459 = vmatprep.subr.mxu0 0.0
    %1460 = vmatpush1.msra.mxu0 0.0
    %1461 = vmatprep.subr.mxu0 0.0
    %1462 = vmatpush1.msra.mxu0 0.0
    %1463 = vmatprep.subr.mxu0 0.0
    %1464 = vmatpush1.msra.mxu0 0.0
    %1465 = vmatprep.subr.mxu0 0.0
    %1466 = vmatpush1.msra.mxu0 0.0
    %1467 = vmatprep.subr.mxu0 0.0
    %1468 = vmatpush1.msra.mxu0 0.0
    %1469 = vmatprep.mubr.f32.mxu0 0.0
    %1470 = vmatmul.mubr.f32.gmra.mrb[0].mxu0 %v1403
    %v1471 = vpop.f32.mrb[0].mxu0
    %v1472 = vadd.f32 %v256, %v1471
    %v1473 = vpop.f32.mrb[0].mxu0
    %1474 = vdwg.mxu0
    %v1475 = vxor.u32 %v1472, 2147483648
    %v1476 = vmul.f32 %v1475, 1.442695
    %v1477 = vpow.pop %v1476
    %v1478 = vadd.f32 %v1477, 1.0
    %v1479 = vrcp.pop %v1478
    %v1480 = vmul.f32 1.0, %v1479
    %1482 = vrot.lane.b32.xlu0 %v1472, 32
    %v1483 = vpop.permute.xlu0 %1482
    %v1485 = vmul.f32 %v1480, %v1483
    %1487 = vrot.lane.b32.xlu0 %v1485, 64
    %v1488 = vpop.permute.xlu0 %1487
    %v1490 = vadd.f32 %v1472, %v1488
    %v1491 = vtanh.pop %v1490
    %v1492 = vsub.f32 1.0, %v1480
    %1494 = vrot.lane.b32.xlu0 %v1491, 96
    %v1495 = vpop.permute.xlu0 %1494
    %v1497 = vmul.f32 %v1492, %v1495
    %v1498 = vmul.f32 %v1480, %v1297
    %v1499 = vadd.f32 %v1497, %v1498
    %v1500 = vsel %vm888, %v1399, 0
    %1502 = vmatprep.subr.mxu0 0.0
    %1503 = vmatpush1.msra.mxu0 %v226
    %1504 = vmatprep.subr.mxu0 0.0
    %1505 = vmatpush1.msra.mxu0 %v227
    %1506 = vmatprep.subr.mxu0 0.0
    %1507 = vmatpush1.msra.mxu0 %v228
    %1508 = vmatprep.subr.mxu0 0.0
    %1509 = vmatpush1.msra.mxu0 %v229
    %1510 = vmatprep.subr.mxu0 0.0
    %1511 = vmatpush1.msra.mxu0 0.0
    %1512 = vmatprep.subr.mxu0 0.0
    %1513 = vmatpush1.msra.mxu0 0.0
    %1514 = vmatprep.subr.mxu0 0.0
    %1515 = vmatpush1.msra.mxu0 0.0
    %1516 = vmatprep.subr.mxu0 0.0
    %1517 = vmatpush1.msra.mxu0 0.0
    %1518 = vmatprep.subr.mxu0 0.0
    %1519 = vmatpush1.msra.mxu0 0.0
    %1520 = vmatprep.subr.mxu0 0.0
    %1521 = vmatpush1.msra.mxu0 0.0
    %1522 = vmatprep.subr.mxu0 0.0
    %1523 = vmatpush1.msra.mxu0 0.0
    %1524 = vmatprep.subr.mxu0 0.0
    %1525 = vmatpush1.msra.mxu0 0.0
    %1526 = vmatprep.subr.mxu0 0.0
    %1527 = vmatpush1.msra.mxu0 0.0
    %1528 = vmatprep.subr.mxu0 0.0
    %1529 = vmatpush1.msra.mxu0 0.0
    %1530 = vmatprep.subr.mxu0 0.0
    %1531 = vmatpush1.msra.mxu0 0.0
    %1532 = vmatprep.subr.mxu0 0.0
    %1533 = vmatpush1.msra.mxu0 0.0
    %1534 = vmatprep.subr.mxu0 0.0
    %1535 = vmatpush1.msra.mxu0 0.0
    %1536 = vmatprep.subr.mxu0 0.0
    %1537 = vmatpush1.msra.mxu0 0.0
    %1538 = vmatprep.subr.mxu0 0.0
    %1539 = vmatpush1.msra.mxu0 0.0
    %1540 = vmatprep.subr.mxu0 0.0
    %1541 = vmatpush1.msra.mxu0 0.0
    %1542 = vmatprep.subr.mxu0 0.0
    %1543 = vmatpush1.msra.mxu0 0.0
    %1544 = vmatprep.subr.mxu0 0.0
    %1545 = vmatpush1.msra.mxu0 0.0
    %1546 = vmatprep.subr.mxu0 0.0
    %1547 = vmatpush1.msra.mxu0 0.0
    %1548 = vmatprep.subr.mxu0 0.0
    %1549 = vmatpush1.msra.mxu0 0.0
    %1550 = vmatprep.subr.mxu0 0.0
    %1551 = vmatpush1.msra.mxu0 0.0
    %1552 = vmatprep.subr.mxu0 0.0
    %1553 = vmatpush1.msra.mxu0 0.0
    %1554 = vmatprep.subr.mxu0 0.0
    %1555 = vmatpush1.msra.mxu0 0.0
    %1556 = vmatprep.subr.mxu0 0.0
    %1557 = vmatpush1.msra.mxu0 0.0
    %1558 = vmatprep.subr.mxu0 0.0
    %1559 = vmatpush1.msra.mxu0 0.0
    %1560 = vmatprep.subr.mxu0 0.0
    %1561 = vmatpush1.msra.mxu0 0.0
    %1562 = vmatprep.subr.mxu0 0.0
    %1563 = vmatpush1.msra.mxu0 0.0
    %1564 = vmatprep.subr.mxu0 0.0
    %1565 = vmatpush1.msra.mxu0 0.0
    %1566 = vmatprep.mubr.f32.mxu0 0.0
    %1567 = vmatmul.mubr.f32.gmra.mrb[0].mxu0 %v1500
    %v1568 = vpop.f32.mrb[0].mxu0
    %v1569 = vadd.f32 0.0, %v1568
    %v1570 = vpop.f32.mrb[0].mxu0
    %1571 = vdwg.mxu0
    %v1572 = vadd.f32 %v573, %v1569
    %v1573 = vxor.u32 %v1572, 2147483648
    %v1574 = vmul.f32 %v1573, 1.442695
    %v1575 = vpow.pop %v1574
    %v1576 = vadd.f32 %v1575, 1.0
    %v1577 = vrcp.pop %v1576
    %v1578 = vmul.f32 1.0, %v1577
    %v1579 = vadd.f32 %v1569, %v970
    %1581 = vrot.lane.b32.xlu0 %v1579, 64
    %v1582 = vpop.permute.xlu0 %1581
    %v1584 = vmul.f32 %v1578, %v1582
    %1586 = vrot.lane.b32.xlu0 %v1584, 64
    %v1587 = vpop.permute.xlu0 %1586
    %v1589 = vadd.f32 %v573, %v1587
    %v1590 = vtanh.pop %v1589
    %v1591 = vsub.f32 1.0, %v1578
    %1593 = vrot.lane.b32.xlu0 %v1590, 96
    %v1594 = vpop.permute.xlu0 %1593
    %v1596 = vmul.f32 %v1591, %v1594
    %v1597 = vmul.f32 %v1578, %v1396
    %v1598 = vadd.f32 %v1596, %v1597
    %1600 = vrot.lane.b32.xlu0 %v1598, 96
    %v1601 = vpop.permute.xlu0 %1600
    %v1603 = vsel %vm888, %v1601, %v1499
    %v1605 = vsel %vm997, %v1603, 0
    %1607 = vmatprep.subr.mxu0 0.0
    %1608 = vmatpush1.msra.mxu0 %v232
    %1609 = vmatprep.subr.mxu0 0.0
    %1610 = vmatpush1.msra.mxu0 %v233
    %1611 = vmatprep.subr.mxu0 0.0
    %1612 = vmatpush1.msra.mxu0 %v234
    %1613 = vmatprep.subr.mxu0 0.0
    %1614 = vmatpush1.msra.mxu0 %v235
    %1615 = vmatprep.subr.mxu0 0.0
    %1616 = vmatpush1.msra.mxu0 %v236
    %1617 = vmatprep.subr.mxu0 0.0
    %1618 = vmatpush1.msra.mxu0 %v237
    %1619 = vmatprep.subr.mxu0 0.0
    %1620 = vmatpush1.msra.mxu0 %v238
    %1621 = vmatprep.subr.mxu0 0.0
    %1622 = vmatpush1.msra.mxu0 %v239
    %1623 = vmatprep.subr.mxu0 0.0
    %1624 = vmatpush1.msra.mxu0 0.0
    %1625 = vmatprep.subr.mxu0 0.0
    %1626 = vmatpush1.msra.mxu0 0.0
    %1627 = vmatprep.subr.mxu0 0.0
    %1628 = vmatpush1.msra.mxu0 0.0
    %1629 = vmatprep.subr.mxu0 0.0
    %1630 = vmatpush1.msra.mxu0 0.0
    %1631 = vmatprep.subr.mxu0 0.0
    %1632 = vmatpush1.msra.mxu0 0.0
    %1633 = vmatprep.subr.mxu0 0.0
    %1634 = vmatpush1.msra.mxu0 0.0
    %1635 = vmatprep.subr.mxu0 0.0
    %1636 = vmatpush1.msra.mxu0 0.0
    %1637 = vmatprep.subr.mxu0 0.0
    %1638 = vmatpush1.msra.mxu0 0.0
    %1639 = vmatprep.subr.mxu0 0.0
    %1640 = vmatpush1.msra.mxu0 0.0
    %1641 = vmatprep.subr.mxu0 0.0
    %1642 = vmatpush1.msra.mxu0 0.0
    %1643 = vmatprep.subr.mxu0 0.0
    %1644 = vmatpush1.msra.mxu0 0.0
    %1645 = vmatprep.subr.mxu0 0.0
    %1646 = vmatpush1.msra.mxu0 0.0
    %1647 = vmatprep.subr.mxu0 0.0
    %1648 = vmatpush1.msra.mxu0 0.0
    %1649 = vmatprep.subr.mxu0 0.0
    %1650 = vmatpush1.msra.mxu0 0.0
    %1651 = vmatprep.subr.mxu0 0.0
    %1652 = vmatpush1.msra.mxu0 0.0
    %1653 = vmatprep.subr.mxu0 0.0
    %1654 = vmatpush1.msra.mxu0 0.0
    %1655 = vmatprep.subr.mxu0 0.0
    %1656 = vmatpush1.msra.mxu0 0.0
    %1657 = vmatprep.subr.mxu0 0.0
    %1658 = vmatpush1.msra.mxu0 0.0
    %1659 = vmatprep.subr.mxu0 0.0
    %1660 = vmatpush1.msra.mxu0 0.0
    %1661 = vmatprep.subr.mxu0 0.0
    %1662 = vmatpush1.msra.mxu0 0.0
    %1663 = vmatprep.subr.mxu0 0.0
    %1664 = vmatpush1.msra.mxu0 0.0
    %1665 = vmatprep.subr.mxu0 0.0
    %1666 = vmatpush1.msra.mxu0 0.0
    %1667 = vmatprep.subr.mxu0 0.0
    %1668 = vmatpush1.msra.mxu0 0.0
    %1669 = vmatprep.subr.mxu0 0.0
    %1670 = vmatpush1.msra.mxu0 0.0
    %1671 = vmatprep.mubr.f32.mxu0 0.0
    %1672 = vmatmul.mubr.f32.gmra.mrb[0].mxu0 %v1605
    %v1673 = vpop.f32.mrb[0].mxu0
    %v1674 = vadd.f32 %v256, %v1673
    %v1675 = vpop.f32.mrb[0].mxu0
    %1676 = vdwg.mxu0
    %v1677 = vxor.u32 %v1674, 2147483648
    %v1678 = vmul.f32 %v1677, 1.442695
    %v1679 = vpow.pop %v1678
    %v1680 = vadd.f32 %v1679, 1.0
    %v1681 = vrcp.pop %v1680
    %v1682 = vmul.f32 1.0, %v1681
    %1684 = vrot.lane.b32.xlu0 %v1674, 32
    %v1685 = vpop.permute.xlu0 %1684
    %v1687 = vmul.f32 %v1682, %v1685
    %1689 = vrot.lane.b32.xlu0 %v1687, 64
    %v1690 = vpop.permute.xlu0 %1689
    %v1692 = vadd.f32 %v1674, %v1690
    %v1693 = vtanh.pop %v1692
    %v1694 = vsub.f32 1.0, %v1682
    %1696 = vrot.lane.b32.xlu0 %v1693, 96
    %v1697 = vpop.permute.xlu0 %1696
    %v1699 = vmul.f32 %v1694, %v1697
    %v1700 = vmul.f32 %v1682, %v1499
    %v1701 = vadd.f32 %v1699, %v1700
    %v1702 = vsel %vm888, %v1601, 0
    %1704 = vmatprep.subr.mxu0 0.0
    %1705 = vmatpush1.msra.mxu0 %v226
    %1706 = vmatprep.subr.mxu0 0.0
    %1707 = vmatpush1.msra.mxu0 %v227
    %1708 = vmatprep.subr.mxu0 0.0
    %1709 = vmatpush1.msra.mxu0 %v228
    %1710 = vmatprep.subr.mxu0 0.0
    %1711 = vmatpush1.msra.mxu0 %v229
    %1712 = vmatprep.subr.mxu0 0.0
    %1713 = vmatpush1.msra.mxu0 0.0
    %1714 = vmatprep.subr.mxu0 0.0
    %1715 = vmatpush1.msra.mxu0 0.0
    %1716 = vmatprep.subr.mxu0 0.0
    %1717 = vmatpush1.msra.mxu0 0.0
    %1718 = vmatprep.subr.mxu0 0.0
    %1719 = vmatpush1.msra.mxu0 0.0
    %1720 = vmatprep.subr.mxu0 0.0
    %1721 = vmatpush1.msra.mxu0 0.0
    %1722 = vmatprep.subr.mxu0 0.0
    %1723 = vmatpush1.msra.mxu0 0.0
    %1724 = vmatprep.subr.mxu0 0.0
    %1725 = vmatpush1.msra.mxu0 0.0
    %1726 = vmatprep.subr.mxu0 0.0
    %1727 = vmatpush1.msra.mxu0 0.0
    %1728 = vmatprep.subr.mxu0 0.0
    %1729 = vmatpush1.msra.mxu0 0.0
    %1730 = vmatprep.subr.mxu0 0.0
    %1731 = vmatpush1.msra.mxu0 0.0
    %1732 = vmatprep.subr.mxu0 0.0
    %1733 = vmatpush1.msra.mxu0 0.0
    %1734 = vmatprep.subr.mxu0 0.0
    %1735 = vmatpush1.msra.mxu0 0.0
    %1736 = vmatprep.subr.mxu0 0.0
    %1737 = vmatpush1.msra.mxu0 0.0
    %1738 = vmatprep.subr.mxu0 0.0
    %1739 = vmatpush1.msra.mxu0 0.0
    %1740 = vmatprep.subr.mxu0 0.0
    %1741 = vmatpush1.msra.mxu0 0.0
    %1742 = vmatprep.subr.mxu0 0.0
    %1743 = vmatpush1.msra.mxu0 0.0
    %1744 = vmatprep.subr.mxu0 0.0
    %1745 = vmatpush1.msra.mxu0 0.0
    %1746 = vmatprep.subr.mxu0 0.0
    %1747 = vmatpush1.msra.mxu0 0.0
    %1748 = vmatprep.subr.mxu0 0.0
    %1749 = vmatpush1.msra.mxu0 0.0
    %1750 = vmatprep.subr.mxu0 0.0
    %1751 = vmatpush1.msra.mxu0 0.0
    %1752 = vmatprep.subr.mxu0 0.0
    %1753 = vmatpush1.msra.mxu0 0.0
    %1754 = vmatprep.subr.mxu0 0.0
    %1755 = vmatpush1.msra.mxu0 0.0
    %1756 = vmatprep.subr.mxu0 0.0
    %1757 = vmatpush1.msra.mxu0 0.0
    %1758 = vmatprep.subr.mxu0 0.0
    %1759 = vmatpush1.msra.mxu0 0.0
    %1760 = vmatprep.subr.mxu0 0.0
    %1761 = vmatpush1.msra.mxu0 0.0
    %1762 = vmatprep.subr.mxu0 0.0
    %1763 = vmatpush1.msra.mxu0 0.0
    %1764 = vmatprep.subr.mxu0 0.0
    %1765 = vmatpush1.msra.mxu0 0.0
    %1766 = vmatprep.subr.mxu0 0.0
    %1767 = vmatpush1.msra.mxu0 0.0
    %1768 = vmatprep.mubr.f32.mxu0 0.0
    %1769 = vmatmul.mubr.f32.gmra.mrb[0].mxu0 %v1702
    %v1770 = vpop.f32.mrb[0].mxu0
    %v1771 = vadd.f32 0.0, %v1770
    %v1772 = vpop.f32.mrb[0].mxu0
    %1773 = vdwg.mxu0
    %v1774 = vadd.f32 %v651, %v1771
    %v1775 = vxor.u32 %v1774, 2147483648
    %v1776 = vmul.f32 %v1775, 1.442695
    %v1777 = vpow.pop %v1776
    %v1778 = vadd.f32 %v1777, 1.0
    %v1779 = vrcp.pop %v1778
    %v1780 = vmul.f32 1.0, %v1779
    %v1781 = vadd.f32 %v1771, %v970
    %1783 = vrot.lane.b32.xlu0 %v1781, 64
    %v1784 = vpop.permute.xlu0 %1783
    %v1786 = vmul.f32 %v1780, %v1784
    %1788 = vrot.lane.b32.xlu0 %v1786, 64
    %v1789 = vpop.permute.xlu0 %1788
    %v1791 = vadd.f32 %v651, %v1789
    %v1792 = vtanh.pop %v1791
    %v1793 = vsub.f32 1.0, %v1780
    %1795 = vrot.lane.b32.xlu0 %v1792, 96
    %v1796 = vpop.permute.xlu0 %1795
    %v1798 = vmul.f32 %v1793, %v1796
    %v1799 = vmul.f32 %v1780, %v1598
    %v1800 = vadd.f32 %v1798, %v1799
    %1802 = vrot.lane.b32.xlu0 %v1800, 96
    %v1803 = vpop.permute.xlu0 %1802
    %v1805 = vsel %vm888, %v1803, %v1701
    %v1807 = vsel %vm997, %v1805, 0
    %1809 = vmatprep.subr.mxu0 0.0
    %1810 = vmatpush1.msra.mxu0 %v232
    %1811 = vmatprep.subr.mxu0 0.0
    %1812 = vmatpush1.msra.mxu0 %v233
    %1813 = vmatprep.subr.mxu0 0.0
    %1814 = vmatpush1.msra.mxu0 %v234
    %1815 = vmatprep.subr.mxu0 0.0
    %1816 = vmatpush1.msra.mxu0 %v235
    %1817 = vmatprep.subr.mxu0 0.0
    %1818 = vmatpush1.msra.mxu0 %v236
    %1819 = vmatprep.subr.mxu0 0.0
    %1820 = vmatpush1.msra.mxu0 %v237
    %1821 = vmatprep.subr.mxu0 0.0
    %1822 = vmatpush1.msra.mxu0 %v238
    %1823 = vmatprep.subr.mxu0 0.0
    %1824 = vmatpush1.msra.mxu0 %v239
    %1825 = vmatprep.subr.mxu0 0.0
    %1826 = vmatpush1.msra.mxu0 0.0
    %1827 = vmatprep.subr.mxu0 0.0
    %1828 = vmatpush1.msra.mxu0 0.0
    %1829 = vmatprep.subr.mxu0 0.0
    %1830 = vmatpush1.msra.mxu0 0.0
    %1831 = vmatprep.subr.mxu0 0.0
    %1832 = vmatpush1.msra.mxu0 0.0
    %1833 = vmatprep.subr.mxu0 0.0
    %1834 = vmatpush1.msra.mxu0 0.0
    %1835 = vmatprep.subr.mxu0 0.0
    %1836 = vmatpush1.msra.mxu0 0.0
    %1837 = vmatprep.subr.mxu0 0.0
    %1838 = vmatpush1.msra.mxu0 0.0
    %1839 = vmatprep.subr.mxu0 0.0
    %1840 = vmatpush1.msra.mxu0 0.0
    %1841 = vmatprep.subr.mxu0 0.0
    %1842 = vmatpush1.msra.mxu0 0.0
    %1843 = vmatprep.subr.mxu0 0.0
    %1844 = vmatpush1.msra.mxu0 0.0
    %1845 = vmatprep.subr.mxu0 0.0
    %1846 = vmatpush1.msra.mxu0 0.0
    %1847 = vmatprep.subr.mxu0 0.0
    %1848 = vmatpush1.msra.mxu0 0.0
    %1849 = vmatprep.subr.mxu0 0.0
    %1850 = vmatpush1.msra.mxu0 0.0
    %1851 = vmatprep.subr.mxu0 0.0
    %1852 = vmatpush1.msra.mxu0 0.0
    %1853 = vmatprep.subr.mxu0 0.0
    %1854 = vmatpush1.msra.mxu0 0.0
    %1855 = vmatprep.subr.mxu0 0.0
    %1856 = vmatpush1.msra.mxu0 0.0
    %1857 = vmatprep.subr.mxu0 0.0
    %1858 = vmatpush1.msra.mxu0 0.0
    %1859 = vmatprep.subr.mxu0 0.0
    %1860 = vmatpush1.msra.mxu0 0.0
    %1861 = vmatprep.subr.mxu0 0.0
    %1862 = vmatpush1.msra.mxu0 0.0
    %1863 = vmatprep.subr.mxu0 0.0
    %1864 = vmatpush1.msra.mxu0 0.0
    %1865 = vmatprep.subr.mxu0 0.0
    %1866 = vmatpush1.msra.mxu0 0.0
    %1867 = vmatprep.subr.mxu0 0.0
    %1868 = vmatpush1.msra.mxu0 0.0
    %1869 = vmatprep.subr.mxu0 0.0
    %1870 = vmatpush1.msra.mxu0 0.0
    %1871 = vmatprep.subr.mxu0 0.0
    %1872 = vmatpush1.msra.mxu0 0.0
    %1873 = vmatprep.mubr.f32.mxu0 0.0
    %1874 = vmatmul.mubr.f32.gmra.mrb[0].mxu0 %v1807
    %v1875 = vpop.f32.mrb[0].mxu0
    %v1876 = vadd.f32 %v256, %v1875
    %v1877 = vpop.f32.mrb[0].mxu0
    %1878 = vdwg.mxu0
    %v1879 = vxor.u32 %v1876, 2147483648
    %v1880 = vmul.f32 %v1879, 1.442695
    %v1881 = vpow.pop %v1880
    %v1882 = vadd.f32 %v1881, 1.0
    %v1883 = vrcp.pop %v1882
    %v1884 = vmul.f32 1.0, %v1883
    %1886 = vrot.lane.b32.xlu0 %v1876, 32
    %v1887 = vpop.permute.xlu0 %1886
    %v1889 = vmul.f32 %v1884, %v1887
    %1891 = vrot.lane.b32.xlu0 %v1889, 64
    %v1892 = vpop.permute.xlu0 %1891
    %v1894 = vadd.f32 %v1876, %v1892
    %v1895 = vtanh.pop %v1894
    %v1896 = vsub.f32 1.0, %v1884
    %1898 = vrot.lane.b32.xlu0 %v1895, 96
    %v1899 = vpop.permute.xlu0 %1898
    %v1901 = vmul.f32 %v1896, %v1899
    %v1902 = vmul.f32 %v1884, %v1701
    %v1903 = vadd.f32 %v1901, %v1902
    %v1904 = vsel %vm888, %v1803, 0
    %1906 = vmatprep.subr.mxu0 0.0
    %1907 = vmatpush1.msra.mxu0 %v226
    %1908 = vmatprep.subr.mxu0 0.0
    %1909 = vmatpush1.msra.mxu0 %v227
    %1910 = vmatprep.subr.mxu0 0.0
    %1911 = vmatpush1.msra.mxu0 %v228
    %1912 = vmatprep.subr.mxu0 0.0
    %1913 = vmatpush1.msra.mxu0 %v229
    %1914 = vmatprep.subr.mxu0 0.0
    %1915 = vmatpush1.msra.mxu0 0.0
    %1916 = vmatprep.subr.mxu0 0.0
    %1917 = vmatpush1.msra.mxu0 0.0
    %1918 = vmatprep.subr.mxu0 0.0
    %1919 = vmatpush1.msra.mxu0 0.0
    %1920 = vmatprep.subr.mxu0 0.0
    %1921 = vmatpush1.msra.mxu0 0.0
    %1922 = vmatprep.subr.mxu0 0.0
    %1923 = vmatpush1.msra.mxu0 0.0
    %1924 = vmatprep.subr.mxu0 0.0
    %1925 = vmatpush1.msra.mxu0 0.0
    %1926 = vmatprep.subr.mxu0 0.0
    %1927 = vmatpush1.msra.mxu0 0.0
    %1928 = vmatprep.subr.mxu0 0.0
    %1929 = vmatpush1.msra.mxu0 0.0
    %1930 = vmatprep.subr.mxu0 0.0
    %1931 = vmatpush1.msra.mxu0 0.0
    %1932 = vmatprep.subr.mxu0 0.0
    %1933 = vmatpush1.msra.mxu0 0.0
    %1934 = vmatprep.subr.mxu0 0.0
    %1935 = vmatpush1.msra.mxu0 0.0
    %1936 = vmatprep.subr.mxu0 0.0
    %1937 = vmatpush1.msra.mxu0 0.0
    %1938 = vmatprep.subr.mxu0 0.0
    %1939 = vmatpush1.msra.mxu0 0.0
    %1940 = vmatprep.subr.mxu0 0.0
    %1941 = vmatpush1.msra.mxu0 0.0
    %1942 = vmatprep.subr.mxu0 0.0
    %1943 = vmatpush1.msra.mxu0 0.0
    %1944 = vmatprep.subr.mxu0 0.0
    %1945 = vmatpush1.msra.mxu0 0.0
    %1946 = vmatprep.subr.mxu0 0.0
    %1947 = vmatpush1.msra.mxu0 0.0
    %1948 = vmatprep.subr.mxu0 0.0
    %1949 = vmatpush1.msra.mxu0 0.0
    %1950 = vmatprep.subr.mxu0 0.0
    %1951 = vmatpush1.msra.mxu0 0.0
    %1952 = vmatprep.subr.mxu0 0.0
    %1953 = vmatpush1.msra.mxu0 0.0
    %1954 = vmatprep.subr.mxu0 0.0
    %1955 = vmatpush1.msra.mxu0 0.0
    %1956 = vmatprep.subr.mxu0 0.0
    %1957 = vmatpush1.msra.mxu0 0.0
    %1958 = vmatprep.subr.mxu0 0.0
    %1959 = vmatpush1.msra.mxu0 0.0
    %1960 = vmatprep.subr.mxu0 0.0
    %1961 = vmatpush1.msra.mxu0 0.0
    %1962 = vmatprep.subr.mxu0 0.0
    %1963 = vmatpush1.msra.mxu0 0.0
    %1964 = vmatprep.subr.mxu0 0.0
    %1965 = vmatpush1.msra.mxu0 0.0
    %1966 = vmatprep.subr.mxu0 0.0
    %1967 = vmatpush1.msra.mxu0 0.0
    %1968 = vmatprep.subr.mxu0 0.0
    %1969 = vmatpush1.msra.mxu0 0.0
    %1970 = vmatprep.mubr.f32.mxu0 0.0
    %1971 = vmatmul.mubr.f32.gmra.mrb[0].mxu0 %v1904
    %v1972 = vpop.f32.mrb[0].mxu0
    %v1973 = vadd.f32 0.0, %v1972
    %v1974 = vpop.f32.mrb[0].mxu0
    %1975 = vdwg.mxu0
    %v1976 = vadd.f32 %v729, %v1973
    %v1977 = vxor.u32 %v1976, 2147483648
    %v1978 = vmul.f32 %v1977, 1.442695
    %v1979 = vpow.pop %v1978
    %v1980 = vadd.f32 %v1979, 1.0
    %v1981 = vrcp.pop %v1980
    %v1982 = vmul.f32 1.0, %v1981
    %v1983 = vadd.f32 %v1973, %v970
    %1985 = vrot.lane.b32.xlu0 %v1983, 64
    %v1986 = vpop.permute.xlu0 %1985
    %v1988 = vmul.f32 %v1982, %v1986
    %1990 = vrot.lane.b32.xlu0 %v1988, 64
    %v1991 = vpop.permute.xlu0 %1990
    %v1993 = vadd.f32 %v729, %v1991
    %v1994 = vtanh.pop %v1993
    %v1995 = vsub.f32 1.0, %v1982
    %1997 = vrot.lane.b32.xlu0 %v1994, 96
    %v1998 = vpop.permute.xlu0 %1997
    %v2000 = vmul.f32 %v1995, %v1998
    %v2001 = vmul.f32 %v1982, %v1800
    %v2002 = vadd.f32 %v2000, %v2001
    %2004 = vrot.lane.b32.xlu0 %v2002, 96
    %v2005 = vpop.permute.xlu0 %2004
    %v2007 = vsel %vm888, %v2005, %v1903
    %v2009 = vsel %vm997, %v2007, 0
    %2011 = vmatprep.subr.mxu0 0.0
    %2012 = vmatpush1.msra.mxu0 %v232
    %2013 = vmatprep.subr.mxu0 0.0
    %2014 = vmatpush1.msra.mxu0 %v233
    %2015 = vmatprep.subr.mxu0 0.0
    %2016 = vmatpush1.msra.mxu0 %v234
    %2017 = vmatprep.subr.mxu0 0.0
    %2018 = vmatpush1.msra.mxu0 %v235
    %2019 = vmatprep.subr.mxu0 0.0
    %2020 = vmatpush1.msra.mxu0 %v236
    %2021 = vmatprep.subr.mxu0 0.0
    %2022 = vmatpush1.msra.mxu0 %v237
    %2023 = vmatprep.subr.mxu0 0.0
    %2024 = vmatpush1.msra.mxu0 %v238
    %2025 = vmatprep.subr.mxu0 0.0
    %2026 = vmatpush1.msra.mxu0 %v239
    %2027 = vmatprep.subr.mxu0 0.0
    %2028 = vmatpush1.msra.mxu0 0.0
    %2029 = vmatprep.subr.mxu0 0.0
    %2030 = vmatpush1.msra.mxu0 0.0
    %2031 = vmatprep.subr.mxu0 0.0
    %2032 = vmatpush1.msra.mxu0 0.0
    %2033 = vmatprep.subr.mxu0 0.0
    %2034 = vmatpush1.msra.mxu0 0.0
    %2035 = vmatprep.subr.mxu0 0.0
    %2036 = vmatpush1.msra.mxu0 0.0
    %2037 = vmatprep.subr.mxu0 0.0
    %2038 = vmatpush1.msra.mxu0 0.0
    %2039 = vmatprep.subr.mxu0 0.0
    %2040 = vmatpush1.msra.mxu0 0.0
    %2041 = vmatprep.subr.mxu0 0.0
    %2042 = vmatpush1.msra.mxu0 0.0
    %2043 = vmatprep.subr.mxu0 0.0
    %2044 = vmatpush1.msra.mxu0 0.0
    %2045 = vmatprep.subr.mxu0 0.0
    %2046 = vmatpush1.msra.mxu0 0.0
    %2047 = vmatprep.subr.mxu0 0.0
    %2048 = vmatpush1.msra.mxu0 0.0
    %2049 = vmatprep.subr.mxu0 0.0
    %2050 = vmatpush1.msra.mxu0 0.0
    %2051 = vmatprep.subr.mxu0 0.0
    %2052 = vmatpush1.msra.mxu0 0.0
    %2053 = vmatprep.subr.mxu0 0.0
    %2054 = vmatpush1.msra.mxu0 0.0
    %2055 = vmatprep.subr.mxu0 0.0
    %2056 = vmatpush1.msra.mxu0 0.0
    %2057 = vmatprep.subr.mxu0 0.0
    %2058 = vmatpush1.msra.mxu0 0.0
    %2059 = vmatprep.subr.mxu0 0.0
    %2060 = vmatpush1.msra.mxu0 0.0
    %2061 = vmatprep.subr.mxu0 0.0
    %2062 = vmatpush1.msra.mxu0 0.0
    %2063 = vmatprep.subr.mxu0 0.0
    %2064 = vmatpush1.msra.mxu0 0.0
    %2065 = vmatprep.subr.mxu0 0.0
    %2066 = vmatpush1.msra.mxu0 0.0
    %2067 = vmatprep.subr.mxu0 0.0
    %2068 = vmatpush1.msra.mxu0 0.0
    %2069 = vmatprep.subr.mxu0 0.0
    %2070 = vmatpush1.msra.mxu0 0.0
    %2071 = vmatprep.subr.mxu0 0.0
    %2072 = vmatpush1.msra.mxu0 0.0
    %2073 = vmatprep.subr.mxu0 0.0
    %2074 = vmatpush1.msra.mxu0 0.0
    %2075 = vmatprep.mubr.f32.mxu0 0.0
    %2076 = vmatmul.mubr.f32.gmra.mrb[0].mxu0 %v2009
    %v2077 = vpop.f32.mrb[0].mxu0
    %v2078 = vadd.f32 %v256, %v2077
    %v2079 = vpop.f32.mrb[0].mxu0
    %2080 = vdwg.mxu0
    %v2081 = vxor.u32 %v2078, 2147483648
    %v2082 = vmul.f32 %v2081, 1.442695
    %v2083 = vpow.pop %v2082
    %v2084 = vadd.f32 %v2083, 1.0
    %v2085 = vrcp.pop %v2084
    %v2086 = vmul.f32 1.0, %v2085
    %2088 = vrot.lane.b32.xlu0 %v2078, 32
    %v2089 = vpop.permute.xlu0 %2088
    %v2091 = vmul.f32 %v2086, %v2089
    %2093 = vrot.lane.b32.xlu0 %v2091, 64
    %v2094 = vpop.permute.xlu0 %2093
    %v2096 = vadd.f32 %v2078, %v2094
    %v2097 = vtanh.pop %v2096
    %v2098 = vsub.f32 1.0, %v2086
    %2100 = vrot.lane.b32.xlu0 %v2097, 96
    %v2101 = vpop.permute.xlu0 %2100
    %v2103 = vmul.f32 %v2098, %v2101
    %v2104 = vmul.f32 %v2086, %v1903
    %v2105 = vadd.f32 %v2103, %v2104
    %v2106 = vsel %vm888, %v2005, 0
    %2108 = vmatprep.subr.mxu0 0.0
    %2109 = vmatpush1.msra.mxu0 %v226
    %2110 = vmatprep.subr.mxu0 0.0
    %2111 = vmatpush1.msra.mxu0 %v227
    %2112 = vmatprep.subr.mxu0 0.0
    %2113 = vmatpush1.msra.mxu0 %v228
    %2114 = vmatprep.subr.mxu0 0.0
    %2115 = vmatpush1.msra.mxu0 %v229
    %2116 = vmatprep.subr.mxu0 0.0
    %2117 = vmatpush1.msra.mxu0 0.0
    %2118 = vmatprep.subr.mxu0 0.0
    %2119 = vmatpush1.msra.mxu0 0.0
    %2120 = vmatprep.subr.mxu0 0.0
    %2121 = vmatpush1.msra.mxu0 0.0
    %2122 = vmatprep.subr.mxu0 0.0
    %2123 = vmatpush1.msra.mxu0 0.0
    %2124 = vmatprep.subr.mxu0 0.0
    %2125 = vmatpush1.msra.mxu0 0.0
    %2126 = vmatprep.subr.mxu0 0.0
    %2127 = vmatpush1.msra.mxu0 0.0
    %2128 = vmatprep.subr.mxu0 0.0
    %2129 = vmatpush1.msra.mxu0 0.0
    %2130 = vmatprep.subr.mxu0 0.0
    %2131 = vmatpush1.msra.mxu0 0.0
    %2132 = vmatprep.subr.mxu0 0.0
    %2133 = vmatpush1.msra.mxu0 0.0
    %2134 = vmatprep.subr.mxu0 0.0
    %2135 = vmatpush1.msra.mxu0 0.0
    %2136 = vmatprep.subr.mxu0 0.0
    %2137 = vmatpush1.msra.mxu0 0.0
    %2138 = vmatprep.subr.mxu0 0.0
    %2139 = vmatpush1.msra.mxu0 0.0
    %2140 = vmatprep.subr.mxu0 0.0
    %2141 = vmatpush1.msra.mxu0 0.0
    %2142 = vmatprep.subr.mxu0 0.0
    %2143 = vmatpush1.msra.mxu0 0.0
    %2144 = vmatprep.subr.mxu0 0.0
    %2145 = vmatpush1.msra.mxu0 0.0
    %2146 = vmatprep.subr.mxu0 0.0
    %2147 = vmatpush1.msra.mxu0 0.0
    %2148 = vmatprep.subr.mxu0 0.0
    %2149 = vmatpush1.msra.mxu0 0.0
    %2150 = vmatprep.subr.mxu0 0.0
    %2151 = vmatpush1.msra.mxu0 0.0
    %2152 = vmatprep.subr.mxu0 0.0
    %2153 = vmatpush1.msra.mxu0 0.0
    %2154 = vmatprep.subr.mxu0 0.0
    %2155 = vmatpush1.msra.mxu0 0.0
    %2156 = vmatprep.subr.mxu0 0.0
    %2157 = vmatpush1.msra.mxu0 0.0
    %2158 = vmatprep.subr.mxu0 0.0
    %2159 = vmatpush1.msra.mxu0 0.0
    %2160 = vmatprep.subr.mxu0 0.0
    %2161 = vmatpush1.msra.mxu0 0.0
    %2162 = vmatprep.subr.mxu0 0.0
    %2163 = vmatpush1.msra.mxu0 0.0
    %2164 = vmatprep.subr.mxu0 0.0
    %2165 = vmatpush1.msra.mxu0 0.0
    %2166 = vmatprep.subr.mxu0 0.0
    %2167 = vmatpush1.msra.mxu0 0.0
    %2168 = vmatprep.subr.mxu0 0.0
    %2169 = vmatpush1.msra.mxu0 0.0
    %2170 = vmatprep.subr.mxu0 0.0
    %2171 = vmatpush1.msra.mxu0 0.0
    %2172 = vmatprep.mubr.f32.mxu0 0.0
    %2173 = vmatmul.mubr.f32.gmra.mrb[0].mxu0 %v2106
    %v2174 = vpop.f32.mrb[0].mxu0
    %v2175 = vadd.f32 0.0, %v2174
    %v2176 = vpop.f32.mrb[0].mxu0
    %2177 = vdwg.mxu0
    %v2178 = vadd.f32 %v807, %v2175
    %v2179 = vxor.u32 %v2178, 2147483648
    %v2180 = vmul.f32 %v2179, 1.442695
    %v2181 = vpow.pop %v2180
    %v2182 = vadd.f32 %v2181, 1.0
    %v2183 = vrcp.pop %v2182
    %v2184 = vmul.f32 1.0, %v2183
    %v2185 = vadd.f32 %v2175, %v970
    %2187 = vrot.lane.b32.xlu0 %v2185, 64
    %v2188 = vpop.permute.xlu0 %2187
    %v2190 = vmul.f32 %v2184, %v2188
    %2192 = vrot.lane.b32.xlu0 %v2190, 64
    %v2193 = vpop.permute.xlu0 %2192
    %v2195 = vadd.f32 %v807, %v2193
    %v2196 = vtanh.pop %v2195
    %v2197 = vsub.f32 1.0, %v2184
    %2199 = vrot.lane.b32.xlu0 %v2196, 96
    %v2200 = vpop.permute.xlu0 %2199
    %v2202 = vmul.f32 %v2197, %v2200
    %v2203 = vmul.f32 %v2184, %v2002
    %v2204 = vadd.f32 %v2202, %v2203
    %2206 = vrot.lane.b32.xlu0 %v2204, 96
    %v2207 = vpop.permute.xlu0 %2206
    %v2209 = vsel %vm888, %v2207, %v2105
    %v2211 = vsel %vm997, %v2209, 0
    %2213 = vmatprep.subr.mxu0 0.0
    %2214 = vmatpush1.msra.mxu0 %v232
    %2215 = vmatprep.subr.mxu0 0.0
    %2216 = vmatpush1.msra.mxu0 %v233
    %2217 = vmatprep.subr.mxu0 0.0
    %2218 = vmatpush1.msra.mxu0 %v234
    %2219 = vmatprep.subr.mxu0 0.0
    %2220 = vmatpush1.msra.mxu0 %v235
    %2221 = vmatprep.subr.mxu0 0.0
    %2222 = vmatpush1.msra.mxu0 %v236
    %2223 = vmatprep.subr.mxu0 0.0
    %2224 = vmatpush1.msra.mxu0 %v237
    %2225 = vmatprep.subr.mxu0 0.0
    %2226 = vmatpush1.msra.mxu0 %v238
    %2227 = vmatprep.subr.mxu0 0.0
    %2228 = vmatpush1.msra.mxu0 %v239
    %2229 = vmatprep.subr.mxu0 0.0
    %2230 = vmatpush1.msra.mxu0 0.0
    %2231 = vmatprep.subr.mxu0 0.0
    %2232 = vmatpush1.msra.mxu0 0.0
    %2233 = vmatprep.subr.mxu0 0.0
    %2234 = vmatpush1.msra.mxu0 0.0
    %2235 = vmatprep.subr.mxu0 0.0
    %2236 = vmatpush1.msra.mxu0 0.0
    %2237 = vmatprep.subr.mxu0 0.0
    %2238 = vmatpush1.msra.mxu0 0.0
    %2239 = vmatprep.subr.mxu0 0.0
    %2240 = vmatpush1.msra.mxu0 0.0
    %2241 = vmatprep.subr.mxu0 0.0
    %2242 = vmatpush1.msra.mxu0 0.0
    %2243 = vmatprep.subr.mxu0 0.0
    %2244 = vmatpush1.msra.mxu0 0.0
    %2245 = vmatprep.subr.mxu0 0.0
    %2246 = vmatpush1.msra.mxu0 0.0
    %2247 = vmatprep.subr.mxu0 0.0
    %2248 = vmatpush1.msra.mxu0 0.0
    %2249 = vmatprep.subr.mxu0 0.0
    %2250 = vmatpush1.msra.mxu0 0.0
    %2251 = vmatprep.subr.mxu0 0.0
    %2252 = vmatpush1.msra.mxu0 0.0
    %2253 = vmatprep.subr.mxu0 0.0
    %2254 = vmatpush1.msra.mxu0 0.0
    %2255 = vmatprep.subr.mxu0 0.0
    %2256 = vmatpush1.msra.mxu0 0.0
    %2257 = vmatprep.subr.mxu0 0.0
    %2258 = vmatpush1.msra.mxu0 0.0
    %2259 = vmatprep.subr.mxu0 0.0
    %2260 = vmatpush1.msra.mxu0 0.0
    %2261 = vmatprep.subr.mxu0 0.0
    %2262 = vmatpush1.msra.mxu0 0.0
    %2263 = vmatprep.subr.mxu0 0.0
    %2264 = vmatpush1.msra.mxu0 0.0
    %2265 = vmatprep.subr.mxu0 0.0
    %2266 = vmatpush1.msra.mxu0 0.0
    %2267 = vmatprep.subr.mxu0 0.0
    %2268 = vmatpush1.msra.mxu0 0.0
    %2269 = vmatprep.subr.mxu0 0.0
    %2270 = vmatpush1.msra.mxu0 0.0
    %2271 = vmatprep.subr.mxu0 0.0
    %2272 = vmatpush1.msra.mxu0 0.0
    %2273 = vmatprep.subr.mxu0 0.0
    %2274 = vmatpush1.msra.mxu0 0.0
    %2275 = vmatprep.subr.mxu0 0.0
    %2276 = vmatpush1.msra.mxu0 0.0
    %2277 = vmatprep.mubr.f32.mxu0 0.0
    %2278 = vmatmul.mubr.f32.gmra.mrb[0].mxu0 %v2211
    %v2279 = vpop.f32.mrb[0].mxu0
    %v2280 = vadd.f32 %v256, %v2279
    %v2281 = vpop.f32.mrb[0].mxu0
    %2282 = vdwg.mxu0
    %v2283 = vxor.u32 %v2280, 2147483648
    %v2284 = vmul.f32 %v2283, 1.442695
    %v2285 = vpow.pop %v2284
    %v2286 = vadd.f32 %v2285, 1.0
    %v2287 = vrcp.pop %v2286
    %v2288 = vmul.f32 1.0, %v2287
    %2290 = vrot.lane.b32.xlu0 %v2280, 32
    %v2291 = vpop.permute.xlu0 %2290
    %v2293 = vmul.f32 %v2288, %v2291
    %2295 = vrot.lane.b32.xlu0 %v2293, 64
    %v2296 = vpop.permute.xlu0 %2295
    %v2298 = vadd.f32 %v2280, %v2296
    %v2299 = vtanh.pop %v2298
    %v2300 = vsub.f32 1.0, %v2288
    %2302 = vrot.lane.b32.xlu0 %v2299, 96
    %v2303 = vpop.permute.xlu0 %2302
    %v2305 = vmul.f32 %v2300, %v2303
    %v2306 = vmul.f32 %v2288, %v2105
    %v2307 = vadd.f32 %v2305, %v2306
    %v2308 = vsel %vm888, %v2207, 0
    %2310 = vmatprep.subr.mxu0 0.0
    %2311 = vmatpush1.msra.mxu0 %v226
    %2312 = vmatprep.subr.mxu0 0.0
    %2313 = vmatpush1.msra.mxu0 %v227
    %2314 = vmatprep.subr.mxu0 0.0
    %2315 = vmatpush1.msra.mxu0 %v228
    %2316 = vmatprep.subr.mxu0 0.0
    %2317 = vmatpush1.msra.mxu0 %v229
    %2318 = vmatprep.subr.mxu0 0.0
    %2319 = vmatpush1.msra.mxu0 0.0
    %2320 = vmatprep.subr.mxu0 0.0
    %2321 = vmatpush1.msra.mxu0 0.0
    %2322 = vmatprep.subr.mxu0 0.0
    %2323 = vmatpush1.msra.mxu0 0.0
    %2324 = vmatprep.subr.mxu0 0.0
    %2325 = vmatpush1.msra.mxu0 0.0
    %2326 = vmatprep.subr.mxu0 0.0
    %2327 = vmatpush1.msra.mxu0 0.0
    %2328 = vmatprep.subr.mxu0 0.0
    %2329 = vmatpush1.msra.mxu0 0.0
    %2330 = vmatprep.subr.mxu0 0.0
    %2331 = vmatpush1.msra.mxu0 0.0
    %2332 = vmatprep.subr.mxu0 0.0
    %2333 = vmatpush1.msra.mxu0 0.0
    %2334 = vmatprep.subr.mxu0 0.0
    %2335 = vmatpush1.msra.mxu0 0.0
    %2336 = vmatprep.subr.mxu0 0.0
    %2337 = vmatpush1.msra.mxu0 0.0
    %2338 = vmatprep.subr.mxu0 0.0
    %2339 = vmatpush1.msra.mxu0 0.0
    %2340 = vmatprep.subr.mxu0 0.0
    %2341 = vmatpush1.msra.mxu0 0.0
    %2342 = vmatprep.subr.mxu0 0.0
    %2343 = vmatpush1.msra.mxu0 0.0
    %2344 = vmatprep.subr.mxu0 0.0
    %2345 = vmatpush1.msra.mxu0 0.0
    %2346 = vmatprep.subr.mxu0 0.0
    %2347 = vmatpush1.msra.mxu0 0.0
    %2348 = vmatprep.subr.mxu0 0.0
    %2349 = vmatpush1.msra.mxu0 0.0
    %2350 = vmatprep.subr.mxu0 0.0
    %2351 = vmatpush1.msra.mxu0 0.0
    %2352 = vmatprep.subr.mxu0 0.0
    %2353 = vmatpush1.msra.mxu0 0.0
    %2354 = vmatprep.subr.mxu0 0.0
    %2355 = vmatpush1.msra.mxu0 0.0
    %2356 = vmatprep.subr.mxu0 0.0
    %2357 = vmatpush1.msra.mxu0 0.0
    %2358 = vmatprep.subr.mxu0 0.0
    %2359 = vmatpush1.msra.mxu0 0.0
    %2360 = vmatprep.subr.mxu0 0.0
    %2361 = vmatpush1.msra.mxu0 0.0
    %2362 = vmatprep.subr.mxu0 0.0
    %2363 = vmatpush1.msra.mxu0 0.0
    %2364 = vmatprep.subr.mxu0 0.0
    %2365 = vmatpush1.msra.mxu0 0.0
    %2366 = vmatprep.subr.mxu0 0.0
    %2367 = vmatpush1.msra.mxu0 0.0
    %2368 = vmatprep.subr.mxu0 0.0
    %2369 = vmatpush1.msra.mxu0 0.0
    %2370 = vmatprep.subr.mxu0 0.0
    %2371 = vmatpush1.msra.mxu0 0.0
    %2372 = vmatprep.subr.mxu0 0.0
    %2373 = vmatpush1.msra.mxu0 0.0
    %2374 = vmatprep.mubr.f32.mxu0 0.0
    %2375 = vmatmul.mubr.f32.gmra.mrb[0].mxu0 %v2308
    %v2376 = vpop.f32.mrb[0].mxu0
    %v2377 = vadd.f32 0.0, %v2376
    %v2378 = vpop.f32.mrb[0].mxu0
    %2379 = vdwg.mxu0
    %v2380 = vadd.f32 %v885, %v2377
    %v2381 = vxor.u32 %v2380, 2147483648
    %v2382 = vmul.f32 %v2381, 1.442695
    %v2383 = vpow.pop %v2382
    %v2384 = vadd.f32 %v2383, 1.0
    %v2385 = vrcp.pop %v2384
    %v2386 = vmul.f32 1.0, %v2385
    %v2387 = vadd.f32 %v2377, %v970
    %2389 = vrot.lane.b32.xlu0 %v2387, 64
    %v2390 = vpop.permute.xlu0 %2389
    %v2392 = vmul.f32 %v2386, %v2390
    %2394 = vrot.lane.b32.xlu0 %v2392, 64
    %v2395 = vpop.permute.xlu0 %2394
    %v2397 = vadd.f32 %v885, %v2395
    %v2398 = vtanh.pop %v2397
    %v2399 = vsub.f32 1.0, %v2386
    %2401 = vrot.lane.b32.xlu0 %v2398, 96
    %v2402 = vpop.permute.xlu0 %2401
    %v2404 = vmul.f32 %v2399, %v2402
    %v2405 = vmul.f32 %v2386, %v2204
    %v2406 = vadd.f32 %v2404, %v2405
    %2408 = vrot.lane.b32.xlu0 %v2406, 96
    %v2409 = vpop.permute.xlu0 %2408
    %v2411 = vsel %vm888, %v2409, %v2307
    %v2413 = vsel %vm997, %v2411, 0
    %2415 = vmatprep.subr.mxu0 0.0
    %2416 = vmatpush1.msra.mxu0 %v232
    %2417 = vmatprep.subr.mxu0 0.0
    %2418 = vmatpush1.msra.mxu0 %v233
    %2419 = vmatprep.subr.mxu0 0.0
    %2420 = vmatpush1.msra.mxu0 %v234
    %2421 = vmatprep.subr.mxu0 0.0
    %2422 = vmatpush1.msra.mxu0 %v235
    %2423 = vmatprep.subr.mxu0 0.0
    %2424 = vmatpush1.msra.mxu0 %v236
    %2425 = vmatprep.subr.mxu0 0.0
    %2426 = vmatpush1.msra.mxu0 %v237
    %2427 = vmatprep.subr.mxu0 0.0
    %2428 = vmatpush1.msra.mxu0 %v238
    %2429 = vmatprep.subr.mxu0 0.0
    %2430 = vmatpush1.msra.mxu0 %v239
    %2431 = vmatprep.subr.mxu0 0.0
    %2432 = vmatpush1.msra.mxu0 0.0
    %2433 = vmatprep.subr.mxu0 0.0
    %2434 = vmatpush1.msra.mxu0 0.0
    %2435 = vmatprep.subr.mxu0 0.0
    %2436 = vmatpush1.msra.mxu0 0.0
    %2437 = vmatprep.subr.mxu0 0.0
    %2438 = vmatpush1.msra.mxu0 0.0
    %2439 = vmatprep.subr.mxu0 0.0
    %2440 = vmatpush1.msra.mxu0 0.0
    %2441 = vmatprep.subr.mxu0 0.0
    %2442 = vmatpush1.msra.mxu0 0.0
    %2443 = vmatprep.subr.mxu0 0.0
    %2444 = vmatpush1.msra.mxu0 0.0
    %2445 = vmatprep.subr.mxu0 0.0
    %2446 = vmatpush1.msra.mxu0 0.0
    %2447 = vmatprep.subr.mxu0 0.0
    %2448 = vmatpush1.msra.mxu0 0.0
    %2449 = vmatprep.subr.mxu0 0.0
    %2450 = vmatpush1.msra.mxu0 0.0
    %2451 = vmatprep.subr.mxu0 0.0
    %2452 = vmatpush1.msra.mxu0 0.0
    %2453 = vmatprep.subr.mxu0 0.0
    %2454 = vmatpush1.msra.mxu0 0.0
    %2455 = vmatprep.subr.mxu0 0.0
    %2456 = vmatpush1.msra.mxu0 0.0
    %2457 = vmatprep.subr.mxu0 0.0
    %2458 = vmatpush1.msra.mxu0 0.0
    %2459 = vmatprep.subr.mxu0 0.0
    %2460 = vmatpush1.msra.mxu0 0.0
    %2461 = vmatprep.subr.mxu0 0.0
    %2462 = vmatpush1.msra.mxu0 0.0
    %2463 = vmatprep.subr.mxu0 0.0
    %2464 = vmatpush1.msra.mxu0 0.0
    %2465 = vmatprep.subr.mxu0 0.0
    %2466 = vmatpush1.msra.mxu0 0.0
    %2467 = vmatprep.subr.mxu0 0.0
    %2468 = vmatpush1.msra.mxu0 0.0
    %2469 = vmatprep.subr.mxu0 0.0
    %2470 = vmatpush1.msra.mxu0 0.0
    %2471 = vmatprep.subr.mxu0 0.0
    %2472 = vmatpush1.msra.mxu0 0.0
    %2473 = vmatprep.subr.mxu0 0.0
    %2474 = vmatpush1.msra.mxu0 0.0
    %2475 = vmatprep.subr.mxu0 0.0
    %2476 = vmatpush1.msra.mxu0 0.0
    %2477 = vmatprep.subr.mxu0 0.0
    %2478 = vmatpush1.msra.mxu0 0.0
    %2479 = vmatprep.mubr.f32.mxu0 0.0
    %2480 = vmatmul.mubr.f32.gmra.mrb[0].mxu0 %v2413
    %v2481 = vpop.f32.mrb[0].mxu0
    %v2482 = vadd.f32 %v256, %v2481
    %v2483 = vpop.f32.mrb[0].mxu0
    %2484 = vdwg.mxu0
    %v2485 = vxor.u32 %v2482, 2147483648
    %v2486 = vmul.f32 %v2485, 1.442695
    %v2487 = vpow.pop %v2486
    %v2488 = vadd.f32 %v2487, 1.0
    %v2489 = vrcp.pop %v2488
    %v2490 = vmul.f32 1.0, %v2489
    %2492 = vrot.lane.b32.xlu0 %v2482, 32
    %v2493 = vpop.permute.xlu0 %2492
    %v2495 = vmul.f32 %v2490, %v2493
    %2497 = vrot.lane.b32.xlu0 %v2495, 64
    %v2498 = vpop.permute.xlu0 %2497
    %v2500 = vadd.f32 %v2482, %v2498
    %v2501 = vtanh.pop %v2500
    %v2502 = vsub.f32 1.0, %v2490
    %2504 = vrot.lane.b32.xlu0 %v2501, 96
    %v2505 = vpop.permute.xlu0 %2504
    %v2507 = vmul.f32 %v2502, %v2505
    %v2508 = vmul.f32 %v2490, %v2307
    %v2509 = vadd.f32 %v2507, %v2508
    %v2510 = vld [vmem:[#allocation10] sm:$0xf]
    %v2511 = vld [vmem:[#allocation11] sm:$0xff]
    %v2512 = vld [vmem:[#allocation11 + $0x8] sm:$0xff]
    %v2513 = vld [vmem:[#allocation11 + $0x10] sm:$0xff]
    %v2514 = vld [vmem:[#allocation11 + $0x18] sm:$0xff]
    %v2515 = vld [vmem:[#allocation13] sm:$0x1]
    %v2516 = vld [vmem:[#allocation14] sm:$0x1]
    %v2517 = vld [vmem:[%s11] sm:$0xff]
    %v2518 = vld [vmem:[%s11 + $0x8] sm:$0xff]
    %v2519 = vld [vmem:[%s11 + $0x10] sm:$0xff]
    %v2520 = vld [vmem:[%s11 + $0x18] sm:$0xff]
    %v2521 = vld [vmem:[%s11 + $0x20] sm:$0xff]
    %v2522 = vld [vmem:[%s11 + $0x28] sm:$0xff]
    %v2523 = vld [vmem:[%s11 + $0x30] sm:$0xff]
    %v2524 = vld [vmem:[%s11 + $0x38] sm:$0xff]
    %v2525 = vld [vmem:[#allocation16] sm:$0x1]
    %v2527 = vlaneseq
    %v2528 = vshrl.u32 %v2527, 7
    %v2529 = vsub.s32 0, %v2528
    %v2530 = vrot.slane %v2515, %v2529
    %v2533 = vlaneseq
    %v2534 = vshrl.u32 %v2533, 7
    %v2535 = vsub.s32 0, %v2534
    %v2536 = vrot.slane %v2516, %v2535
    %v2538 = vlaneseq
    %v2539 = vshrl.u32 %v2538, 7
    %v2540 = vsub.s32 0, %v2539
    %v2541 = vrot.slane %v2525, %v2540
    %v2544 = vsel %vm268, %v2510, 0
    %2546 = vmatprep.subr.mxu0 0.0
    %2547 = vmatpush1.msra.mxu0 %v2544
    %2548 = vmatprep.subr.mxu0 0.0
    %2549 = vmatpush1.msra.mxu0 0.0
    %2550 = vmatprep.subr.mxu0 0.0
    %2551 = vmatpush1.msra.mxu0 0.0
    %2552 = vmatprep.subr.mxu0 0.0
    %2553 = vmatpush1.msra.mxu0 0.0
    %2554 = vmatprep.subr.mxu0 0.0
    %2555 = vmatpush1.msra.mxu0 0.0
    %2556 = vmatprep.subr.mxu0 0.0
    %2557 = vmatpush1.msra.mxu0 0.0
    %2558 = vmatprep.subr.mxu0 0.0
    %2559 = vmatpush1.msra.mxu0 0.0
    %2560 = vmatprep.subr.mxu0 0.0
    %2561 = vmatpush1.msra.mxu0 0.0
    %2562 = vmatprep.subr.mxu0 0.0
    %2563 = vmatpush1.msra.mxu0 0.0
    %2564 = vmatprep.subr.mxu0 0.0
    %2565 = vmatpush1.msra.mxu0 0.0
    %2566 = vmatprep.subr.mxu0 0.0
    %2567 = vmatpush1.msra.mxu0 0.0
    %2568 = vmatprep.subr.mxu0 0.0
    %2569 = vmatpush1.msra.mxu0 0.0
    %2570 = vmatprep.subr.mxu0 0.0
    %2571 = vmatpush1.msra.mxu0 0.0
    %2572 = vmatprep.subr.mxu0 0.0
    %2573 = vmatpush1.msra.mxu0 0.0
    %2574 = vmatprep.subr.mxu0 0.0
    %2575 = vmatpush1.msra.mxu0 0.0
    %2576 = vmatprep.subr.mxu0 0.0
    %2577 = vmatpush1.msra.mxu0 0.0
    %2578 = vmatprep.subr.mxu0 0.0
    %2579 = vmatpush1.msra.mxu0 0.0
    %2580 = vmatprep.subr.mxu0 0.0
    %2581 = vmatpush1.msra.mxu0 0.0
    %2582 = vmatprep.subr.mxu0 0.0
    %2583 = vmatpush1.msra.mxu0 0.0
    %2584 = vmatprep.subr.mxu0 0.0
    %2585 = vmatpush1.msra.mxu0 0.0
    %2586 = vmatprep.subr.mxu0 0.0
    %2587 = vmatpush1.msra.mxu0 0.0
    %2588 = vmatprep.subr.mxu0 0.0
    %2589 = vmatpush1.msra.mxu0 0.0
    %2590 = vmatprep.subr.mxu0 0.0
    %2591 = vmatpush1.msra.mxu0 0.0
    %2592 = vmatprep.subr.mxu0 0.0
    %2593 = vmatpush1.msra.mxu0 0.0
    %2594 = vmatprep.subr.mxu0 0.0
    %2595 = vmatpush1.msra.mxu0 0.0
    %2596 = vmatprep.subr.mxu0 0.0
    %2597 = vmatpush1.msra.mxu0 0.0
    %2598 = vmatprep.subr.mxu0 0.0
    %2599 = vmatpush1.msra.mxu0 0.0
    %2600 = vmatprep.subr.mxu0 0.0
    %2601 = vmatpush1.msra.mxu0 0.0
    %2602 = vmatprep.subr.mxu0 0.0
    %2603 = vmatpush1.msra.mxu0 0.0
    %2604 = vmatprep.subr.mxu0 0.0
    %2605 = vmatpush1.msra.mxu0 0.0
    %2606 = vmatprep.subr.mxu0 0.0
    %2607 = vmatpush1.msra.mxu0 0.0
    %2608 = vmatprep.subr.mxu0 0.0
    %2609 = vmatpush1.msra.mxu0 0.0
    %2610 = vmatprep.mubr.f32.mxu0 0.0
    %2611 = vmatmul.mubr.f32.gmra.mrb[0].mxu0 %v738
    %v2612 = vpop.f32.mrb[0].mxu0
    %v2613 = vadd.f32 %v2530, %v2612
    %v2614 = vpop.f32.mrb[0].mxu0
    %2615 = vdwg.mxu0
    %2616 = vmatprep.subr.mxu0 0.0
    %2617 = vmatpush1.msra.mxu0 %v2544
    %2618 = vmatprep.subr.mxu0 0.0
    %2619 = vmatpush1.msra.mxu0 0.0
    %2620 = vmatprep.subr.mxu0 0.0
    %2621 = vmatpush1.msra.mxu0 0.0
    %2622 = vmatprep.subr.mxu0 0.0
    %2623 = vmatpush1.msra.mxu0 0.0
    %2624 = vmatprep.subr.mxu0 0.0
    %2625 = vmatpush1.msra.mxu0 0.0
    %2626 = vmatprep.subr.mxu0 0.0
    %2627 = vmatpush1.msra.mxu0 0.0
    %2628 = vmatprep.subr.mxu0 0.0
    %2629 = vmatpush1.msra.mxu0 0.0
    %2630 = vmatprep.subr.mxu0 0.0
    %2631 = vmatpush1.msra.mxu0 0.0
    %2632 = vmatprep.subr.mxu0 0.0
    %2633 = vmatpush1.msra.mxu0 0.0
    %2634 = vmatprep.subr.mxu0 0.0
    %2635 = vmatpush1.msra.mxu0 0.0
    %2636 = vmatprep.subr.mxu0 0.0
    %2637 = vmatpush1.msra.mxu0 0.0
    %2638 = vmatprep.subr.mxu0 0.0
    %2639 = vmatpush1.msra.mxu0 0.0
    %2640 = vmatprep.subr.mxu0 0.0
    %2641 = vmatpush1.msra.mxu0 0.0
    %2642 = vmatprep.subr.mxu0 0.0
    %2643 = vmatpush1.msra.mxu0 0.0
    %2644 = vmatprep.subr.mxu0 0.0
    %2645 = vmatpush1.msra.mxu0 0.0
    %2646 = vmatprep.subr.mxu0 0.0
    %2647 = vmatpush1.msra.mxu0 0.0
    %2648 = vmatprep.subr.mxu0 0.0
    %2649 = vmatpush1.msra.mxu0 0.0
    %2650 = vmatprep.subr.mxu0 0.0
    %2651 = vmatpush1.msra.mxu0 0.0
    %2652 = vmatprep.subr.mxu0 0.0
    %2653 = vmatpush1.msra.mxu0 0.0
    %2654 = vmatprep.subr.mxu0 0.0
    %2655 = vmatpush1.msra.mxu0 0.0
    %2656 = vmatprep.subr.mxu0 0.0
    %2657 = vmatpush1.msra.mxu0 0.0
    %2658 = vmatprep.subr.mxu0 0.0
    %2659 = vmatpush1.msra.mxu0 0.0
    %2660 = vmatprep.subr.mxu0 0.0
    %2661 = vmatpush1.msra.mxu0 0.0
    %2662 = vmatprep.subr.mxu0 0.0
    %2663 = vmatpush1.msra.mxu0 0.0
    %2664 = vmatprep.subr.mxu0 0.0
    %2665 = vmatpush1.msra.mxu0 0.0
    %2666 = vmatprep.subr.mxu0 0.0
    %2667 = vmatpush1.msra.mxu0 0.0
    %2668 = vmatprep.subr.mxu0 0.0
    %2669 = vmatpush1.msra.mxu0 0.0
    %2670 = vmatprep.subr.mxu0 0.0
    %2671 = vmatpush1.msra.mxu0 0.0
    %2672 = vmatprep.subr.mxu0 0.0
    %2673 = vmatpush1.msra.mxu0 0.0
    %2674 = vmatprep.subr.mxu0 0.0
    %2675 = vmatpush1.msra.mxu0 0.0
    %2676 = vmatprep.subr.mxu0 0.0
    %2677 = vmatpush1.msra.mxu0 0.0
    %2678 = vmatprep.subr.mxu0 0.0
    %2679 = vmatpush1.msra.mxu0 0.0
    %2680 = vmatprep.mubr.f32.mxu0 0.0
    %2681 = vmatmul.mubr.f32.gmra.mrb[0].mxu0 %v816
    %v2682 = vpop.f32.mrb[0].mxu0
    %v2683 = vadd.f32 %v2530, %v2682
    %v2684 = vpop.f32.mrb[0].mxu0
    %2685 = vdwg.mxu0
    %2686 = vmatprep.subr.mxu0 0.0
    %2687 = vmatpush1.msra.mxu0 %v2511
    %2688 = vmatprep.subr.mxu0 0.0
    %2689 = vmatpush1.msra.mxu0 %v2512
    %2690 = vmatprep.subr.mxu0 0.0
    %2691 = vmatpush1.msra.mxu0 %v2513
    %2692 = vmatprep.subr.mxu0 0.0
    %2693 = vmatpush1.msra.mxu0 %v2514
    %2694 = vmatprep.subr.mxu0 0.0
    %2695 = vmatpush1.msra.mxu0 0.0
    %2696 = vmatprep.subr.mxu0 0.0
    %2697 = vmatpush1.msra.mxu0 0.0
    %2698 = vmatprep.subr.mxu0 0.0
    %2699 = vmatpush1.msra.mxu0 0.0
    %2700 = vmatprep.subr.mxu0 0.0
    %2701 = vmatpush1.msra.mxu0 0.0
    %2702 = vmatprep.subr.mxu0 0.0
    %2703 = vmatpush1.msra.mxu0 0.0
    %2704 = vmatprep.subr.mxu0 0.0
    %2705 = vmatpush1.msra.mxu0 0.0
    %2706 = vmatprep.subr.mxu0 0.0
    %2707 = vmatpush1.msra.mxu0 0.0
    %2708 = vmatprep.subr.mxu0 0.0
    %2709 = vmatpush1.msra.mxu0 0.0
    %2710 = vmatprep.subr.mxu0 0.0
    %2711 = vmatpush1.msra.mxu0 0.0
    %2712 = vmatprep.subr.mxu0 0.0
    %2713 = vmatpush1.msra.mxu0 0.0
    %2714 = vmatprep.subr.mxu0 0.0
    %2715 = vmatpush1.msra.mxu0 0.0
    %2716 = vmatprep.subr.mxu0 0.0
    %2717 = vmatpush1.msra.mxu0 0.0
    %2718 = vmatprep.subr.mxu0 0.0
    %2719 = vmatpush1.msra.mxu0 0.0
    %2720 = vmatprep.subr.mxu0 0.0
    %2721 = vmatpush1.msra.mxu0 0.0
    %2722 = vmatprep.subr.mxu0 0.0
    %2723 = vmatpush1.msra.mxu0 0.0
    %2724 = vmatprep.subr.mxu0 0.0
    %2725 = vmatpush1.msra.mxu0 0.0
    %2726 = vmatprep.subr.mxu0 0.0
    %2727 = vmatpush1.msra.mxu0 0.0
    %2728 = vmatprep.subr.mxu0 0.0
    %2729 = vmatpush1.msra.mxu0 0.0
    %2730 = vmatprep.subr.mxu0 0.0
    %2731 = vmatpush1.msra.mxu0 0.0
    %2732 = vmatprep.subr.mxu0 0.0
    %2733 = vmatpush1.msra.mxu0 0.0
    %2734 = vmatprep.subr.mxu0 0.0
    %2735 = vmatpush1.msra.mxu0 0.0
    %2736 = vmatprep.subr.mxu0 0.0
    %2737 = vmatpush1.msra.mxu0 0.0
    %2738 = vmatprep.subr.mxu0 0.0
    %2739 = vmatpush1.msra.mxu0 0.0
    %2740 = vmatprep.subr.mxu0 0.0
    %2741 = vmatpush1.msra.mxu0 0.0
    %2742 = vmatprep.subr.mxu0 0.0
    %2743 = vmatpush1.msra.mxu0 0.0
    %2744 = vmatprep.subr.mxu0 0.0
    %2745 = vmatpush1.msra.mxu0 0.0
    %2746 = vmatprep.subr.mxu0 0.0
    %2747 = vmatpush1.msra.mxu0 0.0
    %2748 = vmatprep.subr.mxu0 0.0
    %2749 = vmatpush1.msra.mxu0 0.0
    %2750 = vmatprep.mubr.f32.mxu0 0.0
    %2751 = vmatmul.mubr.f32.gmra.mrb[0].mxu0 %v890
    %v2752 = vpop.f32.mrb[0].mxu0
    %v2753 = vadd.f32 0.0, %v2752
    %v2754 = vpop.f32.mrb[0].mxu0
    %2755 = vdwg.mxu0
    %v2756 = vadd.f32 %v2613, %v2753
    %v2757 = vxor.u32 %v2756, 2147483648
    %v2758 = vmul.f32 %v2757, 1.442695
    %v2759 = vpow.pop %v2758
    %v2760 = vadd.f32 %v2759, 1.0
    %v2761 = vrcp.pop %v2760
    %v2762 = vmul.f32 1.0, %v2761
    %2763 = vrot.lane.b32.xlu0 %v2536, 64
    %v2764 = vpop.permute.xlu0 %2763
    %v2766 = vadd.f32 %v2753, %v2764
    %2768 = vrot.lane.b32.xlu0 %v2766, 64
    %v2769 = vpop.permute.xlu0 %2768
    %v2771 = vmul.f32 %v2762, %v2769
    %2773 = vrot.lane.b32.xlu0 %v2771, 64
    %v2774 = vpop.permute.xlu0 %2773
    %v2776 = vadd.f32 %v2613, %v2774
    %v2777 = vtanh.pop %v2776
    %v2778 = vsub.f32 1.0, %v2762
    %2780 = vrot.lane.b32.xlu0 %v2777, 96
    %v2781 = vpop.permute.xlu0 %2780
    %v2783 = vmul.f32 %v2778, %v2781
    %v2784 = vmul.f32 %v2762, 0.0
    %v2785 = vadd.f32 %v2783, %v2784
    %2787 = vrot.lane.b32.xlu0 %v2785, 96
    %v2788 = vpop.permute.xlu0 %2787
    %v2790 = vsel %vm888, %v2788, 0.0
    %v2792 = vsel %vm997, %v2790, 0
    %2794 = vmatprep.subr.mxu0 0.0
    %2795 = vmatpush1.msra.mxu0 %v2517
    %2796 = vmatprep.subr.mxu0 0.0
    %2797 = vmatpush1.msra.mxu0 %v2518
    %2798 = vmatprep.subr.mxu0 0.0
    %2799 = vmatpush1.msra.mxu0 %v2519
    %2800 = vmatprep.subr.mxu0 0.0
    %2801 = vmatpush1.msra.mxu0 %v2520
    %2802 = vmatprep.subr.mxu0 0.0
    %2803 = vmatpush1.msra.mxu0 %v2521
    %2804 = vmatprep.subr.mxu0 0.0
    %2805 = vmatpush1.msra.mxu0 %v2522
    %2806 = vmatprep.subr.mxu0 0.0
    %2807 = vmatpush1.msra.mxu0 %v2523
    %2808 = vmatprep.subr.mxu0 0.0
    %2809 = vmatpush1.msra.mxu0 %v2524
    %2810 = vmatprep.subr.mxu0 0.0
    %2811 = vmatpush1.msra.mxu0 0.0
    %2812 = vmatprep.subr.mxu0 0.0
    %2813 = vmatpush1.msra.mxu0 0.0
    %2814 = vmatprep.subr.mxu0 0.0
    %2815 = vmatpush1.msra.mxu0 0.0
    %2816 = vmatprep.subr.mxu0 0.0
    %2817 = vmatpush1.msra.mxu0 0.0
    %2818 = vmatprep.subr.mxu0 0.0
    %2819 = vmatpush1.msra.mxu0 0.0
    %2820 = vmatprep.subr.mxu0 0.0
    %2821 = vmatpush1.msra.mxu0 0.0
    %2822 = vmatprep.subr.mxu0 0.0
    %2823 = vmatpush1.msra.mxu0 0.0
    %2824 = vmatprep.subr.mxu0 0.0
    %2825 = vmatpush1.msra.mxu0 0.0
    %2826 = vmatprep.subr.mxu0 0.0
    %2827 = vmatpush1.msra.mxu0 0.0
    %2828 = vmatprep.subr.mxu0 0.0
    %2829 = vmatpush1.msra.mxu0 0.0
    %2830 = vmatprep.subr.mxu0 0.0
    %2831 = vmatpush1.msra.mxu0 0.0
    %2832 = vmatprep.subr.mxu0 0.0
    %2833 = vmatpush1.msra.mxu0 0.0
    %2834 = vmatprep.subr.mxu0 0.0
    %2835 = vmatpush1.msra.mxu0 0.0
    %2836 = vmatprep.subr.mxu0 0.0
    %2837 = vmatpush1.msra.mxu0 0.0
    %2838 = vmatprep.subr.mxu0 0.0
    %2839 = vmatpush1.msra.mxu0 0.0
    %2840 = vmatprep.subr.mxu0 0.0
    %2841 = vmatpush1.msra.mxu0 0.0
    %2842 = vmatprep.subr.mxu0 0.0
    %2843 = vmatpush1.msra.mxu0 0.0
    %2844 = vmatprep.subr.mxu0 0.0
    %2845 = vmatpush1.msra.mxu0 0.0
    %2846 = vmatprep.subr.mxu0 0.0
    %2847 = vmatpush1.msra.mxu0 0.0
    %2848 = vmatprep.subr.mxu0 0.0
    %2849 = vmatpush1.msra.mxu0 0.0
    %2850 = vmatprep.subr.mxu0 0.0
    %2851 = vmatpush1.msra.mxu0 0.0
    %2852 = vmatprep.subr.mxu0 0.0
    %2853 = vmatpush1.msra.mxu0 0.0
    %2854 = vmatprep.subr.mxu0 0.0
    %2855 = vmatpush1.msra.mxu0 0.0
    %2856 = vmatprep.subr.mxu0 0.0
    %2857 = vmatpush1.msra.mxu0 0.0
    %2858 = vmatprep.mubr.f32.mxu0 0.0
    %2859 = vmatmul.mubr.f32.gmra.mrb[0].mxu0 %v2792
    %v2860 = vpop.f32.mrb[0].mxu0
    %v2861 = vadd.f32 %v2541, %v2860
    %v2862 = vpop.f32.mrb[0].mxu0
    %2863 = vdwg.mxu0
    %v2864 = vxor.u32 %v2861, 2147483648
    %v2865 = vmul.f32 %v2864, 1.442695
    %v2866 = vpow.pop %v2865
    %v2867 = vadd.f32 %v2866, 1.0
    %v2868 = vrcp.pop %v2867
    %v2869 = vmul.f32 1.0, %v2868
    %2871 = vrot.lane.b32.xlu0 %v2861, 32
    %v2872 = vpop.permute.xlu0 %2871
    %v2874 = vmul.f32 %v2869, %v2872
    %2876 = vrot.lane.b32.xlu0 %v2874, 64
    %v2877 = vpop.permute.xlu0 %2876
    %v2879 = vadd.f32 %v2861, %v2877
    %v2880 = vtanh.pop %v2879
    %v2881 = vsub.f32 1.0, %v2869
    %2883 = vrot.lane.b32.xlu0 %v2880, 96
    %v2884 = vpop.permute.xlu0 %2883
    %v2886 = vmul.f32 %v2881, %v2884
    %v2887 = vmul.f32 %v2869, 0.0
    %v2888 = vadd.f32 %v2886, %v2887
    %v2889 = vsel %vm888, %v2788, 0
    %2891 = vmatprep.subr.mxu0 0.0
    %2892 = vmatpush1.msra.mxu0 %v2511
    %2893 = vmatprep.subr.mxu0 0.0
    %2894 = vmatpush1.msra.mxu0 %v2512
    %2895 = vmatprep.subr.mxu0 0.0
    %2896 = vmatpush1.msra.mxu0 %v2513
    %2897 = vmatprep.subr.mxu0 0.0
    %2898 = vmatpush1.msra.mxu0 %v2514
    %2899 = vmatprep.subr.mxu0 0.0
    %2900 = vmatpush1.msra.mxu0 0.0
    %2901 = vmatprep.subr.mxu0 0.0
    %2902 = vmatpush1.msra.mxu0 0.0
    %2903 = vmatprep.subr.mxu0 0.0
    %2904 = vmatpush1.msra.mxu0 0.0
    %2905 = vmatprep.subr.mxu0 0.0
    %2906 = vmatpush1.msra.mxu0 0.0
    %2907 = vmatprep.subr.mxu0 0.0
    %2908 = vmatpush1.msra.mxu0 0.0
    %2909 = vmatprep.subr.mxu0 0.0
    %2910 = vmatpush1.msra.mxu0 0.0
    %2911 = vmatprep.subr.mxu0 0.0
    %2912 = vmatpush1.msra.mxu0 0.0
    %2913 = vmatprep.subr.mxu0 0.0
    %2914 = vmatpush1.msra.mxu0 0.0
    %2915 = vmatprep.subr.mxu0 0.0
    %2916 = vmatpush1.msra.mxu0 0.0
    %2917 = vmatprep.subr.mxu0 0.0
    %2918 = vmatpush1.msra.mxu0 0.0
    %2919 = vmatprep.subr.mxu0 0.0
    %2920 = vmatpush1.msra.mxu0 0.0
    %2921 = vmatprep.subr.mxu0 0.0
    %2922 = vmatpush1.msra.mxu0 0.0
    %2923 = vmatprep.subr.mxu0 0.0
    %2924 = vmatpush1.msra.mxu0 0.0
    %2925 = vmatprep.subr.mxu0 0.0
    %2926 = vmatpush1.msra.mxu0 0.0
    %2927 = vmatprep.subr.mxu0 0.0
    %2928 = vmatpush1.msra.mxu0 0.0
    %2929 = vmatprep.subr.mxu0 0.0
    %2930 = vmatpush1.msra.mxu0 0.0
    %2931 = vmatprep.subr.mxu0 0.0
    %2932 = vmatpush1.msra.mxu0 0.0
    %2933 = vmatprep.subr.mxu0 0.0
    %2934 = vmatpush1.msra.mxu0 0.0
    %2935 = vmatprep.subr.mxu0 0.0
    %2936 = vmatpush1.msra.mxu0 0.0
    %2937 = vmatprep.subr.mxu0 0.0
    %2938 = vmatpush1.msra.mxu0 0.0
    %2939 = vmatprep.subr.mxu0 0.0
    %2940 = vmatpush1.msra.mxu0 0.0
    %2941 = vmatprep.subr.mxu0 0.0
    %2942 = vmatpush1.msra.mxu0 0.0
    %2943 = vmatprep.subr.mxu0 0.0
    %2944 = vmatpush1.msra.mxu0 0.0
    %2945 = vmatprep.subr.mxu0 0.0
    %2946 = vmatpush1.msra.mxu0 0.0
    %2947 = vmatprep.subr.mxu0 0.0
    %2948 = vmatpush1.msra.mxu0 0.0
    %2949 = vmatprep.subr.mxu0 0.0
    %2950 = vmatpush1.msra.mxu0 0.0
    %2951 = vmatprep.subr.mxu0 0.0
    %2952 = vmatpush1.msra.mxu0 0.0
    %2953 = vmatprep.subr.mxu0 0.0
    %2954 = vmatpush1.msra.mxu0 0.0
    %2955 = vmatprep.mubr.f32.mxu0 0.0
    %2956 = vmatmul.mubr.f32.gmra.mrb[0].mxu0 %v2889
    %v2957 = vpop.f32.mrb[0].mxu0
    %v2958 = vadd.f32 0.0, %v2957
    %v2959 = vpop.f32.mrb[0].mxu0
    %2960 = vdwg.mxu0
    %v2961 = vadd.f32 %v2683, %v2958
    %v2962 = vxor.u32 %v2961, 2147483648
    %v2963 = vmul.f32 %v2962, 1.442695
    %v2964 = vpow.pop %v2963
    %v2965 = vadd.f32 %v2964, 1.0
    %v2966 = vrcp.pop %v2965
    %v2967 = vmul.f32 1.0, %v2966
    %v2968 = vadd.f32 %v2958, %v2764
    %2970 = vrot.lane.b32.xlu0 %v2968, 64
    %v2971 = vpop.permute.xlu0 %2970
    %v2973 = vmul.f32 %v2967, %v2971
    %2975 = vrot.lane.b32.xlu0 %v2973, 64
    %v2976 = vpop.permute.xlu0 %2975
    %v2978 = vadd.f32 %v2683, %v2976
    %v2979 = vtanh.pop %v2978
    %v2980 = vsub.f32 1.0, %v2967
    %2982 = vrot.lane.b32.xlu0 %v2979, 96
    %v2983 = vpop.permute.xlu0 %2982
    %v2985 = vmul.f32 %v2980, %v2983
    %v2986 = vmul.f32 %v2967, %v2785
    %v2987 = vadd.f32 %v2985, %v2986
    %2989 = vrot.lane.b32.xlu0 %v2987, 96
    %v2990 = vpop.permute.xlu0 %2989
    %v2992 = vsel %vm888, %v2990, %v2888
    %v2994 = vsel %vm997, %v2992, 0
    %2996 = vmatprep.subr.mxu0 0.0
    %2997 = vmatpush1.msra.mxu0 %v2517
    %2998 = vmatprep.subr.mxu0 0.0
    %2999 = vmatpush1.msra.mxu0 %v2518
    %3000 = vmatprep.subr.mxu0 0.0
    %3001 = vmatpush1.msra.mxu0 %v2519
    %3002 = vmatprep.subr.mxu0 0.0
    %3003 = vmatpush1.msra.mxu0 %v2520
    %3004 = vmatprep.subr.mxu0 0.0
    %3005 = vmatpush1.msra.mxu0 %v2521
    %3006 = vmatprep.subr.mxu0 0.0
    %3007 = vmatpush1.msra.mxu0 %v2522
    %3008 = vmatprep.subr.mxu0 0.0
    %3009 = vmatpush1.msra.mxu0 %v2523
    %3010 = vmatprep.subr.mxu0 0.0
    %3011 = vmatpush1.msra.mxu0 %v2524
    %3012 = vmatprep.subr.mxu0 0.0
    %3013 = vmatpush1.msra.mxu0 0.0
    %3014 = vmatprep.subr.mxu0 0.0
    %3015 = vmatpush1.msra.mxu0 0.0
    %3016 = vmatprep.subr.mxu0 0.0
    %3017 = vmatpush1.msra.mxu0 0.0
    %3018 = vmatprep.subr.mxu0 0.0
    %3019 = vmatpush1.msra.mxu0 0.0
    %3020 = vmatprep.subr.mxu0 0.0
    %3021 = vmatpush1.msra.mxu0 0.0
    %3022 = vmatprep.subr.mxu0 0.0
    %3023 = vmatpush1.msra.mxu0 0.0
    %3024 = vmatprep.subr.mxu0 0.0
    %3025 = vmatpush1.msra.mxu0 0.0
    %3026 = vmatprep.subr.mxu0 0.0
    %3027 = vmatpush1.msra.mxu0 0.0
    %3028 = vmatprep.subr.mxu0 0.0
    %3029 = vmatpush1.msra.mxu0 0.0
    %3030 = vmatprep.subr.mxu0 0.0
    %3031 = vmatpush1.msra.mxu0 0.0
    %3032 = vmatprep.subr.mxu0 0.0
    %3033 = vmatpush1.msra.mxu0 0.0
    %3034 = vmatprep.subr.mxu0 0.0
    %3035 = vmatpush1.msra.mxu0 0.0
    %3036 = vmatprep.subr.mxu0 0.0
    %3037 = vmatpush1.msra.mxu0 0.0
    %3038 = vmatprep.subr.mxu0 0.0
    %3039 = vmatpush1.msra.mxu0 0.0
    %3040 = vmatprep.subr.mxu0 0.0
    %3041 = vmatpush1.msra.mxu0 0.0
    %3042 = vmatprep.subr.mxu0 0.0
    %3043 = vmatpush1.msra.mxu0 0.0
    %3044 = vmatprep.subr.mxu0 0.0
    %3045 = vmatpush1.msra.mxu0 0.0
    %3046 = vmatprep.subr.mxu0 0.0
    %3047 = vmatpush1.msra.mxu0 0.0
    %3048 = vmatprep.subr.mxu0 0.0
    %3049 = vmatpush1.msra.mxu0 0.0
    %3050 = vmatprep.subr.mxu0 0.0
    %3051 = vmatpush1.msra.mxu0 0.0
    %3052 = vmatprep.subr.mxu0 0.0
    %3053 = vmatpush1.msra.mxu0 0.0
    %3054 = vmatprep.subr.mxu0 0.0
    %3055 = vmatpush1.msra.mxu0 0.0
    %3056 = vmatprep.subr.mxu0 0.0
    %3057 = vmatpush1.msra.mxu0 0.0
    %3058 = vmatprep.subr.mxu0 0.0
    %3059 = vmatpush1.msra.mxu0 0.0
    %3060 = vmatprep.mubr.f32.mxu0 0.0
    %3061 = vmatmul.mubr.f32.gmra.mrb[0].mxu0 %v2994
    %v3062 = vpop.f32.mrb[0].mxu0
    %v3063 = vadd.f32 %v2541, %v3062
    %v3064 = vpop.f32.mrb[0].mxu0
    %3065 = vdwg.mxu0
    %v3066 = vxor.u32 %v3063, 2147483648
    %v3067 = vmul.f32 %v3066, 1.442695
    %v3068 = vpow.pop %v3067
    %v3069 = vadd.f32 %v3068, 1.0
    %v3070 = vrcp.pop %v3069
    %v3071 = vmul.f32 1.0, %v3070
    %3073 = vrot.lane.b32.xlu0 %v3063, 32
    %v3074 = vpop.permute.xlu0 %3073
    %v3076 = vmul.f32 %v3071, %v3074
    %3078 = vrot.lane.b32.xlu0 %v3076, 64
    %v3079 = vpop.permute.xlu0 %3078
    %v3081 = vadd.f32 %v3063, %v3079
    %v3082 = vtanh.pop %v3081
    %v3083 = vsub.f32 1.0, %v3071
    %3085 = vrot.lane.b32.xlu0 %v3082, 96
    %v3086 = vpop.permute.xlu0 %3085
    %v3088 = vmul.f32 %v3083, %v3086
    %v3089 = vmul.f32 %v3071, %v2888
    %v3090 = vadd.f32 %v3088, %v3089
    %v3091 = vld [vmem:[#allocation17] sm:$0xff]
    %v3092 = vld [vmem:[#allocation17 + $0x8] sm:$0xff]
    %v3093 = vld [vmem:[#allocation17 + $0x10] sm:$0xff]
    %v3094 = vld [vmem:[#allocation17 + $0x18] sm:$0xff]
    %v3095 = vld [vmem:[#allocation19] sm:$0xff]
    %v3096 = vld [vmem:[#allocation19 + $0x8] sm:$0xff]
    %v3097 = vld [vmem:[#allocation19 + $0x10] sm:$0xff]
    %v3098 = vld [vmem:[#allocation19 + $0x18] sm:$0xff]
    %3100 = vrot.lane.b32.xlu0 %v3090, 96
    %v3101 = vpop.permute.xlu0 %3100
    %v3102 = vsel %vm888, %v3101, 0
    %3104 = vmatprep.subr.mxu0 0.0
    %3105 = vmatpush1.msra.mxu0 %v3095
    %3106 = vmatprep.subr.mxu0 0.0
    %3107 = vmatpush1.msra.mxu0 %v3096
    %3108 = vmatprep.subr.mxu0 0.0
    %3109 = vmatpush1.msra.mxu0 %v3097
    %3110 = vmatprep.subr.mxu0 0.0
    %3111 = vmatpush1.msra.mxu0 %v3098
    %3112 = vmatprep.subr.mxu0 0.0
    %3113 = vmatpush1.msra.mxu0 0.0
    %3114 = vmatprep.subr.mxu0 0.0
    %3115 = vmatpush1.msra.mxu0 0.0
    %3116 = vmatprep.subr.mxu0 0.0
    %3117 = vmatpush1.msra.mxu0 0.0
    %3118 = vmatprep.subr.mxu0 0.0
    %3119 = vmatpush1.msra.mxu0 0.0
    %3120 = vmatprep.subr.mxu0 0.0
    %3121 = vmatpush1.msra.mxu0 0.0
    %3122 = vmatprep.subr.mxu0 0.0
    %3123 = vmatpush1.msra.mxu0 0.0
    %3124 = vmatprep.subr.mxu0 0.0
    %3125 = vmatpush1.msra.mxu0 0.0
    %3126 = vmatprep.subr.mxu0 0.0
    %3127 = vmatpush1.msra.mxu0 0.0
    %3128 = vmatprep.subr.mxu0 0.0
    %3129 = vmatpush1.msra.mxu0 0.0
    %3130 = vmatprep.subr.mxu0 0.0
    %3131 = vmatpush1.msra.mxu0 0.0
    %3132 = vmatprep.subr.mxu0 0.0
    %3133 = vmatpush1.msra.mxu0 0.0
    %3134 = vmatprep.subr.mxu0 0.0
    %3135 = vmatpush1.msra.mxu0 0.0
    %3136 = vmatprep.subr.mxu0 0.0
    %3137 = vmatpush1.msra.mxu0 0.0
    %3138 = vmatprep.subr.mxu0 0.0
    %3139 = vmatpush1.msra.mxu0 0.0
    %3140 = vmatprep.subr.mxu0 0.0
    %3141 = vmatpush1.msra.mxu0 0.0
    %3142 = vmatprep.subr.mxu0 0.0
    %3143 = vmatpush1.msra.mxu0 0.0
    %3144 = vmatprep.subr.mxu0 0.0
    %3145 = vmatpush1.msra.mxu0 0.0
    %3146 = vmatprep.subr.mxu0 0.0
    %3147 = vmatpush1.msra.mxu0 0.0
    %3148 = vmatprep.subr.mxu0 0.0
    %3149 = vmatpush1.msra.mxu0 0.0
    %3150 = vmatprep.subr.mxu0 0.0
    %3151 = vmatpush1.msra.mxu0 0.0
    %3152 = vmatprep.subr.mxu0 0.0
    %3153 = vmatpush1.msra.mxu0 0.0
    %3154 = vmatprep.subr.mxu0 0.0
    %3155 = vmatpush1.msra.mxu0 0.0
    %3156 = vmatprep.subr.mxu0 0.0
    %3157 = vmatpush1.msra.mxu0 0.0
    %3158 = vmatprep.subr.mxu0 0.0
    %3159 = vmatpush1.msra.mxu0 0.0
    %3160 = vmatprep.subr.mxu0 0.0
    %3161 = vmatpush1.msra.mxu0 0.0
    %3162 = vmatprep.subr.mxu0 0.0
    %3163 = vmatpush1.msra.mxu0 0.0
    %3164 = vmatprep.subr.mxu0 0.0
    %3165 = vmatpush1.msra.mxu0 0.0
    %3166 = vmatprep.subr.mxu0 0.0
    %3167 = vmatpush1.msra.mxu0 0.0
    %3168 = vmatprep.mubr.f32.mxu0 0.0
    %3169 = vmatmul.mubr.f32.gmra.mrb[0].mxu0 %v3102
    %v3170 = vpop.f32.mrb[0].mxu0
    %v3171 = vadd.f32 0.0, %v3170
    %v3172 = vpop.f32.mrb[0].mxu0
    %3173 = vdwg.mxu0
    %3175 = vrot.lane.b32.xlu0 %v2509, 96
    %v3176 = vpop.permute.xlu0 %3175
    %v3177 = vsel %vm888, %v3176, 0
    %3179 = vmatprep.subr.mxu0 0.0
    %3180 = vmatpush1.msra.mxu0 %v3091
    %3181 = vmatprep.subr.mxu0 0.0
    %3182 = vmatpush1.msra.mxu0 %v3092
    %3183 = vmatprep.subr.mxu0 0.0
    %3184 = vmatpush1.msra.mxu0 %v3093
    %3185 = vmatprep.subr.mxu0 0.0
    %3186 = vmatpush1.msra.mxu0 %v3094
    %3187 = vmatprep.subr.mxu0 0.0
    %3188 = vmatpush1.msra.mxu0 0.0
    %3189 = vmatprep.subr.mxu0 0.0
    %3190 = vmatpush1.msra.mxu0 0.0
    %3191 = vmatprep.subr.mxu0 0.0
    %3192 = vmatpush1.msra.mxu0 0.0
    %3193 = vmatprep.subr.mxu0 0.0
    %3194 = vmatpush1.msra.mxu0 0.0
    %3195 = vmatprep.subr.mxu0 0.0
    %3196 = vmatpush1.msra.mxu0 0.0
    %3197 = vmatprep.subr.mxu0 0.0
    %3198 = vmatpush1.msra.mxu0 0.0
    %3199 = vmatprep.subr.mxu0 0.0
    %3200 = vmatpush1.msra.mxu0 0.0
    %3201 = vmatprep.subr.mxu0 0.0
    %3202 = vmatpush1.msra.mxu0 0.0
    %3203 = vmatprep.subr.mxu0 0.0
    %3204 = vmatpush1.msra.mxu0 0.0
    %3205 = vmatprep.subr.mxu0 0.0
    %3206 = vmatpush1.msra.mxu0 0.0
    %3207 = vmatprep.subr.mxu0 0.0
    %3208 = vmatpush1.msra.mxu0 0.0
    %3209 = vmatprep.subr.mxu0 0.0
    %3210 = vmatpush1.msra.mxu0 0.0
    %3211 = vmatprep.subr.mxu0 0.0
    %3212 = vmatpush1.msra.mxu0 0.0
    %3213 = vmatprep.subr.mxu0 0.0
    %3214 = vmatpush1.msra.mxu0 0.0
    %3215 = vmatprep.subr.mxu0 0.0
    %3216 = vmatpush1.msra.mxu0 0.0
    %3217 = vmatprep.subr.mxu0 0.0
    %3218 = vmatpush1.msra.mxu0 0.0
    %3219 = vmatprep.subr.mxu0 0.0
    %3220 = vmatpush1.msra.mxu0 0.0
    %3221 = vmatprep.subr.mxu0 0.0
    %3222 = vmatpush1.msra.mxu0 0.0
    %3223 = vmatprep.subr.mxu0 0.0
    %3224 = vmatpush1.msra.mxu0 0.0
    %3225 = vmatprep.subr.mxu0 0.0
    %3226 = vmatpush1.msra.mxu0 0.0
    %3227 = vmatprep.subr.mxu0 0.0
    %3228 = vmatpush1.msra.mxu0 0.0
    %3229 = vmatprep.subr.mxu0 0.0
    %3230 = vmatpush1.msra.mxu0 0.0
    %3231 = vmatprep.subr.mxu0 0.0
    %3232 = vmatpush1.msra.mxu0 0.0
    %3233 = vmatprep.subr.mxu0 0.0
    %3234 = vmatpush1.msra.mxu0 0.0
    %3235 = vmatprep.subr.mxu0 0.0
    %3236 = vmatpush1.msra.mxu0 0.0
    %3237 = vmatprep.subr.mxu0 0.0
    %3238 = vmatpush1.msra.mxu0 0.0
    %3239 = vmatprep.subr.mxu0 0.0
    %3240 = vmatpush1.msra.mxu0 0.0
    %3241 = vmatprep.subr.mxu0 0.0
    %3242 = vmatpush1.msra.mxu0 0.0
    %3243 = vmatprep.mubr.f32.mxu0 0.0
    %3244 = vmatmul.mubr.f32.gmra.mrb[0].mxu0 %v3177
    %v3245 = vpop.f32.mrb[0].mxu0
    %v3246 = vadd.f32 %v3171, %v3245
    %v3247 = vpop.f32.mrb[0].mxu0
    %3248 = vdwg.mxu0
    %v3249 = vld [vmem:[#allocation20] sm:$0x1]
    %v3251 = vlaneseq
    %v3252 = vshrl.u32 %v3251, 7
    %v3253 = vsub.s32 0, %v3252
    %v3254 = vrot.slane %v3249, %v3253
    %v3256 = vadd.f32 %v3246, %v3254
    %v3257 = vmax.f32 %v3256, 0.0
    %v3258 = vld [vmem:[%s16] sm:$0xff]
    %v3259 = vld [vmem:[%s16 + $0x8] sm:$0xff]
    %v3260 = vld [vmem:[%s16 + $0x10] sm:$0xff]
    %v3261 = vld [vmem:[%s16 + $0x18] sm:$0xff]
    %v3262 = vld [vmem:[#allocation22] sm:$0x1]
    %v3264 = vlaneseq
    %v3265 = vshrl.u32 %v3264, 7
    %v3266 = vsub.s32 0, %v3265
    %v3267 = vrot.slane %v3262, %v3266
    %v3270 = vsel %vm888, %v3257, 0
    %3272 = vmatprep.subr.mxu0 0.0
    %3273 = vmatpush1.msra.mxu0 %v3258
    %3274 = vmatprep.subr.mxu0 0.0
    %3275 = vmatpush1.msra.mxu0 %v3259
    %3276 = vmatprep.subr.mxu0 0.0
    %3277 = vmatpush1.msra.mxu0 %v3260
    %3278 = vmatprep.subr.mxu0 0.0
    %3279 = vmatpush1.msra.mxu0 %v3261
    %3280 = vmatprep.subr.mxu0 0.0
    %3281 = vmatpush1.msra.mxu0 0.0
    %3282 = vmatprep.subr.mxu0 0.0
    %3283 = vmatpush1.msra.mxu0 0.0
    %3284 = vmatprep.subr.mxu0 0.0
    %3285 = vmatpush1.msra.mxu0 0.0
    %3286 = vmatprep.subr.mxu0 0.0
    %3287 = vmatpush1.msra.mxu0 0.0
    %3288 = vmatprep.subr.mxu0 0.0
    %3289 = vmatpush1.msra.mxu0 0.0
    %3290 = vmatprep.subr.mxu0 0.0
    %3291 = vmatpush1.msra.mxu0 0.0
    %3292 = vmatprep.subr.mxu0 0.0
    %3293 = vmatpush1.msra.mxu0 0.0
    %3294 = vmatprep.subr.mxu0 0.0
    %3295 = vmatpush1.msra.mxu0 0.0
    %3296 = vmatprep.subr.mxu0 0.0
    %3297 = vmatpush1.msra.mxu0 0.0
    %3298 = vmatprep.subr.mxu0 0.0
    %3299 = vmatpush1.msra.mxu0 0.0
    %3300 = vmatprep.subr.mxu0 0.0
    %3301 = vmatpush1.msra.mxu0 0.0
    %3302 = vmatprep.subr.mxu0 0.0
    %3303 = vmatpush1.msra.mxu0 0.0
    %3304 = vmatprep.subr.mxu0 0.0
    %3305 = vmatpush1.msra.mxu0 0.0
    %3306 = vmatprep.subr.mxu0 0.0
    %3307 = vmatpush1.msra.mxu0 0.0
    %3308 = vmatprep.subr.mxu0 0.0
    %3309 = vmatpush1.msra.mxu0 0.0
    %3310 = vmatprep.subr.mxu0 0.0
    %3311 = vmatpush1.msra.mxu0 0.0
    %3312 = vmatprep.subr.mxu0 0.0
    %3313 = vmatpush1.msra.mxu0 0.0
    %3314 = vmatprep.subr.mxu0 0.0
    %3315 = vmatpush1.msra.mxu0 0.0
    %3316 = vmatprep.subr.mxu0 0.0
    %3317 = vmatpush1.msra.mxu0 0.0
    %3318 = vmatprep.subr.mxu0 0.0
    %3319 = vmatpush1.msra.mxu0 0.0
    %3320 = vmatprep.subr.mxu0 0.0
    %3321 = vmatpush1.msra.mxu0 0.0
    %3322 = vmatprep.subr.mxu0 0.0
    %3323 = vmatpush1.msra.mxu0 0.0
    %3324 = vmatprep.subr.mxu0 0.0
    %3325 = vmatpush1.msra.mxu0 0.0
    %3326 = vmatprep.subr.mxu0 0.0
    %3327 = vmatpush1.msra.mxu0 0.0
    %3328 = vmatprep.subr.mxu0 0.0
    %3329 = vmatpush1.msra.mxu0 0.0
    %3330 = vmatprep.subr.mxu0 0.0
    %3331 = vmatpush1.msra.mxu0 0.0
    %3332 = vmatprep.subr.mxu0 0.0
    %3333 = vmatpush1.msra.mxu0 0.0
    %3334 = vmatprep.subr.mxu0 0.0
    %3335 = vmatpush1.msra.mxu0 0.0
    %3336 = vmatprep.mubr.f32.mxu0 0.0
    %3337 = vmatmul.mubr.f32.gmra.mrb[0].mxu0 %v3270
    %v3338 = vpop.f32.mrb[0].mxu0
    %v3339 = vadd.f32 %v3267, %v3338
    %v3340 = vpop.f32.mrb[0].mxu0
    %3341 = vdwg.mxu0
    %v3342 = vmax.f32 %v3339, 0.0
    %v3343 = vld [vmem:[%s18] sm:$0xff]
    %v3344 = vld [vmem:[%s18 + $0x8] sm:$0xff]
    %v3345 = vld [vmem:[#allocation2] sm:$0x1]
    %v3347 = vlaneseq
    %v3348 = vshrl.u32 %v3347, 7
    %v3349 = vsub.s32 0, %v3348
    %v3350 = vrot.slane %v3345, %v3349
    %vm3352 = vcmask 130048
    %v3354 = vsel %vm3352, %v3342, 0
    %3356 = vmatprep.subr.mxu0 0.0
    %3357 = vmatpush1.msra.mxu0 %v3343
    %3358 = vmatprep.subr.mxu0 0.0
    %3359 = vmatpush1.msra.mxu0 %v3344
    %3360 = vmatprep.subr.mxu0 0.0
    %3361 = vmatpush1.msra.mxu0 0.0
    %3362 = vmatprep.subr.mxu0 0.0
    %3363 = vmatpush1.msra.mxu0 0.0
    %3364 = vmatprep.subr.mxu0 0.0
    %3365 = vmatpush1.msra.mxu0 0.0
    %3366 = vmatprep.subr.mxu0 0.0
    %3367 = vmatpush1.msra.mxu0 0.0
    %3368 = vmatprep.subr.mxu0 0.0
    %3369 = vmatpush1.msra.mxu0 0.0
    %3370 = vmatprep.subr.mxu0 0.0
    %3371 = vmatpush1.msra.mxu0 0.0
    %3372 = vmatprep.subr.mxu0 0.0
    %3373 = vmatpush1.msra.mxu0 0.0
    %3374 = vmatprep.subr.mxu0 0.0
    %3375 = vmatpush1.msra.mxu0 0.0
    %3376 = vmatprep.subr.mxu0 0.0
    %3377 = vmatpush1.msra.mxu0 0.0
    %3378 = vmatprep.subr.mxu0 0.0
    %3379 = vmatpush1.msra.mxu0 0.0
    %3380 = vmatprep.subr.mxu0 0.0
    %3381 = vmatpush1.msra.mxu0 0.0
    %3382 = vmatprep.subr.mxu0 0.0
    %3383 = vmatpush1.msra.mxu0 0.0
    %3384 = vmatprep.subr.mxu0 0.0
    %3385 = vmatpush1.msra.mxu0 0.0
    %3386 = vmatprep.subr.mxu0 0.0
    %3387 = vmatpush1.msra.mxu0 0.0
    %3388 = vmatprep.subr.mxu0 0.0
    %3389 = vmatpush1.msra.mxu0 0.0
    %3390 = vmatprep.subr.mxu0 0.0
    %3391 = vmatpush1.msra.mxu0 0.0
    %3392 = vmatprep.subr.mxu0 0.0
    %3393 = vmatpush1.msra.mxu0 0.0
    %3394 = vmatprep.subr.mxu0 0.0
    %3395 = vmatpush1.msra.mxu0 0.0
    %3396 = vmatprep.subr.mxu0 0.0
    %3397 = vmatpush1.msra.mxu0 0.0
    %3398 = vmatprep.subr.mxu0 0.0
    %3399 = vmatpush1.msra.mxu0 0.0
    %3400 = vmatprep.subr.mxu0 0.0
    %3401 = vmatpush1.msra.mxu0 0.0
    %3402 = vmatprep.subr.mxu0 0.0
    %3403 = vmatpush1.msra.mxu0 0.0
    %3404 = vmatprep.subr.mxu0 0.0
    %3405 = vmatpush1.msra.mxu0 0.0
    %3406 = vmatprep.subr.mxu0 0.0
    %3407 = vmatpush1.msra.mxu0 0.0
    %3408 = vmatprep.subr.mxu0 0.0
    %3409 = vmatpush1.msra.mxu0 0.0
    %3410 = vmatprep.subr.mxu0 0.0
    %3411 = vmatpush1.msra.mxu0 0.0
    %3412 = vmatprep.subr.mxu0 0.0
    %3413 = vmatpush1.msra.mxu0 0.0
    %3414 = vmatprep.subr.mxu0 0.0
    %3415 = vmatpush1.msra.mxu0 0.0
    %3416 = vmatprep.subr.mxu0 0.0
    %3417 = vmatpush1.msra.mxu0 0.0
    %3418 = vmatprep.subr.mxu0 0.0
    %3419 = vmatpush1.msra.mxu0 0.0
    %3420 = vmatprep.mubr.f32.mxu0 0.0
    %3421 = vmatmul.mubr.f32.gmra.mrb[0].mxu0 %v3354
    %v3422 = vpop.f32.mrb[0].mxu0
    %v3423 = vadd.f32 %v3350, %v3422
    %v3424 = vpop.f32.mrb[0].mxu0
    %3425 = vdwg.mxu0
    %vm3426 = vcmask 1024
    %3427 = vst.msk [vmem:[%s20] sm:$0x3] %vm3426, %v3423
    // Predicated region
    $region134: #{gru_model_forward.1} parent=1 // pred_check
      _
    $region135: #{gru_model_forward.1} parent=1 // pred_check_branch
      %3429 = sbr.rel (0) target = $region137
    $region136: #{gru_model_forward.1} parent=1 // pred_region
      _
    $region137: #{gru_model_forward.1} parent=1 // pred_fallthru
      _
    // Predicated region
    $region138: #{gru_model_forward.1} parent=1 // pred_check
      _
    $region139: #{gru_model_forward.1} parent=1 // pred_check_branch
      %3431 = sbr.rel (0) target = $region141
    $region140: #{gru_model_forward.1} parent=1 // pred_region
      _
    $region141: #{gru_model_forward.1} parent=1 // pred_fallthru
      _
    %3432 = vsyncpa [#allocation4], 1
    %3433 = vsyncpa [#allocation6], 1
    %3434 = vsyncpa [#allocation9], 1
    %3435 = vsyncpa [#allocation12], 1
    %3436 = vsyncpa [#allocation15], 1
    %3437 = vsyncpa [#allocation18], 1
    %3438 = vsyncpa [#allocation21], 1

</llo_original>
